<compile_context>
chip_gen: v7x
topology: tpu7x:2x2x1
jax: 0.10.0
libtpu: 0.0.40
codegen_flags: <defaults>
</compile_context>

<pallas_src>
import functools

import jax
import jax.numpy as jnp
import numpy as np
from jax.experimental import pallas as pl
from jax.experimental.pallas import tpu as pltpu


# ---------------------------------------------------------------------------
# config (mirrors the fields the PyTorch module reads)
# ---------------------------------------------------------------------------
class _ModelCfg:
    hidden_size = 32
    num_heads = 4
    num_layers = 2


class _Cfg:
    model = _ModelCfg()
    hidden_dim = 64
    action_dim = 8


LANES = 128  # lane width of the packed parameter buffers


# ---------------------------------------------------------------------------
# shared math helpers
# ---------------------------------------------------------------------------
def _layer_norm(x, w, b, eps=1e-5):
    mu = jnp.mean(x, axis=-1, keepdims=True)
    var = jnp.mean(jnp.square(x - mu), axis=-1, keepdims=True)
    return (x - mu) * jax.lax.rsqrt(var + eps) * w + b


# ---------------------------------------------------------------------------
# Pallas kernel: whole forward fused, all operands VMEM-resident (~150 KiB total,
# so full-array blocks, no grid).
# Packed per-layer buffer `lw_ref` layout (rows x 128 lanes, bf16), per layer l:
#   rows [0, H)           : Wqkv^T   (H, 3H)   -- Wq rows pre-scaled by 1/sqrt(dh)
#   rows [H, 2H)          : Wo^T     (H, H)
#   rows [2H, 3H)         : W1^T     (H, F)
#   rows [3H, 3H+F)       : W2^T     (F, H)
#   rows [3H+F, 3H+F+8)   : ln1w, ln1b, bqkv, bo, ln2w, ln2b, b1, b2   (one row each)
# Packed head buffer `head_ref` (bf16):
#   rows [0, H)           : Whead1^T (H, HD)
#   rows [H, H+HD)        : Whead2^T (HD, AD)
#   rows [H+HD, H+HD+8)   : lnfw, lnfb, bhead1, bhead2
# ---------------------------------------------------------------------------
def _policy_kernel(B, S, H, nH, F, HD, AD, L, x_ref, lw_ref, head_ref, out_ref):
    dh = H // nH
    BS = B * S
    BH = B * nH
    VEC0 = 3 * H + F  # first bias/LN row inside each per-layer slab

    x = x_ref[...].reshape(BS, H).astype(jnp.float32)  # (B*S, H), lane-dense

    def split_heads(t):  # (BS, H) -> (B*nH, S, dh): heads become a batch dim
        return t.reshape(B, S, nH, dh).transpose(0, 2, 1, 3).reshape(BH, S, dh)

    for l in range(L):  # static unroll (L=2); weights sliced lazily per layer
        vec = lw_ref[l, VEC0:VEC0 + 8, :].astype(jnp.float32)  # aligned (8,128) LN/bias tile

        # ---- pre-norm multi-head self-attention ----
        xn = _layer_norm(x, vec[0:1, 0:H], vec[1:2, 0:H])
        qkv = jnp.dot(xn.astype(jnp.bfloat16), lw_ref[l, 0:H, 0:3 * H],
                      preferred_element_type=jnp.float32) + vec[2:3, 0:3 * H]  # (BS, 3H)
        qh = split_heads(qkv[:, 0:H])          # query scale already folded into Wq/bq
        kh = split_heads(qkv[:, H:2 * H])
        vh = split_heads(qkv[:, 2 * H:3 * H])

        # one head-batched score matmul + ONE vectorized softmax over (B*nH, S, S)
        s = jnp.einsum("bqd,bkd->bqk", qh, kh, preferred_element_type=jnp.float32)
        s = s - jnp.max(s, axis=-1, keepdims=True)
        e = jnp.exp(s)
        p = e * pl.reciprocal(jnp.sum(e, axis=-1, keepdims=True), approx=True)
        ctx = jnp.einsum("bqk,bkd->bqd", p, vh, preferred_element_type=jnp.float32)
        ctx = ctx.reshape(B, nH, S, dh).transpose(0, 2, 1, 3).reshape(BS, H)

        # fused output projection across all heads
        x = x + jnp.dot(ctx.astype(jnp.bfloat16), lw_ref[l, H:2 * H, 0:H],
                        preferred_element_type=jnp.float32) + vec[3:4, 0:H]

        # ---- pre-norm feed-forward (ReLU) ----
        xn = _layer_norm(x, vec[4:5, 0:H], vec[5:6, 0:H])
        hid = jnp.maximum(
            jnp.dot(xn.astype(jnp.bfloat16), lw_ref[l, 2 * H:3 * H, 0:F],
                    preferred_element_type=jnp.float32) + vec[6:7, 0:F], 0.0)
        x = x + jnp.dot(hid.astype(jnp.bfloat16), lw_ref[l, 3 * H:3 * H + F, 0:H],
                        preferred_element_type=jnp.float32) + vec[7:8, 0:H]

    # ---- final LayerNorm, mean pool over seq, action head ----
    hv = head_ref[H + HD:H + HD + 8, :].astype(jnp.float32)  # aligned (8,128) tile
    x = _layer_norm(x, hv[0:1, 0:H], hv[1:2, 0:H])
    pooled = jnp.mean(x.reshape(B, S, H), axis=1)  # (B, H)
    h1 = jnp.maximum(
        jnp.dot(pooled.astype(jnp.bfloat16), head_ref[0:H, 0:HD],
                preferred_element_type=jnp.float32) + hv[2:3, 0:HD], 0.0)
    logits = jnp.dot(h1.astype(jnp.bfloat16), head_ref[H:H + HD, 0:AD],
                     preferred_element_type=jnp.float32) + hv[3:4, 0:AD]
    logits = logits - jnp.max(logits, axis=-1, keepdims=True)
    e = jnp.exp(logits)
    out_ref[...] = e / jnp.sum(e, axis=-1, keepdims=True)  # exact divide -> tight sum-to-1


def reasoning_policy_forward(state, lw, head, *, H, nH, F, HD, AD, L):
    """state: (B, S, H) f32; lw: (L, 3H+F+8, 128) bf16; head: (H+HD+8, 128) bf16
    -> (B, AD) f32 action probabilities."""
    B, S, _ = state.shape
    kernel = functools.partial(_policy_kernel, B, S, H, nH, F, HD, AD, L)
    # TODO(synk): for large rollout batches (BS >= 128/256 rows), add a grid over
    # batch row-tiles with dimension_semantics=("parallel",) and index-map-constant
    # BlockSpecs for lw/head so both v7x TensorCores are used and the MXU rows fill.
    return pl.pallas_call(
        kernel,
        out_shape=jax.ShapeDtypeStruct((B, AD), jnp.float32),
        in_specs=[pl.BlockSpec(memory_space=pltpu.MemorySpace.VMEM)] * 3,
        out_specs=pl.BlockSpec(memory_space=pltpu.MemorySpace.VMEM),
    )(state, lw, head)


# ---------------------------------------------------------------------------
# deterministic synthetic parameters in PyTorch-like (out_features, in_features)
# layout, plus packing into the two lane-dense bf16 kernel buffers.
# ---------------------------------------------------------------------------
def init_logical_params(key, H, nH, L, F, HD, AD):
    def nrm(k, shape, scale=0.05):
        return scale * jax.random.normal(k, shape, dtype=jnp.float32)

    keys = iter(jax.random.split(key, 8 * L + 4))  # 8 draws per layer + 4 head draws
    layers = []
    for _ in range(L):
        layers.append(dict(
            ln1w=jnp.ones((H,), jnp.float32), ln1b=jnp.zeros((H,), jnp.float32),
            wqkv=nrm(next(keys), (3 * H, H)), bqkv=nrm(next(keys), (3 * H,), 0.01),
            wo=nrm(next(keys), (H, H)), bo=nrm(next(keys), (H,), 0.01),
            ln2w=jnp.ones((H,), jnp.float32), ln2b=jnp.zeros((H,), jnp.float32),
            w1=nrm(next(keys), (F, H)), b1=nrm(next(keys), (F,), 0.01),
            w2=nrm(next(keys), (H, F)), b2=nrm(next(keys), (H,), 0.01),
        ))
    return dict(
        layers=layers,
        lnfw=jnp.ones((H,), jnp.float32), lnfb=jnp.zeros((H,), jnp.float32),
        hw1=nrm(next(keys), (HD, H)), hb1=nrm(next(keys), (HD,), 0.01),
        hw2=nrm(next(keys), (AD, HD)), hb2=nrm(next(keys), (AD,), 0.01),
    )


def pack_params(P, H, nH, L, F, HD, AD):
    assert max(3 * H, F, HD, AD, H) <= LANES, "packed lane width too small for config"
    dh = H // nH
    scale = 1.0 / float(dh) ** 0.5
    lw_rows = 3 * H + F + 8
    lw = np.zeros((L, lw_rows, LANES), np.float32)
    for l, lp in enumerate(P["layers"]):
        wqkv = np.asarray(lp["wqkv"], np.float32).copy()   # (3H, H), PyTorch layout
        bqkv = np.asarray(lp["bqkv"], np.float32).copy()
        wqkv[0:H, :] *= scale                               # fold 1/sqrt(dh) into Wq
        bqkv[0:H] *= scale                                  # ... and into bq
        lw[l, 0:H, 0:3 * H] = wqkv.T
        lw[l, H:2 * H, 0:H] = np.asarray(lp["wo"]).T
        lw[l, 2 * H:3 * H, 0:F] = np.asarray(lp["w1"]).T
        lw[l, 3 * H:3 * H + F, 0:H] = np.asarray(lp["w2"]).T
        vr = 3 * H + F
        lw[l, vr + 0, 0:H] = np.asarray(lp["ln1w"])
        lw[l, vr + 1, 0:H] = np.asarray(lp["ln1b"])
        lw[l, vr + 2, 0:3 * H] = bqkv
        lw[l, vr + 3, 0:H] = np.asarray(lp["bo"])
        lw[l, vr + 4, 0:H] = np.asarray(lp["ln2w"])
        lw[l, vr + 5, 0:H] = np.asarray(lp["ln2b"])
        lw[l, vr + 6, 0:F] = np.asarray(lp["b1"])
        lw[l, vr + 7, 0:H] = np.asarray(lp["b2"])

    head = np.zeros((H + HD + 8, LANES), np.float32)
    head[0:H, 0:HD] = np.asarray(P["hw1"]).T
    head[H:H + HD, 0:AD] = np.asarray(P["hw2"]).T
    hv = H + HD
    head[hv + 0, 0:H] = np.asarray(P["lnfw"])
    head[hv + 1, 0:H] = np.asarray(P["lnfb"])
    head[hv + 2, 0:HD] = np.asarray(P["hb1"])
    head[hv + 3, 0:AD] = np.asarray(P["hb2"])
    # bf16 packing: halves weight DMA and selects the bf16-native MXU path.
    return jnp.asarray(lw, dtype=jnp.bfloat16), jnp.asarray(head, dtype=jnp.bfloat16)


# ---------------------------------------------------------------------------
# pure-JAX reference of the same forward (f32 everywhere, exact softmax)
# ---------------------------------------------------------------------------
def reference_forward(state, P, num_heads):
    x = state.astype(jnp.float32)
    B, S, H = x.shape
    dh = H // num_heads
    scale = 1.0 / float(dh) ** 0.5
    for lp in P["layers"]:
        xn = _layer_norm(x, lp["ln1w"], lp["ln1b"])
        qkv = xn @ lp["wqkv"].T + lp["bqkv"]
        q, k, v = jnp.split(qkv, 3, axis=-1)
        q = q.reshape(B, S, num_heads, dh).transpose(0, 2, 1, 3) * scale
        k = k.reshape(B, S, num_heads, dh).transpose(0, 2, 1, 3)
        v = v.reshape(B, S, num_heads, dh).transpose(0, 2, 1, 3)
        a = jax.nn.softmax(jnp.einsum("bhqd,bhkd->bhqk", q, k), axis=-1)
        ctx = jnp.einsum("bhqk,bhkd->bhqd", a, v).transpose(0, 2, 1, 3).reshape(B, S, H)
        x = x + ctx @ lp["wo"].T + lp["bo"]
        xn = _layer_norm(x, lp["ln2w"], lp["ln2b"])
        x = x + jax.nn.relu(xn @ lp["w1"].T + lp["b1"]) @ lp["w2"].T + lp["b2"]
    x = _layer_norm(x, P["lnfw"], P["lnfb"])
    pooled = x.mean(axis=1)
    h1 = jax.nn.relu(pooled @ P["hw1"].T + P["hb1"])
    return jax.nn.softmax(h1 @ P["hw2"].T + P["hb2"], axis=-1)


# TODO(synk): get_action()'s torch.multinomial sampling + log-prob gather is host/RNG-side
# logic; only the forward pass producing action_probs is implemented as a kernel.

if __name__ == "__main__":
    cfg = _Cfg()
    B, S = 2, 8
    H, nH, L = cfg.model.hidden_size, cfg.model.num_heads, cfg.model.num_layers
    F, HD, AD = 4 * H, cfg.hidden_dim, cfg.action_dim

    key = jax.random.PRNGKey(0)
    k_params, k_state = jax.random.split(key)
    params = init_logical_params(k_params, H, nH, L, F, HD, AD)
    # Quantize parameters to bf16-representable values so the packed bf16 weights and
    # the f32 reference use numerically identical parameter values.
    params = jax.tree_util.tree_map(
        lambda a: a.astype(jnp.bfloat16).astype(jnp.float32), params)
    state = jax.random.normal(k_state, (B, S, H), dtype=jnp.float32)
    lw, head = pack_params(params, H, nH, L, F, HD, AD)

    probs = reasoning_policy_forward(state, lw, head, H=H, nH=nH, F=F, HD=HD, AD=AD, L=L)
    probs = jax.block_until_ready(probs)

    ref = reference_forward(state, params, nH)
    assert probs.shape == (B, AD)
    # kernel uses bf16 matmul operands (f32 accumulate) and an EUP approx reciprocal for
    # the attention-softmax denominators -> looser tolerance than pure f32 math
    np.testing.assert_allclose(np.asarray(probs), np.asarray(ref), rtol=3e-2, atol=3e-3)
    np.testing.assert_allclose(np.asarray(probs).sum(-1), np.ones(B), rtol=1e-5, atol=1e-5)

    print("KERNEL_OK")
</pallas_src>

<mosaic_0001>
module attributes {stable_mosaic.version = 11 : i64} {
  func.func @_policy_kernel(%arg0: memref<2x8x32xf32, #tpu.memory_space<vmem>>, %arg1: memref<2x232x128xbf16, #tpu.memory_space<vmem>>, %arg2: memref<104x128xbf16, #tpu.memory_space<vmem>>, %arg3: memref<2x8xf32, #tpu.memory_space<vmem>>) attributes {dimension_semantics = [], scalar_prefetch = 0 : i64, scratch_operands = 0 : i64, tpu.core_type = #tpu.core_type<tc>} {
    %c0 = arith.constant 0 : index
    %c0_0 = arith.constant 0 : index
    %c0_1 = arith.constant 0 : index
    %0 = vector.load %arg0[%c0, %c0_0, %c0_1] : memref<2x8x32xf32, #tpu.memory_space<vmem>>, vector<2x8x32xf32>
    %1 = vector.shape_cast %0 : vector<2x8x32xf32> to vector<16x32xf32>
    %c0_2 = arith.constant 0 : index
    %c224 = arith.constant 224 : index
    %c0_3 = arith.constant 0 : index
    %2 = vector.load %arg1[%c0_2, %c224, %c0_3] : memref<2x232x128xbf16, #tpu.memory_space<vmem>>, vector<1x8x128xbf16>
    %3 = vector.shape_cast %2 : vector<1x8x128xbf16> to vector<8x128xbf16>
    %4 = arith.extf %3 : vector<8x128xbf16> to vector<8x128xf32>
    %5 = vector.extract_strided_slice %4 {offsets = [0, 0], sizes = [1, 32], strides = [1, 1]} : vector<8x128xf32> to vector<1x32xf32>
    %6 = vector.extract_strided_slice %4 {offsets = [1, 0], sizes = [1, 32], strides = [1, 1]} : vector<8x128xf32> to vector<1x32xf32>
    %cst = arith.constant dense<0.000000e+00> : vector<16xf32>
    %7 = vector.multi_reduction <add>, %1, %cst [1] : vector<16x32xf32> to vector<16xf32>
    %8 = vector.shape_cast %7 : vector<16xf32> to vector<16x1xf32>
    %cst_4 = arith.constant 3.200000e+01 : f32
    %9 = vector.broadcast %cst_4 : f32 to vector<16x1xf32>
    %10 = arith.divf %8, %9 : vector<16x1xf32>
    %11 = vector.broadcast %10 : vector<16x1xf32> to vector<16x32xf32>
    %12 = arith.subf %1, %11 : vector<16x32xf32>
    %13 = arith.mulf %12, %12 : vector<16x32xf32>
    %cst_5 = arith.constant dense<0.000000e+00> : vector<16xf32>
    %14 = vector.multi_reduction <add>, %13, %cst_5 [1] : vector<16x32xf32> to vector<16xf32>
    %15 = vector.shape_cast %14 : vector<16xf32> to vector<16x1xf32>
    %cst_6 = arith.constant 3.200000e+01 : f32
    %16 = vector.broadcast %cst_6 : f32 to vector<16x1xf32>
    %17 = arith.divf %15, %16 : vector<16x1xf32>
    %18 = vector.broadcast %10 : vector<16x1xf32> to vector<16x32xf32>
    %19 = arith.subf %1, %18 : vector<16x32xf32>
    %cst_7 = arith.constant 9.99999974E-6 : f32
    %20 = vector.broadcast %cst_7 : f32 to vector<16x1xf32>
    %21 = arith.addf %17, %20 : vector<16x1xf32>
    %22 = math.rsqrt %21 : vector<16x1xf32>
    %23 = vector.broadcast %22 : vector<16x1xf32> to vector<16x32xf32>
    %24 = arith.mulf %19, %23 : vector<16x32xf32>
    %25 = vector.broadcast %5 : vector<1x32xf32> to vector<16x32xf32>
    %26 = arith.mulf %24, %25 : vector<16x32xf32>
    %27 = vector.broadcast %6 : vector<1x32xf32> to vector<16x32xf32>
    %28 = arith.addf %26, %27 : vector<16x32xf32>
    %29 = arith.truncf %28 : vector<16x32xf32> to vector<16x32xbf16>
    %c0_8 = arith.constant 0 : index
    %c0_9 = arith.constant 0 : index
    %c0_10 = arith.constant 0 : index
    %30 = vector.load %arg1[%c0_8, %c0_9, %c0_10] : memref<2x232x128xbf16, #tpu.memory_space<vmem>>, vector<1x32x96xbf16>
    %31 = vector.shape_cast %30 : vector<1x32x96xbf16> to vector<32x96xbf16>
    %cst_11 = arith.constant dense<0.000000e+00> : vector<16x96xf32>
    %32 = tpu.matmul %29, %31, %cst_11 {dimension_numbers = #tpu.dot_dimension_numbers<[1], [0], [0], [1], [0, 0, 1, 1], [], []>} : vector<16x32xbf16>, vector<32x96xbf16>, vector<16x96xf32> -> vector<16x96xf32>
    %33 = vector.extract_strided_slice %4 {offsets = [2, 0], sizes = [1, 96], strides = [1, 1]} : vector<8x128xf32> to vector<1x96xf32>
    %34 = vector.broadcast %33 : vector<1x96xf32> to vector<16x96xf32>
    %35 = arith.addf %32, %34 : vector<16x96xf32>
    %36 = vector.extract_strided_slice %35 {offsets = [0, 0], sizes = [16, 32], strides = [1, 1]} : vector<16x96xf32> to vector<16x32xf32>
    %37 = vector.shape_cast %36 : vector<16x32xf32> to vector<2x8x4x8xf32>
    %38 = tpu.transpose %37, [0, 2, 1, 3] : vector<2x8x4x8xf32> -> vector<2x4x8x8xf32>
    %39 = vector.shape_cast %38 : vector<2x4x8x8xf32> to vector<8x8x8xf32>
    %40 = vector.extract_strided_slice %35 {offsets = [0, 32], sizes = [16, 32], strides = [1, 1]} : vector<16x96xf32> to vector<16x32xf32>
    %41 = vector.shape_cast %40 : vector<16x32xf32> to vector<2x8x4x8xf32>
    %42 = tpu.transpose %41, [0, 2, 1, 3] : vector<2x8x4x8xf32> -> vector<2x4x8x8xf32>
    %43 = vector.shape_cast %42 : vector<2x4x8x8xf32> to vector<8x8x8xf32>
    %44 = vector.extract_strided_slice %35 {offsets = [0, 64], sizes = [16, 32], strides = [1, 1]} : vector<16x96xf32> to vector<16x32xf32>
    %45 = vector.shape_cast %44 : vector<16x32xf32> to vector<2x8x4x8xf32>
    %46 = tpu.transpose %45, [0, 2, 1, 3] : vector<2x8x4x8xf32> -> vector<2x4x8x8xf32>
    %47 = vector.shape_cast %46 : vector<2x4x8x8xf32> to vector<8x8x8xf32>
    "tpu.trace_start"() <{level = 10 : i32, message = "bqd,bkd->bqk"}> : () -> ()
    %cst_12 = arith.constant dense<0.000000e+00> : vector<8x8x8xf32>
    %48 = tpu.matmul %39, %43, %cst_12 {dimension_numbers = #tpu.dot_dimension_numbers<[2], [2], [1], [1], [0, 0, 0, 1, 1, 1], [0], [0]>} : vector<8x8x8xf32>, vector<8x8x8xf32>, vector<8x8x8xf32> -> vector<8x8x8xf32>
    "tpu.trace_stop"() : () -> ()
    %cst_13 = arith.constant dense<0xFF800000> : vector<8x8xf32>
    %49 = vector.multi_reduction <maximumf>, %48, %cst_13 [2] : vector<8x8x8xf32> to vector<8x8xf32>
    %50 = vector.shape_cast %49 : vector<8x8xf32> to vector<8x8x1xf32>
    %51 = vector.broadcast %50 : vector<8x8x1xf32> to vector<8x8x8xf32>
    %52 = arith.subf %48, %51 : vector<8x8x8xf32>
    %53 = math.exp %52 : vector<8x8x8xf32>
    %cst_14 = arith.constant dense<0.000000e+00> : vector<8x8xf32>
    %54 = vector.multi_reduction <add>, %53, %cst_14 [2] : vector<8x8x8xf32> to vector<8x8xf32>
    %55 = vector.shape_cast %54 : vector<8x8xf32> to vector<8x8x1xf32>
    %56 = tpu.reciprocal %55 {approx = true} : vector<8x8x1xf32> -> vector<8x8x1xf32>
    %57 = vector.broadcast %56 : vector<8x8x1xf32> to vector<8x8x8xf32>
    %58 = arith.mulf %53, %57 : vector<8x8x8xf32>
    "tpu.trace_start"() <{level = 10 : i32, message = "bqk,bkd->bqd"}> : () -> ()
    %cst_15 = arith.constant dense<0.000000e+00> : vector<8x8x8xf32>
    %59 = tpu.matmul %58, %47, %cst_15 {dimension_numbers = #tpu.dot_dimension_numbers<[2], [1], [1], [2], [0, 0, 0, 1, 1, 2], [0], [0]>} : vector<8x8x8xf32>, vector<8x8x8xf32>, vector<8x8x8xf32> -> vector<8x8x8xf32>
    "tpu.trace_stop"() : () -> ()
    %60 = vector.shape_cast %59 : vector<8x8x8xf32> to vector<2x4x8x8xf32>
    %61 = tpu.transpose %60, [0, 2, 1, 3] : vector<2x4x8x8xf32> -> vector<2x8x4x8xf32>
    %62 = vector.shape_cast %61 : vector<2x8x4x8xf32> to vector<16x32xf32>
    %63 = arith.truncf %62 : vector<16x32xf32> to vector<16x32xbf16>
    %c0_16 = arith.constant 0 : index
    %c32 = arith.constant 32 : index
    %c0_17 = arith.constant 0 : index
    %64 = vector.load %arg1[%c0_16, %c32, %c0_17] : memref<2x232x128xbf16, #tpu.memory_space<vmem>>, vector<1x32x32xbf16>
    %65 = vector.shape_cast %64 : vector<1x32x32xbf16> to vector<32x32xbf16>
    %cst_18 = arith.constant dense<0.000000e+00> : vector<16x32xf32>
    %66 = tpu.matmul %63, %65, %cst_18 {dimension_numbers = #tpu.dot_dimension_numbers<[1], [0], [0], [1], [0, 0, 1, 1], [], []>} : vector<16x32xbf16>, vector<32x32xbf16>, vector<16x32xf32> -> vector<16x32xf32>
    %67 = arith.addf %1, %66 : vector<16x32xf32>
    %68 = vector.extract_strided_slice %4 {offsets = [3, 0], sizes = [1, 32], strides = [1, 1]} : vector<8x128xf32> to vector<1x32xf32>
    %69 = vector.broadcast %68 : vector<1x32xf32> to vector<16x32xf32>
    %70 = arith.addf %67, %69 : vector<16x32xf32>
    %71 = vector.extract_strided_slice %4 {offsets = [4, 0], sizes = [1, 32], strides = [1, 1]} : vector<8x128xf32> to vector<1x32xf32>
    %72 = vector.extract_strided_slice %4 {offsets = [5, 0], sizes = [1, 32], strides = [1, 1]} : vector<8x128xf32> to vector<1x32xf32>
    %cst_19 = arith.constant dense<0.000000e+00> : vector<16xf32>
    %73 = vector.multi_reduction <add>, %70, %cst_19 [1] : vector<16x32xf32> to vector<16xf32>
    %74 = vector.shape_cast %73 : vector<16xf32> to vector<16x1xf32>
    %cst_20 = arith.constant 3.200000e+01 : f32
    %75 = vector.broadcast %cst_20 : f32 to vector<16x1xf32>
    %76 = arith.divf %74, %75 : vector<16x1xf32>
    %77 = vector.broadcast %76 : vector<16x1xf32> to vector<16x32xf32>
    %78 = arith.subf %70, %77 : vector<16x32xf32>
    %79 = arith.mulf %78, %78 : vector<16x32xf32>
    %cst_21 = arith.constant dense<0.000000e+00> : vector<16xf32>
    %80 = vector.multi_reduction <add>, %79, %cst_21 [1] : vector<16x32xf32> to vector<16xf32>
    %81 = vector.shape_cast %80 : vector<16xf32> to vector<16x1xf32>
    %cst_22 = arith.constant 3.200000e+01 : f32
    %82 = vector.broadcast %cst_22 : f32 to vector<16x1xf32>
    %83 = arith.divf %81, %82 : vector<16x1xf32>
    %84 = vector.broadcast %76 : vector<16x1xf32> to vector<16x32xf32>
    %85 = arith.subf %70, %84 : vector<16x32xf32>
    %cst_23 = arith.constant 9.99999974E-6 : f32
    %86 = vector.broadcast %cst_23 : f32 to vector<16x1xf32>
    %87 = arith.addf %83, %86 : vector<16x1xf32>
    %88 = math.rsqrt %87 : vector<16x1xf32>
    %89 = vector.broadcast %88 : vector<16x1xf32> to vector<16x32xf32>
    %90 = arith.mulf %85, %89 : vector<16x32xf32>
    %91 = vector.broadcast %71 : vector<1x32xf32> to vector<16x32xf32>
    %92 = arith.mulf %90, %91 : vector<16x32xf32>
    %93 = vector.broadcast %72 : vector<1x32xf32> to vector<16x32xf32>
    %94 = arith.addf %92, %93 : vector<16x32xf32>
    %95 = arith.truncf %94 : vector<16x32xf32> to vector<16x32xbf16>
    %c0_24 = arith.constant 0 : index
    %c64 = arith.constant 64 : index
    %c0_25 = arith.constant 0 : index
    %96 = vector.load %arg1[%c0_24, %c64, %c0_25] : memref<2x232x128xbf16, #tpu.memory_space<vmem>>, vector<1x32x128xbf16>
    %97 = vector.shape_cast %96 : vector<1x32x128xbf16> to vector<32x128xbf16>
    %cst_26 = arith.constant dense<0.000000e+00> : vector<16x128xf32>
    %98 = tpu.matmul %95, %97, %cst_26 {dimension_numbers = #tpu.dot_dimension_numbers<[1], [0], [0], [1], [0, 0, 1, 1], [], []>} : vector<16x32xbf16>, vector<32x128xbf16>, vector<16x128xf32> -> vector<16x128xf32>
    %99 = vector.extract_strided_slice %4 {offsets = [6, 0], sizes = [1, 128], strides = [1, 1]} : vector<8x128xf32> to vector<1x128xf32>
    %100 = vector.broadcast %99 : vector<1x128xf32> to vector<16x128xf32>
    %101 = arith.addf %98, %100 : vector<16x128xf32>
    %cst_27 = arith.constant 0.000000e+00 : f32
    %102 = vector.broadcast %cst_27 : f32 to vector<16x128xf32>
    %103 = arith.maximumf %101, %102 : vector<16x128xf32>
    %104 = arith.truncf %103 : vector<16x128xf32> to vector<16x128xbf16>
    %c0_28 = arith.constant 0 : index
    %c96 = arith.constant 96 : index
    %c0_29 = arith.constant 0 : index
    %105 = vector.load %arg1[%c0_28, %c96, %c0_29] : memref<2x232x128xbf16, #tpu.memory_space<vmem>>, vector<1x128x32xbf16>
    %106 = vector.shape_cast %105 : vector<1x128x32xbf16> to vector<128x32xbf16>
    %cst_30 = arith.constant dense<0.000000e+00> : vector<16x32xf32>
    %107 = tpu.matmul %104, %106, %cst_30 {dimension_numbers = #tpu.dot_dimension_numbers<[1], [0], [0], [1], [0, 0, 1, 1], [], []>} : vector<16x128xbf16>, vector<128x32xbf16>, vector<16x32xf32> -> vector<16x32xf32>
    %108 = arith.addf %70, %107 : vector<16x32xf32>
    %109 = vector.extract_strided_slice %4 {offsets = [7, 0], sizes = [1, 32], strides = [1, 1]} : vector<8x128xf32> to vector<1x32xf32>
    %110 = vector.broadcast %109 : vector<1x32xf32> to vector<16x32xf32>
    %111 = arith.addf %108, %110 : vector<16x32xf32>
    %c1 = arith.constant 1 : index
    %c224_31 = arith.constant 224 : index
    %c0_32 = arith.constant 0 : index
    %112 = vector.load %arg1[%c1, %c224_31, %c0_32] : memref<2x232x128xbf16, #tpu.memory_space<vmem>>, vector<1x8x128xbf16>
    %113 = vector.shape_cast %112 : vector<1x8x128xbf16> to vector<8x128xbf16>
    %114 = arith.extf %113 : vector<8x128xbf16> to vector<8x128xf32>
    %115 = vector.extract_strided_slice %114 {offsets = [0, 0], sizes = [1, 32], strides = [1, 1]} : vector<8x128xf32> to vector<1x32xf32>
    %116 = vector.extract_strided_slice %114 {offsets = [1, 0], sizes = [1, 32], strides = [1, 1]} : vector<8x128xf32> to vector<1x32xf32>
    %cst_33 = arith.constant dense<0.000000e+00> : vector<16xf32>
    %117 = vector.multi_reduction <add>, %111, %cst_33 [1] : vector<16x32xf32> to vector<16xf32>
    %118 = vector.shape_cast %117 : vector<16xf32> to vector<16x1xf32>
    %cst_34 = arith.constant 3.200000e+01 : f32
    %119 = vector.broadcast %cst_34 : f32 to vector<16x1xf32>
    %120 = arith.divf %118, %119 : vector<16x1xf32>
    %121 = vector.broadcast %120 : vector<16x1xf32> to vector<16x32xf32>
    %122 = arith.subf %111, %121 : vector<16x32xf32>
    %123 = arith.mulf %122, %122 : vector<16x32xf32>
    %cst_35 = arith.constant dense<0.000000e+00> : vector<16xf32>
    %124 = vector.multi_reduction <add>, %123, %cst_35 [1] : vector<16x32xf32> to vector<16xf32>
    %125 = vector.shape_cast %124 : vector<16xf32> to vector<16x1xf32>
    %cst_36 = arith.constant 3.200000e+01 : f32
    %126 = vector.broadcast %cst_36 : f32 to vector<16x1xf32>
    %127 = arith.divf %125, %126 : vector<16x1xf32>
    %128 = vector.broadcast %120 : vector<16x1xf32> to vector<16x32xf32>
    %129 = arith.subf %111, %128 : vector<16x32xf32>
    %cst_37 = arith.constant 9.99999974E-6 : f32
    %130 = vector.broadcast %cst_37 : f32 to vector<16x1xf32>
    %131 = arith.addf %127, %130 : vector<16x1xf32>
    %132 = math.rsqrt %131 : vector<16x1xf32>
    %133 = vector.broadcast %132 : vector<16x1xf32> to vector<16x32xf32>
    %134 = arith.mulf %129, %133 : vector<16x32xf32>
    %135 = vector.broadcast %115 : vector<1x32xf32> to vector<16x32xf32>
    %136 = arith.mulf %134, %135 : vector<16x32xf32>
    %137 = vector.broadcast %116 : vector<1x32xf32> to vector<16x32xf32>
    %138 = arith.addf %136, %137 : vector<16x32xf32>
    %139 = arith.truncf %138 : vector<16x32xf32> to vector<16x32xbf16>
    %c1_38 = arith.constant 1 : index
    %c0_39 = arith.constant 0 : index
    %c0_40 = arith.constant 0 : index
    %140 = vector.load %arg1[%c1_38, %c0_39, %c0_40] : memref<2x232x128xbf16, #tpu.memory_space<vmem>>, vector<1x32x96xbf16>
    %141 = vector.shape_cast %140 : vector<1x32x96xbf16> to vector<32x96xbf16>
    %cst_41 = arith.constant dense<0.000000e+00> : vector<16x96xf32>
    %142 = tpu.matmul %139, %141, %cst_41 {dimension_numbers = #tpu.dot_dimension_numbers<[1], [0], [0], [1], [0, 0, 1, 1], [], []>} : vector<16x32xbf16>, vector<32x96xbf16>, vector<16x96xf32> -> vector<16x96xf32>
    %143 = vector.extract_strided_slice %114 {offsets = [2, 0], sizes = [1, 96], strides = [1, 1]} : vector<8x128xf32> to vector<1x96xf32>
    %144 = vector.broadcast %143 : vector<1x96xf32> to vector<16x96xf32>
    %145 = arith.addf %142, %144 : vector<16x96xf32>
    %146 = vector.extract_strided_slice %145 {offsets = [0, 0], sizes = [16, 32], strides = [1, 1]} : vector<16x96xf32> to vector<16x32xf32>
    %147 = vector.shape_cast %146 : vector<16x32xf32> to vector<2x8x4x8xf32>
    %148 = tpu.transpose %147, [0, 2, 1, 3] : vector<2x8x4x8xf32> -> vector<2x4x8x8xf32>
    %149 = vector.shape_cast %148 : vector<2x4x8x8xf32> to vector<8x8x8xf32>
    %150 = vector.extract_strided_slice %145 {offsets = [0, 32], sizes = [16, 32], strides = [1, 1]} : vector<16x96xf32> to vector<16x32xf32>
    %151 = vector.shape_cast %150 : vector<16x32xf32> to vector<2x8x4x8xf32>
    %152 = tpu.transpose %151, [0, 2, 1, 3] : vector<2x8x4x8xf32> -> vector<2x4x8x8xf32>
    %153 = vector.shape_cast %152 : vector<2x4x8x8xf32> to vector<8x8x8xf32>
    %154 = vector.extract_strided_slice %145 {offsets = [0, 64], sizes = [16, 32], strides = [1, 1]} : vector<16x96xf32> to vector<16x32xf32>
    %155 = vector.shape_cast %154 : vector<16x32xf32> to vector<2x8x4x8xf32>
    %156 = tpu.transpose %155, [0, 2, 1, 3] : vector<2x8x4x8xf32> -> vector<2x4x8x8xf32>
    %157 = vector.shape_cast %156 : vector<2x4x8x8xf32> to vector<8x8x8xf32>
    "tpu.trace_start"() <{level = 10 : i32, message = "bqd,bkd->bqk"}> : () -> ()
    %cst_42 = arith.constant dense<0.000000e+00> : vector<8x8x8xf32>
    %158 = tpu.matmul %149, %153, %cst_42 {dimension_numbers = #tpu.dot_dimension_numbers<[2], [2], [1], [1], [0, 0, 0, 1, 1, 1], [0], [0]>} : vector<8x8x8xf32>, vector<8x8x8xf32>, vector<8x8x8xf32> -> vector<8x8x8xf32>
    "tpu.trace_stop"() : () -> ()
    %cst_43 = arith.constant dense<0xFF800000> : vector<8x8xf32>
    %159 = vector.multi_reduction <maximumf>, %158, %cst_43 [2] : vector<8x8x8xf32> to vector<8x8xf32>
    %160 = vector.shape_cast %159 : vector<8x8xf32> to vector<8x8x1xf32>
    %161 = vector.broadcast %160 : vector<8x8x1xf32> to vector<8x8x8xf32>
    %162 = arith.subf %158, %161 : vector<8x8x8xf32>
    %163 = math.exp %162 : vector<8x8x8xf32>
    %cst_44 = arith.constant dense<0.000000e+00> : vector<8x8xf32>
    %164 = vector.multi_reduction <add>, %163, %cst_44 [2] : vector<8x8x8xf32> to vector<8x8xf32>
    %165 = vector.shape_cast %164 : vector<8x8xf32> to vector<8x8x1xf32>
    %166 = tpu.reciprocal %165 {approx = true} : vector<8x8x1xf32> -> vector<8x8x1xf32>
    %167 = vector.broadcast %166 : vector<8x8x1xf32> to vector<8x8x8xf32>
    %168 = arith.mulf %163, %167 : vector<8x8x8xf32>
    "tpu.trace_start"() <{level = 10 : i32, message = "bqk,bkd->bqd"}> : () -> ()
    %cst_45 = arith.constant dense<0.000000e+00> : vector<8x8x8xf32>
    %169 = tpu.matmul %168, %157, %cst_45 {dimension_numbers = #tpu.dot_dimension_numbers<[2], [1], [1], [2], [0, 0, 0, 1, 1, 2], [0], [0]>} : vector<8x8x8xf32>, vector<8x8x8xf32>, vector<8x8x8xf32> -> vector<8x8x8xf32>
    "tpu.trace_stop"() : () -> ()
    %170 = vector.shape_cast %169 : vector<8x8x8xf32> to vector<2x4x8x8xf32>
    %171 = tpu.transpose %170, [0, 2, 1, 3] : vector<2x4x8x8xf32> -> vector<2x8x4x8xf32>
    %172 = vector.shape_cast %171 : vector<2x8x4x8xf32> to vector<16x32xf32>
    %173 = arith.truncf %172 : vector<16x32xf32> to vector<16x32xbf16>
    %c1_46 = arith.constant 1 : index
    %c32_47 = arith.constant 32 : index
    %c0_48 = arith.constant 0 : index
    %174 = vector.load %arg1[%c1_46, %c32_47, %c0_48] : memref<2x232x128xbf16, #tpu.memory_space<vmem>>, vector<1x32x32xbf16>
    %175 = vector.shape_cast %174 : vector<1x32x32xbf16> to vector<32x32xbf16>
    %cst_49 = arith.constant dense<0.000000e+00> : vector<16x32xf32>
    %176 = tpu.matmul %173, %175, %cst_49 {dimension_numbers = #tpu.dot_dimension_numbers<[1], [0], [0], [1], [0, 0, 1, 1], [], []>} : vector<16x32xbf16>, vector<32x32xbf16>, vector<16x32xf32> -> vector<16x32xf32>
    %177 = arith.addf %111, %176 : vector<16x32xf32>
    %178 = vector.extract_strided_slice %114 {offsets = [3, 0], sizes = [1, 32], strides = [1, 1]} : vector<8x128xf32> to vector<1x32xf32>
    %179 = vector.broadcast %178 : vector<1x32xf32> to vector<16x32xf32>
    %180 = arith.addf %177, %179 : vector<16x32xf32>
    %181 = vector.extract_strided_slice %114 {offsets = [4, 0], sizes = [1, 32], strides = [1, 1]} : vector<8x128xf32> to vector<1x32xf32>
    %182 = vector.extract_strided_slice %114 {offsets = [5, 0], sizes = [1, 32], strides = [1, 1]} : vector<8x128xf32> to vector<1x32xf32>
    %cst_50 = arith.constant dense<0.000000e+00> : vector<16xf32>
    %183 = vector.multi_reduction <add>, %180, %cst_50 [1] : vector<16x32xf32> to vector<16xf32>
    %184 = vector.shape_cast %183 : vector<16xf32> to vector<16x1xf32>
    %cst_51 = arith.constant 3.200000e+01 : f32
    %185 = vector.broadcast %cst_51 : f32 to vector<16x1xf32>
    %186 = arith.divf %184, %185 : vector<16x1xf32>
    %187 = vector.broadcast %186 : vector<16x1xf32> to vector<16x32xf32>
    %188 = arith.subf %180, %187 : vector<16x32xf32>
    %189 = arith.mulf %188, %188 : vector<16x32xf32>
    %cst_52 = arith.constant dense<0.000000e+00> : vector<16xf32>
    %190 = vector.multi_reduction <add>, %189, %cst_52 [1] : vector<16x32xf32> to vector<16xf32>
    %191 = vector.shape_cast %190 : vector<16xf32> to vector<16x1xf32>
    %cst_53 = arith.constant 3.200000e+01 : f32
    %192 = vector.broadcast %cst_53 : f32 to vector<16x1xf32>
    %193 = arith.divf %191, %192 : vector<16x1xf32>
    %194 = vector.broadcast %186 : vector<16x1xf32> to vector<16x32xf32>
    %195 = arith.subf %180, %194 : vector<16x32xf32>
    %cst_54 = arith.constant 9.99999974E-6 : f32
    %196 = vector.broadcast %cst_54 : f32 to vector<16x1xf32>
    %197 = arith.addf %193, %196 : vector<16x1xf32>
    %198 = math.rsqrt %197 : vector<16x1xf32>
    %199 = vector.broadcast %198 : vector<16x1xf32> to vector<16x32xf32>
    %200 = arith.mulf %195, %199 : vector<16x32xf32>
    %201 = vector.broadcast %181 : vector<1x32xf32> to vector<16x32xf32>
    %202 = arith.mulf %200, %201 : vector<16x32xf32>
    %203 = vector.broadcast %182 : vector<1x32xf32> to vector<16x32xf32>
    %204 = arith.addf %202, %203 : vector<16x32xf32>
    %205 = arith.truncf %204 : vector<16x32xf32> to vector<16x32xbf16>
    %c1_55 = arith.constant 1 : index
    %c64_56 = arith.constant 64 : index
    %c0_57 = arith.constant 0 : index
    %206 = vector.load %arg1[%c1_55, %c64_56, %c0_57] : memref<2x232x128xbf16, #tpu.memory_space<vmem>>, vector<1x32x128xbf16>
    %207 = vector.shape_cast %206 : vector<1x32x128xbf16> to vector<32x128xbf16>
    %cst_58 = arith.constant dense<0.000000e+00> : vector<16x128xf32>
    %208 = tpu.matmul %205, %207, %cst_58 {dimension_numbers = #tpu.dot_dimension_numbers<[1], [0], [0], [1], [0, 0, 1, 1], [], []>} : vector<16x32xbf16>, vector<32x128xbf16>, vector<16x128xf32> -> vector<16x128xf32>
    %209 = vector.extract_strided_slice %114 {offsets = [6, 0], sizes = [1, 128], strides = [1, 1]} : vector<8x128xf32> to vector<1x128xf32>
    %210 = vector.broadcast %209 : vector<1x128xf32> to vector<16x128xf32>
    %211 = arith.addf %208, %210 : vector<16x128xf32>
    %cst_59 = arith.constant 0.000000e+00 : f32
    %212 = vector.broadcast %cst_59 : f32 to vector<16x128xf32>
    %213 = arith.maximumf %211, %212 : vector<16x128xf32>
    %214 = arith.truncf %213 : vector<16x128xf32> to vector<16x128xbf16>
    %c1_60 = arith.constant 1 : index
    %c96_61 = arith.constant 96 : index
    %c0_62 = arith.constant 0 : index
    %215 = vector.load %arg1[%c1_60, %c96_61, %c0_62] : memref<2x232x128xbf16, #tpu.memory_space<vmem>>, vector<1x128x32xbf16>
    %216 = vector.shape_cast %215 : vector<1x128x32xbf16> to vector<128x32xbf16>
    %cst_63 = arith.constant dense<0.000000e+00> : vector<16x32xf32>
    %217 = tpu.matmul %214, %216, %cst_63 {dimension_numbers = #tpu.dot_dimension_numbers<[1], [0], [0], [1], [0, 0, 1, 1], [], []>} : vector<16x128xbf16>, vector<128x32xbf16>, vector<16x32xf32> -> vector<16x32xf32>
    %218 = arith.addf %180, %217 : vector<16x32xf32>
    %219 = vector.extract_strided_slice %114 {offsets = [7, 0], sizes = [1, 32], strides = [1, 1]} : vector<8x128xf32> to vector<1x32xf32>
    %220 = vector.broadcast %219 : vector<1x32xf32> to vector<16x32xf32>
    %221 = arith.addf %218, %220 : vector<16x32xf32>
    %c96_64 = arith.constant 96 : index
    %c0_65 = arith.constant 0 : index
    %222 = vector.load %arg2[%c96_64, %c0_65] : memref<104x128xbf16, #tpu.memory_space<vmem>>, vector<8x128xbf16>
    %223 = arith.extf %222 : vector<8x128xbf16> to vector<8x128xf32>
    %224 = vector.extract_strided_slice %223 {offsets = [0, 0], sizes = [1, 32], strides = [1, 1]} : vector<8x128xf32> to vector<1x32xf32>
    %225 = vector.extract_strided_slice %223 {offsets = [1, 0], sizes = [1, 32], strides = [1, 1]} : vector<8x128xf32> to vector<1x32xf32>
    %cst_66 = arith.constant dense<0.000000e+00> : vector<16xf32>
    %226 = vector.multi_reduction <add>, %221, %cst_66 [1] : vector<16x32xf32> to vector<16xf32>
    %227 = vector.shape_cast %226 : vector<16xf32> to vector<16x1xf32>
    %cst_67 = arith.constant 3.200000e+01 : f32
    %228 = vector.broadcast %cst_67 : f32 to vector<16x1xf32>
    %229 = arith.divf %227, %228 : vector<16x1xf32>
    %230 = vector.broadcast %229 : vector<16x1xf32> to vector<16x32xf32>
    %231 = arith.subf %221, %230 : vector<16x32xf32>
    %232 = arith.mulf %231, %231 : vector<16x32xf32>
    %cst_68 = arith.constant dense<0.000000e+00> : vector<16xf32>
    %233 = vector.multi_reduction <add>, %232, %cst_68 [1] : vector<16x32xf32> to vector<16xf32>
    %234 = vector.shape_cast %233 : vector<16xf32> to vector<16x1xf32>
    %cst_69 = arith.constant 3.200000e+01 : f32
    %235 = vector.broadcast %cst_69 : f32 to vector<16x1xf32>
    %236 = arith.divf %234, %235 : vector<16x1xf32>
    %237 = vector.broadcast %229 : vector<16x1xf32> to vector<16x32xf32>
    %238 = arith.subf %221, %237 : vector<16x32xf32>
    %cst_70 = arith.constant 9.99999974E-6 : f32
    %239 = vector.broadcast %cst_70 : f32 to vector<16x1xf32>
    %240 = arith.addf %236, %239 : vector<16x1xf32>
    %241 = math.rsqrt %240 : vector<16x1xf32>
    %242 = vector.broadcast %241 : vector<16x1xf32> to vector<16x32xf32>
    %243 = arith.mulf %238, %242 : vector<16x32xf32>
    %244 = vector.broadcast %224 : vector<1x32xf32> to vector<16x32xf32>
    %245 = arith.mulf %243, %244 : vector<16x32xf32>
    %246 = vector.broadcast %225 : vector<1x32xf32> to vector<16x32xf32>
    %247 = arith.addf %245, %246 : vector<16x32xf32>
    %248 = vector.shape_cast %247 : vector<16x32xf32> to vector<2x8x32xf32>
    %cst_71 = arith.constant dense<0.000000e+00> : vector<2x32xf32>
    %249 = vector.multi_reduction <add>, %248, %cst_71 [1] : vector<2x8x32xf32> to vector<2x32xf32>
    %cst_72 = arith.constant 8.000000e+00 : f32
    %250 = vector.broadcast %cst_72 : f32 to vector<2x32xf32>
    %251 = arith.divf %249, %250 : vector<2x32xf32>
    %252 = arith.truncf %251 : vector<2x32xf32> to vector<2x32xbf16>
    %c0_73 = arith.constant 0 : index
    %c0_74 = arith.constant 0 : index
    %253 = vector.load %arg2[%c0_73, %c0_74] : memref<104x128xbf16, #tpu.memory_space<vmem>>, vector<32x64xbf16>
    %cst_75 = arith.constant dense<0.000000e+00> : vector<2x64xf32>
    %254 = tpu.matmul %252, %253, %cst_75 {dimension_numbers = #tpu.dot_dimension_numbers<[1], [0], [0], [1], [0, 0, 1, 1], [], []>} : vector<2x32xbf16>, vector<32x64xbf16>, vector<2x64xf32> -> vector<2x64xf32>
    %255 = vector.extract_strided_slice %223 {offsets = [2, 0], sizes = [1, 64], strides = [1, 1]} : vector<8x128xf32> to vector<1x64xf32>
    %256 = vector.broadcast %255 : vector<1x64xf32> to vector<2x64xf32>
    %257 = arith.addf %254, %256 : vector<2x64xf32>
    %cst_76 = arith.constant 0.000000e+00 : f32
    %258 = vector.broadcast %cst_76 : f32 to vector<2x64xf32>
    %259 = arith.maximumf %257, %258 : vector<2x64xf32>
    %260 = arith.truncf %259 : vector<2x64xf32> to vector<2x64xbf16>
    %c32_77 = arith.constant 32 : index
    %c0_78 = arith.constant 0 : index
    %261 = vector.load %arg2[%c32_77, %c0_78] : memref<104x128xbf16, #tpu.memory_space<vmem>>, vector<64x8xbf16>
    %cst_79 = arith.constant dense<0.000000e+00> : vector<2x8xf32>
    %262 = tpu.matmul %260, %261, %cst_79 {dimension_numbers = #tpu.dot_dimension_numbers<[1], [0], [0], [1], [0, 0, 1, 1], [], []>} : vector<2x64xbf16>, vector<64x8xbf16>, vector<2x8xf32> -> vector<2x8xf32>
    %263 = vector.extract_strided_slice %223 {offsets = [3, 0], sizes = [1, 8], strides = [1, 1]} : vector<8x128xf32> to vector<1x8xf32>
    %264 = vector.broadcast %263 : vector<1x8xf32> to vector<2x8xf32>
    %265 = arith.addf %262, %264 : vector<2x8xf32>
    %cst_80 = arith.constant dense<0xFF800000> : vector<2xf32>
    %266 = vector.multi_reduction <maximumf>, %265, %cst_80 [1] : vector<2x8xf32> to vector<2xf32>
    %267 = vector.shape_cast %266 : vector<2xf32> to vector<2x1xf32>
    %268 = vector.broadcast %267 : vector<2x1xf32> to vector<2x8xf32>
    %269 = arith.subf %265, %268 : vector<2x8xf32>
    %270 = math.exp %269 : vector<2x8xf32>
    %cst_81 = arith.constant dense<0.000000e+00> : vector<2xf32>
    %271 = vector.multi_reduction <add>, %270, %cst_81 [1] : vector<2x8xf32> to vector<2xf32>
    %272 = vector.shape_cast %271 : vector<2xf32> to vector<2x1xf32>
    %273 = vector.broadcast %272 : vector<2x1xf32> to vector<2x8xf32>
    %274 = arith.divf %270, %273 : vector<2x8xf32>
    %c0_82 = arith.constant 0 : index
    %c0_83 = arith.constant 0 : index
    %275 = vector.load %arg3[%c0_82, %c0_83] : memref<2x8xf32, #tpu.memory_space<vmem>>, vector<2x8xf32>
    tpu.vector_store %arg3[%c0_82, %c0_83], %274 {strides = array<i32>} : memref<2x8xf32, #tpu.memory_space<vmem>>, vector<2x8xf32>,
    return
  }
}

</mosaic_0001>

<llo_original>
// kernel: tpu_custom_call.1
$region0: #{tpu_custom_call.1}
  #allocation0 [shape = 'u32[]', space=smem, size = 0x4, offset = 0x4, fixed_abs, tag = 'smem constant byte address 0x4 - core index']
  #allocation1 [shape = 'u32[144,128]{1,0:T(1,128)}', space=vmem, size = 0x12000, scoped, tag = 'internal scratch']
  %s0 = inlined_call_operand.hbm [shape: f32[2,8,32], index: 0, kind: input, shape index: {}]
  %s1 = inlined_call_operand.hbm [shape: bf16[2,232,128], index: 1, kind: input, shape index: {}]
  %s2 = inlined_call_operand.hbm [shape: bf16[104,128], index: 2, kind: input, shape index: {}]
  %s3 = inlined_call_operand.hbm [shape: f32[2,8], index: 3, kind: output, shape index: {}]
  %s4 = sld [smem:[#allocation0]]
  $region34: #{tpu_custom_call.1} parent=0
    _
  %s6 = ssub.s32 1, %s4
  %s7 = scalar_select 0, %s6, %s4
  $region1: #{tpu_custom_call.1} parent=0
    #allocation2 [shape = 'u8[8192]{0}', space=vmem, size = 0x2000, scoped, tag = 'input window, operand 0, single buffered']
    #allocation3 [shape = 's32[1]{0}', space=sflag, size = 0x4, scoped, tag = 'scoped memory for tpu_custom_call.1']
    #allocation4 [shape = 's32[1]{0}', space=sflag, size = 0x4, scoped, tag = 'scoped memory for tpu_custom_call.1']
    #allocation5 [shape = 'u8[118784]{0}', space=vmem, size = 0x1d000, scoped, tag = 'input window, operand 1, single buffered']
    #allocation6 [shape = 's32[1]{0}', space=sflag, size = 0x4, scoped, tag = 'scoped memory for tpu_custom_call.1']
    #allocation7 [shape = 'u8[26624]{0}', space=vmem, size = 0x6800, scoped, tag = 'input window, operand 2, single buffered']
    #allocation8 [shape = 'u8[1024]{0}', space=vmem, size = 0x400, scoped, tag = 'output window, operand 0, single buffered']
    %8 = vsyncpa [#allocation3], 0
    %9 = vsyncpa [#allocation6], 0
    %10 = vsyncpa [#allocation4], 0
    // Predicated region
    $region2: #{tpu_custom_call.1} parent=1 // pred_check
      _
    $region3: #{tpu_custom_call.1} parent=1 // pred_check_branch
      %12 = sbr.rel (0) target = $region5
    $region4: #{tpu_custom_call.1} parent=1 // pred_region
      %s14 = ssub.s32 256, 256
      %15 = vsyncadd [#allocation3], %s14
      %s16 = sshll.u32 [#allocation2], 4
      %s17 = int_to_ptr.vmem [resolvable:$true] %s16
      %22 = dma.hbm_to_vmem [thread:$0]  %s0, 256, %s17, [#allocation3], 128, 128, 8
    $region5: #{tpu_custom_call.1} parent=1 // pred_fallthru
      _
    // Predicated region
    $region6: #{tpu_custom_call.1} parent=1 // pred_check
      _
    $region7: #{tpu_custom_call.1} parent=1 // pred_check_branch
      %24 = sbr.rel (0) target = $region9
    $region8: #{tpu_custom_call.1} parent=1 // pred_region
      %s26 = ssub.s32 3712, 3712
      %27 = vsyncadd [#allocation6], %s26
      %s28 = sshll.u32 [#allocation5], 4
      %s29 = int_to_ptr.vmem [resolvable:$true] %s28
      %34 = dma.hbm_to_vmem [thread:$0]  %s1, 3712, %s29, [#allocation6], 64, 64, 4
    $region9: #{tpu_custom_call.1} parent=1 // pred_fallthru
      _
    // Predicated region
    $region10: #{tpu_custom_call.1} parent=1 // pred_check
      _
    $region11: #{tpu_custom_call.1} parent=1 // pred_check_branch
      %36 = sbr.rel (0) target = $region13
    $region12: #{tpu_custom_call.1} parent=1 // pred_region
      %s38 = ssub.s32 832, 832
      %39 = vsyncadd [#allocation6], %s38
      %s40 = sshll.u32 [#allocation7], 4
      %s41 = int_to_ptr.vmem [resolvable:$true] %s40
      %46 = dma.hbm_to_vmem [thread:$0]  %s2, 832, %s41, [#allocation6], 64, 64, 4
    $region13: #{tpu_custom_call.1} parent=1 // pred_fallthru
      _
    // Predicated region
    $region14: #{tpu_custom_call.1} parent=1 // pred_check
      _
    $region15: #{tpu_custom_call.1} parent=1 // pred_check_branch
      %48 = sbr.rel (0) target = $region17
    $region16: #{tpu_custom_call.1} parent=1 // pred_region
      %49 = dma.done [#allocation3], 256
    $region17: #{tpu_custom_call.1} parent=1 // pred_fallthru
      _
    // Predicated region
    $region18: #{tpu_custom_call.1} parent=1 // pred_check
      _
    $region19: #{tpu_custom_call.1} parent=1 // pred_check_branch
      %51 = sbr.rel (0) target = $region21
    $region20: #{tpu_custom_call.1} parent=1 // pred_region
      %52 = dma.done [#allocation6], 3712
    $region21: #{tpu_custom_call.1} parent=1 // pred_fallthru
      _
    // Predicated region
    $region22: #{tpu_custom_call.1} parent=1 // pred_check
      _
    $region23: #{tpu_custom_call.1} parent=1 // pred_check_branch
      %54 = sbr.rel (0) target = $region25
    $region24: #{tpu_custom_call.1} parent=1 // pred_region
      %55 = dma.done [#allocation6], 832
    $region25: #{tpu_custom_call.1} parent=1 // pred_fallthru
      _
    %v57 = vld [vmem:[#allocation2] sm:$0xff]
    %v58 = vld [vmem:[#allocation2 + $0x8] sm:$0xff]
    %v59 = vld [vmem:[#allocation5 + $0x70] sm:$0xf]
    %v60 = vunpack.c.l.bf16 %v59
    %vm61 = vcmask 261120
    %v62 = vsel %vm61, %v57, 0.0
    %63 = vadd.xlane.f32.xlu0 %v62
    %v64 = vpop.xlane.xlu0 %63
    %v65 = vsel %vm61, %v58, 0.0
    %66 = vadd.xlane.f32.xlu0 %v65
    %v67 = vpop.xlane.xlu0 %66
    %v68 = vrcp.pop 32.0
    %v69 = vmul.f32 %v64, %v68
    %v70 = vmul.f32 %v67, %v68
    %v71 = vsub.f32 %v57, %v69
    %v72 = vsub.f32 %v58, %v70
    %v73 = vmul.f32 %v71, %v71
    %v74 = vmul.f32 %v72, %v72
    %v75 = vsel %vm61, %v73, 0.0
    %76 = vadd.xlane.f32.xlu0 %v75
    %v77 = vpop.xlane.xlu0 %76
    %v78 = vsel %vm61, %v74, 0.0
    %79 = vadd.xlane.f32.xlu0 %v78
    %v80 = vpop.xlane.xlu0 %79
    %v81 = vmul.f32 %v77, %v68
    %v82 = vmul.f32 %v80, %v68
    %v83 = vadd.f32 %v81, 1e-05
    %v84 = vadd.f32 %v82, 1e-05
    %v85 = vrsqrt.pop %v83
    %v86 = vrsqrt.pop %v84
    %v87 = vmul.f32 %v71, %v85
    %v88 = vmul.f32 %v72, %v86
    %v89 = vlaneseq
    %v90 = vshrl.u32 %v89, 7
    %v91 = vsub.s32 0, %v90
    %v92 = vrot.slane %v60, %v91
    %v93 = vmul.f32 %v87, %v92
    %v94 = vmul.f32 %v88, %v92
    %v95 = vlaneseq
    %v96 = vshrl.u32 %v95, 7
    %v97 = vsub.s32 1, %v96
    %v98 = vrot.slane %v60, %v97
    %v99 = vadd.f32 %v93, %v98
    %v100 = vadd.f32 %v94, %v98
    %v101 = vpack.c.bf16 %v100, %v99
    %v102 = vld [vmem:[#allocation5] sm:$0xf]
    %v103 = vld [vmem:[#allocation5 + $0x4] sm:$0xf]
    %v104 = vld [vmem:[#allocation5 + $0x8] sm:$0xf]
    %v105 = vld [vmem:[#allocation5 + $0xc] sm:$0xf]
    %v106 = vlaneseq
    %v107 = vshrl.u32 %v106, 7
    %v108 = vsub.s32 2, %v107
    %v109 = vrot.slane %v60, %v108
    %v114 = vunpack.c.l.b16 %v102
    %v115 = vunpack.c.l.b16 %v103
    %v116 = vunpack.c.l.b16 %v104
    %v117 = vunpack.c.l.b16 %v105
    %v118 = vpack.c.b16 %v115, %v114
    %v119 = vpack.c.b16 %v117, %v116
    %v123 = vsel %vm61, %v101, 0
    %125 = vmatprep.subr.bf16.mxu0 0
    %126 = vmatpush1.bf16.msra.mxu0 %v118
    %127 = vmatprep.subr.bf16.mxu0 0
    %128 = vmatpush1.bf16.msra.mxu0 %v119
    %129 = vmatprep.subr.bf16.mxu0 0
    %130 = vmatpush1.bf16.msra.mxu0 0
    %131 = vmatprep.subr.bf16.mxu0 0
    %132 = vmatpush1.bf16.msra.mxu0 0
    %133 = vmatprep.subr.bf16.mxu0 0
    %134 = vmatpush1.bf16.msra.mxu0 0
    %135 = vmatprep.subr.bf16.mxu0 0
    %136 = vmatpush1.bf16.msra.mxu0 0
    %137 = vmatprep.subr.bf16.mxu0 0
    %138 = vmatpush1.bf16.msra.mxu0 0
    %139 = vmatprep.subr.bf16.mxu0 0
    %140 = vmatpush1.bf16.msra.mxu0 0
    %141 = vmatprep.subr.bf16.mxu0 0
    %142 = vmatpush1.bf16.msra.mxu0 0
    %143 = vmatprep.subr.bf16.mxu0 0
    %144 = vmatpush1.bf16.msra.mxu0 0
    %145 = vmatprep.subr.bf16.mxu0 0
    %146 = vmatpush1.bf16.msra.mxu0 0
    %147 = vmatprep.subr.bf16.mxu0 0
    %148 = vmatpush1.bf16.msra.mxu0 0
    %149 = vmatprep.subr.bf16.mxu0 0
    %150 = vmatpush1.bf16.msra.mxu0 0
    %151 = vmatprep.subr.bf16.mxu0 0
    %152 = vmatpush1.bf16.msra.mxu0 0
    %153 = vmatprep.subr.bf16.mxu0 0
    %154 = vmatpush1.bf16.msra.mxu0 0
    %155 = vmatprep.subr.bf16.mxu0 0
    %156 = vmatpush1.bf16.msra.mxu0 0
    %157 = vmatprep.mubr.bf16.mxu0 0
    %158 = vmatmul.mubr.bf16.gmra.mrb[0].mxu0 %v123
    %v159 = vpop.f32.mrb[0].mxu0
    %v160 = vadd.f32 %v109, %v159
    %v161 = vpop.f32.mrb[0].mxu0
    %v162 = vpop.f32.mrb[0].mxu0
    %v163 = vadd.f32 %v109, %v162
    %v164 = vpop.f32.mrb[0].mxu0
    %165 = vdwg.mxu0
    %168 = vrot.lane.b32.xlu0 %v160, 120
    %v169 = vpop.permute.xlu0 %168
    %170 = vrot.lane.b32.xlu0 %v163, 120
    %v171 = vpop.permute.xlu0 %170
    %174 = vrot.lane.b32.xlu0 %v160, 112
    %v175 = vpop.permute.xlu0 %174
    %176 = vrot.lane.b32.xlu0 %v163, 112
    %v177 = vpop.permute.xlu0 %176
    %180 = vrot.lane.b32.xlu0 %v160, 104
    %v181 = vpop.permute.xlu0 %180
    %182 = vrot.lane.b32.xlu0 %v163, 104
    %v183 = vpop.permute.xlu0 %182
    %v186 = vcombine.low %v160, %v175
    %v187 = vcombine.high %v160, %v175
    %v189 = vunpack.c.l.s4 1983009808
    %v190 = vunpack.c.0.s8 %v189
    %v191 = vlaneseq
    %v192 = vshrl.u32 %v191, 7
    %v193 = vsub.s32 %v190, %v192
    %v194 = vrot.slane %v186, %v193
    %v196 = vunpack.c.l.s4 1983009808
    %v197 = vunpack.c.0.s8 %v196
    %v198 = vlaneseq
    %v199 = vshrl.u32 %v198, 7
    %v200 = vsub.s32 %v197, %v199
    %v201 = vrot.slane %v187, %v200
    %v202 = vcombine.low %v169, %v181
    %v203 = vcombine.high %v169, %v181
    %v205 = vunpack.c.l.s4 1983009808
    %v206 = vunpack.c.0.s8 %v205
    %v207 = vlaneseq
    %v208 = vshrl.u32 %v207, 7
    %v209 = vsub.s32 %v206, %v208
    %v210 = vrot.slane %v202, %v209
    %v212 = vunpack.c.l.s4 1983009808
    %v213 = vunpack.c.0.s8 %v212
    %v214 = vlaneseq
    %v215 = vshrl.u32 %v214, 7
    %v216 = vsub.s32 %v213, %v215
    %v217 = vrot.slane %v203, %v216
    %v218 = vcombine.low %v194, %v210
    %v219 = vcombine.high %v194, %v210
    %v221 = vunpack.c.l.s4 1934713408
    %v222 = vunpack.c.0.s8 %v221
    %v223 = vlaneseq
    %v224 = vshrl.u32 %v223, 7
    %v225 = vsub.s32 %v222, %v224
    %v226 = vrot.slane %v218, %v225
    %v228 = vunpack.c.l.s4 1934713408
    %v229 = vunpack.c.0.s8 %v228
    %v230 = vlaneseq
    %v231 = vshrl.u32 %v230, 7
    %v232 = vsub.s32 %v229, %v231
    %v233 = vrot.slane %v219, %v232
    %v234 = vcombine.low %v201, %v217
    %v235 = vcombine.high %v201, %v217
    %v237 = vunpack.c.l.s4 1934713408
    %v238 = vunpack.c.0.s8 %v237
    %v239 = vlaneseq
    %v240 = vshrl.u32 %v239, 7
    %v241 = vsub.s32 %v238, %v240
    %v242 = vrot.slane %v234, %v241
    %v244 = vunpack.c.l.s4 1934713408
    %v245 = vunpack.c.0.s8 %v244
    %v246 = vlaneseq
    %v247 = vshrl.u32 %v246, 7
    %v248 = vsub.s32 %v245, %v247
    %v249 = vrot.slane %v235, %v248
    %v250 = vcombine.high %v226, 0.0
    %v251 = vcombine.high %v233, 0.0
    %v252 = vcombine.high %v242, 0.0
    %v253 = vcombine.high %v249, 0.0
    %v254 = vcombine.low %v163, %v177
    %v255 = vcombine.high %v163, %v177
    %v257 = vunpack.c.l.s4 1983009808
    %v258 = vunpack.c.0.s8 %v257
    %v259 = vlaneseq
    %v260 = vshrl.u32 %v259, 7
    %v261 = vsub.s32 %v258, %v260
    %v262 = vrot.slane %v254, %v261
    %v264 = vunpack.c.l.s4 1983009808
    %v265 = vunpack.c.0.s8 %v264
    %v266 = vlaneseq
    %v267 = vshrl.u32 %v266, 7
    %v268 = vsub.s32 %v265, %v267
    %v269 = vrot.slane %v255, %v268
    %v270 = vcombine.low %v171, %v183
    %v271 = vcombine.high %v171, %v183
    %v273 = vunpack.c.l.s4 1983009808
    %v274 = vunpack.c.0.s8 %v273
    %v275 = vlaneseq
    %v276 = vshrl.u32 %v275, 7
    %v277 = vsub.s32 %v274, %v276
    %v278 = vrot.slane %v270, %v277
    %v280 = vunpack.c.l.s4 1983009808
    %v281 = vunpack.c.0.s8 %v280
    %v282 = vlaneseq
    %v283 = vshrl.u32 %v282, 7
    %v284 = vsub.s32 %v281, %v283
    %v285 = vrot.slane %v271, %v284
    %v286 = vcombine.low %v262, %v278
    %v287 = vcombine.high %v262, %v278
    %v289 = vunpack.c.l.s4 1934713408
    %v290 = vunpack.c.0.s8 %v289
    %v291 = vlaneseq
    %v292 = vshrl.u32 %v291, 7
    %v293 = vsub.s32 %v290, %v292
    %v294 = vrot.slane %v286, %v293
    %v296 = vunpack.c.l.s4 1934713408
    %v297 = vunpack.c.0.s8 %v296
    %v298 = vlaneseq
    %v299 = vshrl.u32 %v298, 7
    %v300 = vsub.s32 %v297, %v299
    %v301 = vrot.slane %v287, %v300
    %v302 = vcombine.low %v269, %v285
    %v303 = vcombine.high %v269, %v285
    %v305 = vunpack.c.l.s4 1934713408
    %v306 = vunpack.c.0.s8 %v305
    %v307 = vlaneseq
    %v308 = vshrl.u32 %v307, 7
    %v309 = vsub.s32 %v306, %v308
    %v310 = vrot.slane %v302, %v309
    %v312 = vunpack.c.l.s4 1934713408
    %v313 = vunpack.c.0.s8 %v312
    %v314 = vlaneseq
    %v315 = vshrl.u32 %v314, 7
    %v316 = vsub.s32 %v313, %v315
    %v317 = vrot.slane %v303, %v316
    %v318 = vcombine.high %v294, 0.0
    %v319 = vcombine.high %v301, 0.0
    %v320 = vcombine.high %v310, 0.0
    %v321 = vcombine.high %v317, 0.0
    %v322 = vcombine.low %v226, %v233
    %v324 = vunpack.c.l.s4 1983009808
    %v325 = vunpack.c.0.s8 %v324
    %v326 = vlaneseq
    %v327 = vshrl.u32 %v326, 7
    %v328 = vsub.s32 %v325, %v327
    %v329 = vrot.slane %v322, %v328
    %v330 = vcombine.low %v250, %v251
    %v332 = vunpack.c.l.s4 1983009808
    %v333 = vunpack.c.0.s8 %v332
    %v334 = vlaneseq
    %v335 = vshrl.u32 %v334, 7
    %v336 = vsub.s32 %v333, %v335
    %v337 = vrot.slane %v330, %v336
    %v338 = vcombine.low %v242, %v249
    %v340 = vunpack.c.l.s4 1983009808
    %v341 = vunpack.c.0.s8 %v340
    %v342 = vlaneseq
    %v343 = vshrl.u32 %v342, 7
    %v344 = vsub.s32 %v341, %v343
    %v345 = vrot.slane %v338, %v344
    %v346 = vcombine.low %v252, %v253
    %v348 = vunpack.c.l.s4 1983009808
    %v349 = vunpack.c.0.s8 %v348
    %v350 = vlaneseq
    %v351 = vshrl.u32 %v350, 7
    %v352 = vsub.s32 %v349, %v351
    %v353 = vrot.slane %v346, %v352
    %v354 = vcombine.low %v329, %v337
    %v355 = vcombine.high %v329, %v337
    %v357 = vunpack.c.l.s4 1934713408
    %v358 = vunpack.c.0.s8 %v357
    %v359 = vlaneseq
    %v360 = vshrl.u32 %v359, 7
    %v361 = vsub.s32 %v358, %v360
    %v362 = vrot.slane %v354, %v361
    %v364 = vunpack.c.l.s4 1934713408
    %v365 = vunpack.c.0.s8 %v364
    %v366 = vlaneseq
    %v367 = vshrl.u32 %v366, 7
    %v368 = vsub.s32 %v365, %v367
    %v369 = vrot.slane %v355, %v368
    %v370 = vcombine.low %v345, %v353
    %v371 = vcombine.high %v345, %v353
    %v373 = vunpack.c.l.s4 1934713408
    %v374 = vunpack.c.0.s8 %v373
    %v375 = vlaneseq
    %v376 = vshrl.u32 %v375, 7
    %v377 = vsub.s32 %v374, %v376
    %v378 = vrot.slane %v370, %v377
    %v380 = vunpack.c.l.s4 1934713408
    %v381 = vunpack.c.0.s8 %v380
    %v382 = vlaneseq
    %v383 = vshrl.u32 %v382, 7
    %v384 = vsub.s32 %v381, %v383
    %v385 = vrot.slane %v371, %v384
    %v386 = vcombine.low %v362, %v378
    %v387 = vcombine.high %v362, %v378
    %v388 = vcombine.low %v369, %v385
    %v389 = vcombine.high %v369, %v385
    %v390 = vcombine.low %v294, %v301
    %v392 = vunpack.c.l.s4 1983009808
    %v393 = vunpack.c.0.s8 %v392
    %v394 = vlaneseq
    %v395 = vshrl.u32 %v394, 7
    %v396 = vsub.s32 %v393, %v395
    %v397 = vrot.slane %v390, %v396
    %v398 = vcombine.low %v318, %v319
    %v400 = vunpack.c.l.s4 1983009808
    %v401 = vunpack.c.0.s8 %v400
    %v402 = vlaneseq
    %v403 = vshrl.u32 %v402, 7
    %v404 = vsub.s32 %v401, %v403
    %v405 = vrot.slane %v398, %v404
    %v406 = vcombine.low %v310, %v317
    %v408 = vunpack.c.l.s4 1983009808
    %v409 = vunpack.c.0.s8 %v408
    %v410 = vlaneseq
    %v411 = vshrl.u32 %v410, 7
    %v412 = vsub.s32 %v409, %v411
    %v413 = vrot.slane %v406, %v412
    %v414 = vcombine.low %v320, %v321
    %v416 = vunpack.c.l.s4 1983009808
    %v417 = vunpack.c.0.s8 %v416
    %v418 = vlaneseq
    %v419 = vshrl.u32 %v418, 7
    %v420 = vsub.s32 %v417, %v419
    %v421 = vrot.slane %v414, %v420
    %v422 = vcombine.low %v397, %v405
    %v423 = vcombine.high %v397, %v405
    %v425 = vunpack.c.l.s4 1934713408
    %v426 = vunpack.c.0.s8 %v425
    %v427 = vlaneseq
    %v428 = vshrl.u32 %v427, 7
    %v429 = vsub.s32 %v426, %v428
    %v430 = vrot.slane %v422, %v429
    %v432 = vunpack.c.l.s4 1934713408
    %v433 = vunpack.c.0.s8 %v432
    %v434 = vlaneseq
    %v435 = vshrl.u32 %v434, 7
    %v436 = vsub.s32 %v433, %v435
    %v437 = vrot.slane %v423, %v436
    %v438 = vcombine.low %v413, %v421
    %v439 = vcombine.high %v413, %v421
    %v441 = vunpack.c.l.s4 1934713408
    %v442 = vunpack.c.0.s8 %v441
    %v443 = vlaneseq
    %v444 = vshrl.u32 %v443, 7
    %v445 = vsub.s32 %v442, %v444
    %v446 = vrot.slane %v438, %v445
    %v448 = vunpack.c.l.s4 1934713408
    %v449 = vunpack.c.0.s8 %v448
    %v450 = vlaneseq
    %v451 = vshrl.u32 %v450, 7
    %v452 = vsub.s32 %v449, %v451
    %v453 = vrot.slane %v439, %v452
    %v454 = vcombine.low %v430, %v446
    %v455 = vcombine.high %v430, %v446
    %v456 = vcombine.low %v437, %v453
    %v457 = vcombine.high %v437, %v453
    %458 = vrot.lane.b32.xlu0 %v160, 96
    %v459 = vpop.permute.xlu0 %458
    %460 = vrot.lane.b32.xlu0 %v163, 96
    %v461 = vpop.permute.xlu0 %460
    %462 = vrot.lane.b32.xlu0 %v169, 96
    %v463 = vpop.permute.xlu0 %462
    %464 = vrot.lane.b32.xlu0 %v171, 96
    %v465 = vpop.permute.xlu0 %464
    %466 = vrot.lane.b32.xlu0 %v175, 96
    %v467 = vpop.permute.xlu0 %466
    %468 = vrot.lane.b32.xlu0 %v177, 96
    %v469 = vpop.permute.xlu0 %468
    %470 = vrot.lane.b32.xlu0 %v181, 96
    %v471 = vpop.permute.xlu0 %470
    %472 = vrot.lane.b32.xlu0 %v183, 96
    %v473 = vpop.permute.xlu0 %472
    %v482 = vcombine.low %v459, %v467
    %v483 = vcombine.high %v459, %v467
    %v485 = vunpack.c.l.s4 1983009808
    %v486 = vunpack.c.0.s8 %v485
    %v487 = vlaneseq
    %v488 = vshrl.u32 %v487, 7
    %v489 = vsub.s32 %v486, %v488
    %v490 = vrot.slane %v482, %v489
    %v492 = vunpack.c.l.s4 1983009808
    %v493 = vunpack.c.0.s8 %v492
    %v494 = vlaneseq
    %v495 = vshrl.u32 %v494, 7
    %v496 = vsub.s32 %v493, %v495
    %v497 = vrot.slane %v483, %v496
    %v498 = vcombine.low %v463, %v471
    %v499 = vcombine.high %v463, %v471
    %v501 = vunpack.c.l.s4 1983009808
    %v502 = vunpack.c.0.s8 %v501
    %v503 = vlaneseq
    %v504 = vshrl.u32 %v503, 7
    %v505 = vsub.s32 %v502, %v504
    %v506 = vrot.slane %v498, %v505
    %v508 = vunpack.c.l.s4 1983009808
    %v509 = vunpack.c.0.s8 %v508
    %v510 = vlaneseq
    %v511 = vshrl.u32 %v510, 7
    %v512 = vsub.s32 %v509, %v511
    %v513 = vrot.slane %v499, %v512
    %v514 = vcombine.low %v490, %v506
    %v515 = vcombine.high %v490, %v506
    %v517 = vunpack.c.l.s4 1934713408
    %v518 = vunpack.c.0.s8 %v517
    %v519 = vlaneseq
    %v520 = vshrl.u32 %v519, 7
    %v521 = vsub.s32 %v518, %v520
    %v522 = vrot.slane %v514, %v521
    %v524 = vunpack.c.l.s4 1934713408
    %v525 = vunpack.c.0.s8 %v524
    %v526 = vlaneseq
    %v527 = vshrl.u32 %v526, 7
    %v528 = vsub.s32 %v525, %v527
    %v529 = vrot.slane %v515, %v528
    %v530 = vcombine.low %v497, %v513
    %v531 = vcombine.high %v497, %v513
    %v533 = vunpack.c.l.s4 1934713408
    %v534 = vunpack.c.0.s8 %v533
    %v535 = vlaneseq
    %v536 = vshrl.u32 %v535, 7
    %v537 = vsub.s32 %v534, %v536
    %v538 = vrot.slane %v530, %v537
    %v540 = vunpack.c.l.s4 1934713408
    %v541 = vunpack.c.0.s8 %v540
    %v542 = vlaneseq
    %v543 = vshrl.u32 %v542, 7
    %v544 = vsub.s32 %v541, %v543
    %v545 = vrot.slane %v531, %v544
    %v546 = vcombine.high %v522, 0.0
    %v547 = vcombine.high %v529, 0.0
    %v548 = vcombine.high %v538, 0.0
    %v549 = vcombine.high %v545, 0.0
    %v550 = vcombine.low %v461, %v469
    %v551 = vcombine.high %v461, %v469
    %v553 = vunpack.c.l.s4 1983009808
    %v554 = vunpack.c.0.s8 %v553
    %v555 = vlaneseq
    %v556 = vshrl.u32 %v555, 7
    %v557 = vsub.s32 %v554, %v556
    %v558 = vrot.slane %v550, %v557
    %v560 = vunpack.c.l.s4 1983009808
    %v561 = vunpack.c.0.s8 %v560
    %v562 = vlaneseq
    %v563 = vshrl.u32 %v562, 7
    %v564 = vsub.s32 %v561, %v563
    %v565 = vrot.slane %v551, %v564
    %v566 = vcombine.low %v465, %v473
    %v567 = vcombine.high %v465, %v473
    %v569 = vunpack.c.l.s4 1983009808
    %v570 = vunpack.c.0.s8 %v569
    %v571 = vlaneseq
    %v572 = vshrl.u32 %v571, 7
    %v573 = vsub.s32 %v570, %v572
    %v574 = vrot.slane %v566, %v573
    %v576 = vunpack.c.l.s4 1983009808
    %v577 = vunpack.c.0.s8 %v576
    %v578 = vlaneseq
    %v579 = vshrl.u32 %v578, 7
    %v580 = vsub.s32 %v577, %v579
    %v581 = vrot.slane %v567, %v580
    %v582 = vcombine.low %v558, %v574
    %v583 = vcombine.high %v558, %v574
    %v585 = vunpack.c.l.s4 1934713408
    %v586 = vunpack.c.0.s8 %v585
    %v587 = vlaneseq
    %v588 = vshrl.u32 %v587, 7
    %v589 = vsub.s32 %v586, %v588
    %v590 = vrot.slane %v582, %v589
    %v592 = vunpack.c.l.s4 1934713408
    %v593 = vunpack.c.0.s8 %v592
    %v594 = vlaneseq
    %v595 = vshrl.u32 %v594, 7
    %v596 = vsub.s32 %v593, %v595
    %v597 = vrot.slane %v583, %v596
    %v598 = vcombine.low %v565, %v581
    %v599 = vcombine.high %v565, %v581
    %v601 = vunpack.c.l.s4 1934713408
    %v602 = vunpack.c.0.s8 %v601
    %v603 = vlaneseq
    %v604 = vshrl.u32 %v603, 7
    %v605 = vsub.s32 %v602, %v604
    %v606 = vrot.slane %v598, %v605
    %v608 = vunpack.c.l.s4 1934713408
    %v609 = vunpack.c.0.s8 %v608
    %v610 = vlaneseq
    %v611 = vshrl.u32 %v610, 7
    %v612 = vsub.s32 %v609, %v611
    %v613 = vrot.slane %v599, %v612
    %v614 = vcombine.high %v590, 0.0
    %v615 = vcombine.high %v597, 0.0
    %v616 = vcombine.high %v606, 0.0
    %v617 = vcombine.high %v613, 0.0
    %v618 = vcombine.low %v522, %v529
    %v620 = vunpack.c.l.s4 1983009808
    %v621 = vunpack.c.0.s8 %v620
    %v622 = vlaneseq
    %v623 = vshrl.u32 %v622, 7
    %v624 = vsub.s32 %v621, %v623
    %v625 = vrot.slane %v618, %v624
    %v626 = vcombine.low %v546, %v547
    %v628 = vunpack.c.l.s4 1983009808
    %v629 = vunpack.c.0.s8 %v628
    %v630 = vlaneseq
    %v631 = vshrl.u32 %v630, 7
    %v632 = vsub.s32 %v629, %v631
    %v633 = vrot.slane %v626, %v632
    %v634 = vcombine.low %v538, %v545
    %v636 = vunpack.c.l.s4 1983009808
    %v637 = vunpack.c.0.s8 %v636
    %v638 = vlaneseq
    %v639 = vshrl.u32 %v638, 7
    %v640 = vsub.s32 %v637, %v639
    %v641 = vrot.slane %v634, %v640
    %v642 = vcombine.low %v548, %v549
    %v644 = vunpack.c.l.s4 1983009808
    %v645 = vunpack.c.0.s8 %v644
    %v646 = vlaneseq
    %v647 = vshrl.u32 %v646, 7
    %v648 = vsub.s32 %v645, %v647
    %v649 = vrot.slane %v642, %v648
    %v650 = vcombine.low %v625, %v633
    %v651 = vcombine.high %v625, %v633
    %v653 = vunpack.c.l.s4 1934713408
    %v654 = vunpack.c.0.s8 %v653
    %v655 = vlaneseq
    %v656 = vshrl.u32 %v655, 7
    %v657 = vsub.s32 %v654, %v656
    %v658 = vrot.slane %v650, %v657
    %v660 = vunpack.c.l.s4 1934713408
    %v661 = vunpack.c.0.s8 %v660
    %v662 = vlaneseq
    %v663 = vshrl.u32 %v662, 7
    %v664 = vsub.s32 %v661, %v663
    %v665 = vrot.slane %v651, %v664
    %v666 = vcombine.low %v641, %v649
    %v667 = vcombine.high %v641, %v649
    %v669 = vunpack.c.l.s4 1934713408
    %v670 = vunpack.c.0.s8 %v669
    %v671 = vlaneseq
    %v672 = vshrl.u32 %v671, 7
    %v673 = vsub.s32 %v670, %v672
    %v674 = vrot.slane %v666, %v673
    %v676 = vunpack.c.l.s4 1934713408
    %v677 = vunpack.c.0.s8 %v676
    %v678 = vlaneseq
    %v679 = vshrl.u32 %v678, 7
    %v680 = vsub.s32 %v677, %v679
    %v681 = vrot.slane %v667, %v680
    %v682 = vcombine.low %v658, %v674
    %v683 = vcombine.high %v658, %v674
    %v684 = vcombine.low %v665, %v681
    %v685 = vcombine.high %v665, %v681
    %v686 = vcombine.low %v590, %v597
    %v688 = vunpack.c.l.s4 1983009808
    %v689 = vunpack.c.0.s8 %v688
    %v690 = vlaneseq
    %v691 = vshrl.u32 %v690, 7
    %v692 = vsub.s32 %v689, %v691
    %v693 = vrot.slane %v686, %v692
    %v694 = vcombine.low %v614, %v615
    %v696 = vunpack.c.l.s4 1983009808
    %v697 = vunpack.c.0.s8 %v696
    %v698 = vlaneseq
    %v699 = vshrl.u32 %v698, 7
    %v700 = vsub.s32 %v697, %v699
    %v701 = vrot.slane %v694, %v700
    %v702 = vcombine.low %v606, %v613
    %v704 = vunpack.c.l.s4 1983009808
    %v705 = vunpack.c.0.s8 %v704
    %v706 = vlaneseq
    %v707 = vshrl.u32 %v706, 7
    %v708 = vsub.s32 %v705, %v707
    %v709 = vrot.slane %v702, %v708
    %v710 = vcombine.low %v616, %v617
    %v712 = vunpack.c.l.s4 1983009808
    %v713 = vunpack.c.0.s8 %v712
    %v714 = vlaneseq
    %v715 = vshrl.u32 %v714, 7
    %v716 = vsub.s32 %v713, %v715
    %v717 = vrot.slane %v710, %v716
    %v718 = vcombine.low %v693, %v701
    %v719 = vcombine.high %v693, %v701
    %v721 = vunpack.c.l.s4 1934713408
    %v722 = vunpack.c.0.s8 %v721
    %v723 = vlaneseq
    %v724 = vshrl.u32 %v723, 7
    %v725 = vsub.s32 %v722, %v724
    %v726 = vrot.slane %v718, %v725
    %v728 = vunpack.c.l.s4 1934713408
    %v729 = vunpack.c.0.s8 %v728
    %v730 = vlaneseq
    %v731 = vshrl.u32 %v730, 7
    %v732 = vsub.s32 %v729, %v731
    %v733 = vrot.slane %v719, %v732
    %v734 = vcombine.low %v709, %v717
    %v735 = vcombine.high %v709, %v717
    %v737 = vunpack.c.l.s4 1934713408
    %v738 = vunpack.c.0.s8 %v737
    %v739 = vlaneseq
    %v740 = vshrl.u32 %v739, 7
    %v741 = vsub.s32 %v738, %v740
    %v742 = vrot.slane %v734, %v741
    %v744 = vunpack.c.l.s4 1934713408
    %v745 = vunpack.c.0.s8 %v744
    %v746 = vlaneseq
    %v747 = vshrl.u32 %v746, 7
    %v748 = vsub.s32 %v745, %v747
    %v749 = vrot.slane %v735, %v748
    %v750 = vcombine.low %v726, %v742
    %v751 = vcombine.high %v726, %v742
    %v752 = vcombine.low %v733, %v749
    %v753 = vcombine.high %v733, %v749
    %754 = vrot.lane.b32.xlu0 %v160, 64
    %v755 = vpop.permute.xlu0 %754
    %756 = vrot.lane.b32.xlu0 %v163, 64
    %v757 = vpop.permute.xlu0 %756
    %758 = vrot.lane.b32.xlu0 %v169, 64
    %v759 = vpop.permute.xlu0 %758
    %760 = vrot.lane.b32.xlu0 %v171, 64
    %v761 = vpop.permute.xlu0 %760
    %762 = vrot.lane.b32.xlu0 %v175, 64
    %v763 = vpop.permute.xlu0 %762
    %764 = vrot.lane.b32.xlu0 %v177, 64
    %v765 = vpop.permute.xlu0 %764
    %766 = vrot.lane.b32.xlu0 %v181, 64
    %v767 = vpop.permute.xlu0 %766
    %768 = vrot.lane.b32.xlu0 %v183, 64
    %v769 = vpop.permute.xlu0 %768
    %v778 = vcombine.low %v755, %v763
    %v779 = vcombine.high %v755, %v763
    %v781 = vunpack.c.l.s4 1983009808
    %v782 = vunpack.c.0.s8 %v781
    %v783 = vlaneseq
    %v784 = vshrl.u32 %v783, 7
    %v785 = vsub.s32 %v782, %v784
    %v786 = vrot.slane %v778, %v785
    %v788 = vunpack.c.l.s4 1983009808
    %v789 = vunpack.c.0.s8 %v788
    %v790 = vlaneseq
    %v791 = vshrl.u32 %v790, 7
    %v792 = vsub.s32 %v789, %v791
    %v793 = vrot.slane %v779, %v792
    %v794 = vcombine.low %v759, %v767
    %v795 = vcombine.high %v759, %v767
    %v797 = vunpack.c.l.s4 1983009808
    %v798 = vunpack.c.0.s8 %v797
    %v799 = vlaneseq
    %v800 = vshrl.u32 %v799, 7
    %v801 = vsub.s32 %v798, %v800
    %v802 = vrot.slane %v794, %v801
    %v804 = vunpack.c.l.s4 1983009808
    %v805 = vunpack.c.0.s8 %v804
    %v806 = vlaneseq
    %v807 = vshrl.u32 %v806, 7
    %v808 = vsub.s32 %v805, %v807
    %v809 = vrot.slane %v795, %v808
    %v810 = vcombine.low %v786, %v802
    %v811 = vcombine.high %v786, %v802
    %v813 = vunpack.c.l.s4 1934713408
    %v814 = vunpack.c.0.s8 %v813
    %v815 = vlaneseq
    %v816 = vshrl.u32 %v815, 7
    %v817 = vsub.s32 %v814, %v816
    %v818 = vrot.slane %v810, %v817
    %v820 = vunpack.c.l.s4 1934713408
    %v821 = vunpack.c.0.s8 %v820
    %v822 = vlaneseq
    %v823 = vshrl.u32 %v822, 7
    %v824 = vsub.s32 %v821, %v823
    %v825 = vrot.slane %v811, %v824
    %v826 = vcombine.low %v793, %v809
    %v827 = vcombine.high %v793, %v809
    %v829 = vunpack.c.l.s4 1934713408
    %v830 = vunpack.c.0.s8 %v829
    %v831 = vlaneseq
    %v832 = vshrl.u32 %v831, 7
    %v833 = vsub.s32 %v830, %v832
    %v834 = vrot.slane %v826, %v833
    %v836 = vunpack.c.l.s4 1934713408
    %v837 = vunpack.c.0.s8 %v836
    %v838 = vlaneseq
    %v839 = vshrl.u32 %v838, 7
    %v840 = vsub.s32 %v837, %v839
    %v841 = vrot.slane %v827, %v840
    %v842 = vcombine.high %v818, 0.0
    %v843 = vcombine.high %v825, 0.0
    %v844 = vcombine.high %v834, 0.0
    %v845 = vcombine.high %v841, 0.0
    %v846 = vcombine.low %v757, %v765
    %v847 = vcombine.high %v757, %v765
    %v849 = vunpack.c.l.s4 1983009808
    %v850 = vunpack.c.0.s8 %v849
    %v851 = vlaneseq
    %v852 = vshrl.u32 %v851, 7
    %v853 = vsub.s32 %v850, %v852
    %v854 = vrot.slane %v846, %v853
    %v856 = vunpack.c.l.s4 1983009808
    %v857 = vunpack.c.0.s8 %v856
    %v858 = vlaneseq
    %v859 = vshrl.u32 %v858, 7
    %v860 = vsub.s32 %v857, %v859
    %v861 = vrot.slane %v847, %v860
    %v862 = vcombine.low %v761, %v769
    %v863 = vcombine.high %v761, %v769
    %v865 = vunpack.c.l.s4 1983009808
    %v866 = vunpack.c.0.s8 %v865
    %v867 = vlaneseq
    %v868 = vshrl.u32 %v867, 7
    %v869 = vsub.s32 %v866, %v868
    %v870 = vrot.slane %v862, %v869
    %v872 = vunpack.c.l.s4 1983009808
    %v873 = vunpack.c.0.s8 %v872
    %v874 = vlaneseq
    %v875 = vshrl.u32 %v874, 7
    %v876 = vsub.s32 %v873, %v875
    %v877 = vrot.slane %v863, %v876
    %v878 = vcombine.low %v854, %v870
    %v879 = vcombine.high %v854, %v870
    %v881 = vunpack.c.l.s4 1934713408
    %v882 = vunpack.c.0.s8 %v881
    %v883 = vlaneseq
    %v884 = vshrl.u32 %v883, 7
    %v885 = vsub.s32 %v882, %v884
    %v886 = vrot.slane %v878, %v885
    %v888 = vunpack.c.l.s4 1934713408
    %v889 = vunpack.c.0.s8 %v888
    %v890 = vlaneseq
    %v891 = vshrl.u32 %v890, 7
    %v892 = vsub.s32 %v889, %v891
    %v893 = vrot.slane %v879, %v892
    %v894 = vcombine.low %v861, %v877
    %v895 = vcombine.high %v861, %v877
    %v897 = vunpack.c.l.s4 1934713408
    %v898 = vunpack.c.0.s8 %v897
    %v899 = vlaneseq
    %v900 = vshrl.u32 %v899, 7
    %v901 = vsub.s32 %v898, %v900
    %v902 = vrot.slane %v894, %v901
    %v904 = vunpack.c.l.s4 1934713408
    %v905 = vunpack.c.0.s8 %v904
    %v906 = vlaneseq
    %v907 = vshrl.u32 %v906, 7
    %v908 = vsub.s32 %v905, %v907
    %v909 = vrot.slane %v895, %v908
    %v910 = vcombine.high %v886, 0.0
    %v911 = vcombine.high %v893, 0.0
    %v912 = vcombine.high %v902, 0.0
    %v913 = vcombine.high %v909, 0.0
    %v914 = vcombine.low %v818, %v825
    %v916 = vunpack.c.l.s4 1983009808
    %v917 = vunpack.c.0.s8 %v916
    %v918 = vlaneseq
    %v919 = vshrl.u32 %v918, 7
    %v920 = vsub.s32 %v917, %v919
    %v921 = vrot.slane %v914, %v920
    %v922 = vcombine.low %v842, %v843
    %v924 = vunpack.c.l.s4 1983009808
    %v925 = vunpack.c.0.s8 %v924
    %v926 = vlaneseq
    %v927 = vshrl.u32 %v926, 7
    %v928 = vsub.s32 %v925, %v927
    %v929 = vrot.slane %v922, %v928
    %v930 = vcombine.low %v834, %v841
    %v932 = vunpack.c.l.s4 1983009808
    %v933 = vunpack.c.0.s8 %v932
    %v934 = vlaneseq
    %v935 = vshrl.u32 %v934, 7
    %v936 = vsub.s32 %v933, %v935
    %v937 = vrot.slane %v930, %v936
    %v938 = vcombine.low %v844, %v845
    %v940 = vunpack.c.l.s4 1983009808
    %v941 = vunpack.c.0.s8 %v940
    %v942 = vlaneseq
    %v943 = vshrl.u32 %v942, 7
    %v944 = vsub.s32 %v941, %v943
    %v945 = vrot.slane %v938, %v944
    %v946 = vcombine.low %v921, %v929
    %v947 = vcombine.high %v921, %v929
    %v949 = vunpack.c.l.s4 1934713408
    %v950 = vunpack.c.0.s8 %v949
    %v951 = vlaneseq
    %v952 = vshrl.u32 %v951, 7
    %v953 = vsub.s32 %v950, %v952
    %v954 = vrot.slane %v946, %v953
    %v956 = vunpack.c.l.s4 1934713408
    %v957 = vunpack.c.0.s8 %v956
    %v958 = vlaneseq
    %v959 = vshrl.u32 %v958, 7
    %v960 = vsub.s32 %v957, %v959
    %v961 = vrot.slane %v947, %v960
    %v962 = vcombine.low %v937, %v945
    %v963 = vcombine.high %v937, %v945
    %v965 = vunpack.c.l.s4 1934713408
    %v966 = vunpack.c.0.s8 %v965
    %v967 = vlaneseq
    %v968 = vshrl.u32 %v967, 7
    %v969 = vsub.s32 %v966, %v968
    %v970 = vrot.slane %v962, %v969
    %v972 = vunpack.c.l.s4 1934713408
    %v973 = vunpack.c.0.s8 %v972
    %v974 = vlaneseq
    %v975 = vshrl.u32 %v974, 7
    %v976 = vsub.s32 %v973, %v975
    %v977 = vrot.slane %v963, %v976
    %v978 = vcombine.low %v954, %v970
    %v979 = vcombine.high %v954, %v970
    %v980 = vcombine.low %v961, %v977
    %v981 = vcombine.high %v961, %v977
    %v982 = vcombine.low %v886, %v893
    %v984 = vunpack.c.l.s4 1983009808
    %v985 = vunpack.c.0.s8 %v984
    %v986 = vlaneseq
    %v987 = vshrl.u32 %v986, 7
    %v988 = vsub.s32 %v985, %v987
    %v989 = vrot.slane %v982, %v988
    %v990 = vcombine.low %v910, %v911
    %v992 = vunpack.c.l.s4 1983009808
    %v993 = vunpack.c.0.s8 %v992
    %v994 = vlaneseq
    %v995 = vshrl.u32 %v994, 7
    %v996 = vsub.s32 %v993, %v995
    %v997 = vrot.slane %v990, %v996
    %v998 = vcombine.low %v902, %v909
    %v1000 = vunpack.c.l.s4 1983009808
    %v1001 = vunpack.c.0.s8 %v1000
    %v1002 = vlaneseq
    %v1003 = vshrl.u32 %v1002, 7
    %v1004 = vsub.s32 %v1001, %v1003
    %v1005 = vrot.slane %v998, %v1004
    %v1006 = vcombine.low %v912, %v913
    %v1008 = vunpack.c.l.s4 1983009808
    %v1009 = vunpack.c.0.s8 %v1008
    %v1010 = vlaneseq
    %v1011 = vshrl.u32 %v1010, 7
    %v1012 = vsub.s32 %v1009, %v1011
    %v1013 = vrot.slane %v1006, %v1012
    %v1014 = vcombine.low %v989, %v997
    %v1015 = vcombine.high %v989, %v997
    %v1017 = vunpack.c.l.s4 1934713408
    %v1018 = vunpack.c.0.s8 %v1017
    %v1019 = vlaneseq
    %v1020 = vshrl.u32 %v1019, 7
    %v1021 = vsub.s32 %v1018, %v1020
    %v1022 = vrot.slane %v1014, %v1021
    %v1024 = vunpack.c.l.s4 1934713408
    %v1025 = vunpack.c.0.s8 %v1024
    %v1026 = vlaneseq
    %v1027 = vshrl.u32 %v1026, 7
    %v1028 = vsub.s32 %v1025, %v1027
    %v1029 = vrot.slane %v1015, %v1028
    %v1030 = vcombine.low %v1005, %v1013
    %v1031 = vcombine.high %v1005, %v1013
    %v1033 = vunpack.c.l.s4 1934713408
    %v1034 = vunpack.c.0.s8 %v1033
    %v1035 = vlaneseq
    %v1036 = vshrl.u32 %v1035, 7
    %v1037 = vsub.s32 %v1034, %v1036
    %v1038 = vrot.slane %v1030, %v1037
    %v1040 = vunpack.c.l.s4 1934713408
    %v1041 = vunpack.c.0.s8 %v1040
    %v1042 = vlaneseq
    %v1043 = vshrl.u32 %v1042, 7
    %v1044 = vsub.s32 %v1041, %v1043
    %v1045 = vrot.slane %v1031, %v1044
    %v1046 = vcombine.low %v1022, %v1038
    %v1047 = vcombine.high %v1022, %v1038
    %v1048 = vcombine.low %v1029, %v1045
    %v1049 = vcombine.high %v1029, %v1045
    %vm1050 = vcmask 64512
    %v1052 = vsel %vm1050, %v386, 0
    %v1055 = vsel %vm1050, %v682, 0
    %1057 = vmatprep.subr.mxu0 0.0
    %1058 = vmatpush1.xpose.msra.mxu0 %v1055
    %1059 = vmatprep.subr.mxu0 0.0
    %1060 = vmatpush1.xpose.msra.mxu0 0.0
    %1061 = vmatprep.subr.mxu0 0.0
    %1062 = vmatpush1.xpose.msra.mxu0 0.0
    %1063 = vmatprep.subr.mxu0 0.0
    %1064 = vmatpush1.xpose.msra.mxu0 0.0
    %1065 = vmatprep.subr.mxu0 0.0
    %1066 = vmatpush1.xpose.msra.mxu0 0.0
    %1067 = vmatprep.subr.mxu0 0.0
    %1068 = vmatpush1.xpose.msra.mxu0 0.0
    %1069 = vmatprep.subr.mxu0 0.0
    %1070 = vmatpush1.xpose.msra.mxu0 0.0
    %1071 = vmatprep.subr.mxu0 0.0
    %1072 = vmatpush1.xpose.msra.mxu0 0.0
    %1073 = vmatprep.subr.mxu0 0.0
    %1074 = vmatpush1.xpose.msra.mxu0 0.0
    %1075 = vmatprep.subr.mxu0 0.0
    %1076 = vmatpush1.xpose.msra.mxu0 0.0
    %1077 = vmatprep.subr.mxu0 0.0
    %1078 = vmatpush1.xpose.msra.mxu0 0.0
    %1079 = vmatprep.subr.mxu0 0.0
    %1080 = vmatpush1.xpose.msra.mxu0 0.0
    %1081 = vmatprep.subr.mxu0 0.0
    %1082 = vmatpush1.xpose.msra.mxu0 0.0
    %1083 = vmatprep.subr.mxu0 0.0
    %1084 = vmatpush1.xpose.msra.mxu0 0.0
    %1085 = vmatprep.subr.mxu0 0.0
    %1086 = vmatpush1.xpose.msra.mxu0 0.0
    %1087 = vmatprep.subr.mxu0 0.0
    %1088 = vmatpush1.xpose.msra.mxu0 0.0
    %1089 = vmatprep.subr.mxu0 0.0
    %1090 = vmatpush1.xpose.msra.mxu0 0.0
    %1091 = vmatprep.subr.mxu0 0.0
    %1092 = vmatpush1.xpose.msra.mxu0 0.0
    %1093 = vmatprep.subr.mxu0 0.0
    %1094 = vmatpush1.xpose.msra.mxu0 0.0
    %1095 = vmatprep.subr.mxu0 0.0
    %1096 = vmatpush1.xpose.msra.mxu0 0.0
    %1097 = vmatprep.subr.mxu0 0.0
    %1098 = vmatpush1.xpose.msra.mxu0 0.0
    %1099 = vmatprep.subr.mxu0 0.0
    %1100 = vmatpush1.xpose.msra.mxu0 0.0
    %1101 = vmatprep.subr.mxu0 0.0
    %1102 = vmatpush1.xpose.msra.mxu0 0.0
    %1103 = vmatprep.subr.mxu0 0.0
    %1104 = vmatpush1.xpose.msra.mxu0 0.0
    %1105 = vmatprep.subr.mxu0 0.0
    %1106 = vmatpush1.xpose.msra.mxu0 0.0
    %1107 = vmatprep.subr.mxu0 0.0
    %1108 = vmatpush1.xpose.msra.mxu0 0.0
    %1109 = vmatprep.subr.mxu0 0.0
    %1110 = vmatpush1.xpose.msra.mxu0 0.0
    %1111 = vmatprep.subr.mxu0 0.0
    %1112 = vmatpush1.xpose.msra.mxu0 0.0
    %1113 = vmatprep.subr.mxu0 0.0
    %1114 = vmatpush1.xpose.msra.mxu0 0.0
    %1115 = vmatprep.subr.mxu0 0.0
    %1116 = vmatpush1.xpose.msra.mxu0 0.0
    %1117 = vmatprep.subr.mxu0 0.0
    %1118 = vmatpush1.xpose.msra.mxu0 0.0
    %1119 = vmatprep.subr.mxu0 0.0
    %1120 = vmatpush1.xpose.msra.mxu0 0.0
    %1121 = vmatprep.mubr.f32.mxu0 0.0
    %1122 = vmatmul.mubr.f32.gmra.mrb[0].mxu0 %v1052
    %v1123 = vpop.f32.mrb[0].mxu0
    %v1124 = vadd.f32 0.0, %v1123
    %v1125 = vpop.f32.mrb[0].mxu0
    %1126 = vdwg.mxu0
    %v1128 = vsel %vm1050, %v387, 0
    %v1131 = vsel %vm1050, %v683, 0
    %1133 = vmatprep.subr.mxu0 0.0
    %1134 = vmatpush1.xpose.msra.mxu0 %v1131
    %1135 = vmatprep.subr.mxu0 0.0
    %1136 = vmatpush1.xpose.msra.mxu0 0.0
    %1137 = vmatprep.subr.mxu0 0.0
    %1138 = vmatpush1.xpose.msra.mxu0 0.0
    %1139 = vmatprep.subr.mxu0 0.0
    %1140 = vmatpush1.xpose.msra.mxu0 0.0
    %1141 = vmatprep.subr.mxu0 0.0
    %1142 = vmatpush1.xpose.msra.mxu0 0.0
    %1143 = vmatprep.subr.mxu0 0.0
    %1144 = vmatpush1.xpose.msra.mxu0 0.0
    %1145 = vmatprep.subr.mxu0 0.0
    %1146 = vmatpush1.xpose.msra.mxu0 0.0
    %1147 = vmatprep.subr.mxu0 0.0
    %1148 = vmatpush1.xpose.msra.mxu0 0.0
    %1149 = vmatprep.subr.mxu0 0.0
    %1150 = vmatpush1.xpose.msra.mxu0 0.0
    %1151 = vmatprep.subr.mxu0 0.0
    %1152 = vmatpush1.xpose.msra.mxu0 0.0
    %1153 = vmatprep.subr.mxu0 0.0
    %1154 = vmatpush1.xpose.msra.mxu0 0.0
    %1155 = vmatprep.subr.mxu0 0.0
    %1156 = vmatpush1.xpose.msra.mxu0 0.0
    %1157 = vmatprep.subr.mxu0 0.0
    %1158 = vmatpush1.xpose.msra.mxu0 0.0
    %1159 = vmatprep.subr.mxu0 0.0
    %1160 = vmatpush1.xpose.msra.mxu0 0.0
    %1161 = vmatprep.subr.mxu0 0.0
    %1162 = vmatpush1.xpose.msra.mxu0 0.0
    %1163 = vmatprep.subr.mxu0 0.0
    %1164 = vmatpush1.xpose.msra.mxu0 0.0
    %1165 = vmatprep.subr.mxu0 0.0
    %1166 = vmatpush1.xpose.msra.mxu0 0.0
    %1167 = vmatprep.subr.mxu0 0.0
    %1168 = vmatpush1.xpose.msra.mxu0 0.0
    %1169 = vmatprep.subr.mxu0 0.0
    %1170 = vmatpush1.xpose.msra.mxu0 0.0
    %1171 = vmatprep.subr.mxu0 0.0
    %1172 = vmatpush1.xpose.msra.mxu0 0.0
    %1173 = vmatprep.subr.mxu0 0.0
    %1174 = vmatpush1.xpose.msra.mxu0 0.0
    %1175 = vmatprep.subr.mxu0 0.0
    %1176 = vmatpush1.xpose.msra.mxu0 0.0
    %1177 = vmatprep.subr.mxu0 0.0
    %1178 = vmatpush1.xpose.msra.mxu0 0.0
    %1179 = vmatprep.subr.mxu0 0.0
    %1180 = vmatpush1.xpose.msra.mxu0 0.0
    %1181 = vmatprep.subr.mxu0 0.0
    %1182 = vmatpush1.xpose.msra.mxu0 0.0
    %1183 = vmatprep.subr.mxu0 0.0
    %1184 = vmatpush1.xpose.msra.mxu0 0.0
    %1185 = vmatprep.subr.mxu0 0.0
    %1186 = vmatpush1.xpose.msra.mxu0 0.0
    %1187 = vmatprep.subr.mxu0 0.0
    %1188 = vmatpush1.xpose.msra.mxu0 0.0
    %1189 = vmatprep.subr.mxu0 0.0
    %1190 = vmatpush1.xpose.msra.mxu0 0.0
    %1191 = vmatprep.subr.mxu0 0.0
    %1192 = vmatpush1.xpose.msra.mxu0 0.0
    %1193 = vmatprep.subr.mxu0 0.0
    %1194 = vmatpush1.xpose.msra.mxu0 0.0
    %1195 = vmatprep.subr.mxu0 0.0
    %1196 = vmatpush1.xpose.msra.mxu0 0.0
    %1197 = vmatprep.mubr.f32.mxu0 0.0
    %1198 = vmatmul.mubr.f32.gmra.mrb[0].mxu0 %v1128
    %v1199 = vpop.f32.mrb[0].mxu0
    %v1200 = vadd.f32 0.0, %v1199
    %v1201 = vpop.f32.mrb[0].mxu0
    %1202 = vdwg.mxu0
    %v1204 = vsel %vm1050, %v388, 0
    %v1207 = vsel %vm1050, %v684, 0
    %1209 = vmatprep.subr.mxu0 0.0
    %1210 = vmatpush1.xpose.msra.mxu0 %v1207
    %1211 = vmatprep.subr.mxu0 0.0
    %1212 = vmatpush1.xpose.msra.mxu0 0.0
    %1213 = vmatprep.subr.mxu0 0.0
    %1214 = vmatpush1.xpose.msra.mxu0 0.0
    %1215 = vmatprep.subr.mxu0 0.0
    %1216 = vmatpush1.xpose.msra.mxu0 0.0
    %1217 = vmatprep.subr.mxu0 0.0
    %1218 = vmatpush1.xpose.msra.mxu0 0.0
    %1219 = vmatprep.subr.mxu0 0.0
    %1220 = vmatpush1.xpose.msra.mxu0 0.0
    %1221 = vmatprep.subr.mxu0 0.0
    %1222 = vmatpush1.xpose.msra.mxu0 0.0
    %1223 = vmatprep.subr.mxu0 0.0
    %1224 = vmatpush1.xpose.msra.mxu0 0.0
    %1225 = vmatprep.subr.mxu0 0.0
    %1226 = vmatpush1.xpose.msra.mxu0 0.0
    %1227 = vmatprep.subr.mxu0 0.0
    %1228 = vmatpush1.xpose.msra.mxu0 0.0
    %1229 = vmatprep.subr.mxu0 0.0
    %1230 = vmatpush1.xpose.msra.mxu0 0.0
    %1231 = vmatprep.subr.mxu0 0.0
    %1232 = vmatpush1.xpose.msra.mxu0 0.0
    %1233 = vmatprep.subr.mxu0 0.0
    %1234 = vmatpush1.xpose.msra.mxu0 0.0
    %1235 = vmatprep.subr.mxu0 0.0
    %1236 = vmatpush1.xpose.msra.mxu0 0.0
    %1237 = vmatprep.subr.mxu0 0.0
    %1238 = vmatpush1.xpose.msra.mxu0 0.0
    %1239 = vmatprep.subr.mxu0 0.0
    %1240 = vmatpush1.xpose.msra.mxu0 0.0
    %1241 = vmatprep.subr.mxu0 0.0
    %1242 = vmatpush1.xpose.msra.mxu0 0.0
    %1243 = vmatprep.subr.mxu0 0.0
    %1244 = vmatpush1.xpose.msra.mxu0 0.0
    %1245 = vmatprep.subr.mxu0 0.0
    %1246 = vmatpush1.xpose.msra.mxu0 0.0
    %1247 = vmatprep.subr.mxu0 0.0
    %1248 = vmatpush1.xpose.msra.mxu0 0.0
    %1249 = vmatprep.subr.mxu0 0.0
    %1250 = vmatpush1.xpose.msra.mxu0 0.0
    %1251 = vmatprep.subr.mxu0 0.0
    %1252 = vmatpush1.xpose.msra.mxu0 0.0
    %1253 = vmatprep.subr.mxu0 0.0
    %1254 = vmatpush1.xpose.msra.mxu0 0.0
    %1255 = vmatprep.subr.mxu0 0.0
    %1256 = vmatpush1.xpose.msra.mxu0 0.0
    %1257 = vmatprep.subr.mxu0 0.0
    %1258 = vmatpush1.xpose.msra.mxu0 0.0
    %1259 = vmatprep.subr.mxu0 0.0
    %1260 = vmatpush1.xpose.msra.mxu0 0.0
    %1261 = vmatprep.subr.mxu0 0.0
    %1262 = vmatpush1.xpose.msra.mxu0 0.0
    %1263 = vmatprep.subr.mxu0 0.0
    %1264 = vmatpush1.xpose.msra.mxu0 0.0
    %1265 = vmatprep.subr.mxu0 0.0
    %1266 = vmatpush1.xpose.msra.mxu0 0.0
    %1267 = vmatprep.subr.mxu0 0.0
    %1268 = vmatpush1.xpose.msra.mxu0 0.0
    %1269 = vmatprep.subr.mxu0 0.0
    %1270 = vmatpush1.xpose.msra.mxu0 0.0
    %1271 = vmatprep.subr.mxu0 0.0
    %1272 = vmatpush1.xpose.msra.mxu0 0.0
    %1273 = vmatprep.mubr.f32.mxu0 0.0
    %1274 = vmatmul.mubr.f32.gmra.mrb[0].mxu0 %v1204
    %v1275 = vpop.f32.mrb[0].mxu0
    %v1276 = vadd.f32 0.0, %v1275
    %v1277 = vpop.f32.mrb[0].mxu0
    %1278 = vdwg.mxu0
    %v1280 = vsel %vm1050, %v389, 0
    %v1283 = vsel %vm1050, %v685, 0
    %1285 = vmatprep.subr.mxu0 0.0
    %1286 = vmatpush1.xpose.msra.mxu0 %v1283
    %1287 = vmatprep.subr.mxu0 0.0
    %1288 = vmatpush1.xpose.msra.mxu0 0.0
    %1289 = vmatprep.subr.mxu0 0.0
    %1290 = vmatpush1.xpose.msra.mxu0 0.0
    %1291 = vmatprep.subr.mxu0 0.0
    %1292 = vmatpush1.xpose.msra.mxu0 0.0
    %1293 = vmatprep.subr.mxu0 0.0
    %1294 = vmatpush1.xpose.msra.mxu0 0.0
    %1295 = vmatprep.subr.mxu0 0.0
    %1296 = vmatpush1.xpose.msra.mxu0 0.0
    %1297 = vmatprep.subr.mxu0 0.0
    %1298 = vmatpush1.xpose.msra.mxu0 0.0
    %1299 = vmatprep.subr.mxu0 0.0
    %1300 = vmatpush1.xpose.msra.mxu0 0.0
    %1301 = vmatprep.subr.mxu0 0.0
    %1302 = vmatpush1.xpose.msra.mxu0 0.0
    %1303 = vmatprep.subr.mxu0 0.0
    %1304 = vmatpush1.xpose.msra.mxu0 0.0
    %1305 = vmatprep.subr.mxu0 0.0
    %1306 = vmatpush1.xpose.msra.mxu0 0.0
    %1307 = vmatprep.subr.mxu0 0.0
    %1308 = vmatpush1.xpose.msra.mxu0 0.0
    %1309 = vmatprep.subr.mxu0 0.0
    %1310 = vmatpush1.xpose.msra.mxu0 0.0
    %1311 = vmatprep.subr.mxu0 0.0
    %1312 = vmatpush1.xpose.msra.mxu0 0.0
    %1313 = vmatprep.subr.mxu0 0.0
    %1314 = vmatpush1.xpose.msra.mxu0 0.0
    %1315 = vmatprep.subr.mxu0 0.0
    %1316 = vmatpush1.xpose.msra.mxu0 0.0
    %1317 = vmatprep.subr.mxu0 0.0
    %1318 = vmatpush1.xpose.msra.mxu0 0.0
    %1319 = vmatprep.subr.mxu0 0.0
    %1320 = vmatpush1.xpose.msra.mxu0 0.0
    %1321 = vmatprep.subr.mxu0 0.0
    %1322 = vmatpush1.xpose.msra.mxu0 0.0
    %1323 = vmatprep.subr.mxu0 0.0
    %1324 = vmatpush1.xpose.msra.mxu0 0.0
    %1325 = vmatprep.subr.mxu0 0.0
    %1326 = vmatpush1.xpose.msra.mxu0 0.0
    %1327 = vmatprep.subr.mxu0 0.0
    %1328 = vmatpush1.xpose.msra.mxu0 0.0
    %1329 = vmatprep.subr.mxu0 0.0
    %1330 = vmatpush1.xpose.msra.mxu0 0.0
    %1331 = vmatprep.subr.mxu0 0.0
    %1332 = vmatpush1.xpose.msra.mxu0 0.0
    %1333 = vmatprep.subr.mxu0 0.0
    %1334 = vmatpush1.xpose.msra.mxu0 0.0
    %1335 = vmatprep.subr.mxu0 0.0
    %1336 = vmatpush1.xpose.msra.mxu0 0.0
    %1337 = vmatprep.subr.mxu0 0.0
    %1338 = vmatpush1.xpose.msra.mxu0 0.0
    %1339 = vmatprep.subr.mxu0 0.0
    %1340 = vmatpush1.xpose.msra.mxu0 0.0
    %1341 = vmatprep.subr.mxu0 0.0
    %1342 = vmatpush1.xpose.msra.mxu0 0.0
    %1343 = vmatprep.subr.mxu0 0.0
    %1344 = vmatpush1.xpose.msra.mxu0 0.0
    %1345 = vmatprep.subr.mxu0 0.0
    %1346 = vmatpush1.xpose.msra.mxu0 0.0
    %1347 = vmatprep.subr.mxu0 0.0
    %1348 = vmatpush1.xpose.msra.mxu0 0.0
    %1349 = vmatprep.mubr.f32.mxu0 0.0
    %1350 = vmatmul.mubr.f32.gmra.mrb[0].mxu0 %v1280
    %v1351 = vpop.f32.mrb[0].mxu0
    %v1352 = vadd.f32 0.0, %v1351
    %v1353 = vpop.f32.mrb[0].mxu0
    %1354 = vdwg.mxu0
    %v1356 = vsel %vm1050, %v454, 0
    %v1359 = vsel %vm1050, %v750, 0
    %1361 = vmatprep.subr.mxu0 0.0
    %1362 = vmatpush1.xpose.msra.mxu0 %v1359
    %1363 = vmatprep.subr.mxu0 0.0
    %1364 = vmatpush1.xpose.msra.mxu0 0.0
    %1365 = vmatprep.subr.mxu0 0.0
    %1366 = vmatpush1.xpose.msra.mxu0 0.0
    %1367 = vmatprep.subr.mxu0 0.0
    %1368 = vmatpush1.xpose.msra.mxu0 0.0
    %1369 = vmatprep.subr.mxu0 0.0
    %1370 = vmatpush1.xpose.msra.mxu0 0.0
    %1371 = vmatprep.subr.mxu0 0.0
    %1372 = vmatpush1.xpose.msra.mxu0 0.0
    %1373 = vmatprep.subr.mxu0 0.0
    %1374 = vmatpush1.xpose.msra.mxu0 0.0
    %1375 = vmatprep.subr.mxu0 0.0
    %1376 = vmatpush1.xpose.msra.mxu0 0.0
    %1377 = vmatprep.subr.mxu0 0.0
    %1378 = vmatpush1.xpose.msra.mxu0 0.0
    %1379 = vmatprep.subr.mxu0 0.0
    %1380 = vmatpush1.xpose.msra.mxu0 0.0
    %1381 = vmatprep.subr.mxu0 0.0
    %1382 = vmatpush1.xpose.msra.mxu0 0.0
    %1383 = vmatprep.subr.mxu0 0.0
    %1384 = vmatpush1.xpose.msra.mxu0 0.0
    %1385 = vmatprep.subr.mxu0 0.0
    %1386 = vmatpush1.xpose.msra.mxu0 0.0
    %1387 = vmatprep.subr.mxu0 0.0
    %1388 = vmatpush1.xpose.msra.mxu0 0.0
    %1389 = vmatprep.subr.mxu0 0.0
    %1390 = vmatpush1.xpose.msra.mxu0 0.0
    %1391 = vmatprep.subr.mxu0 0.0
    %1392 = vmatpush1.xpose.msra.mxu0 0.0
    %1393 = vmatprep.subr.mxu0 0.0
    %1394 = vmatpush1.xpose.msra.mxu0 0.0
    %1395 = vmatprep.subr.mxu0 0.0
    %1396 = vmatpush1.xpose.msra.mxu0 0.0
    %1397 = vmatprep.subr.mxu0 0.0
    %1398 = vmatpush1.xpose.msra.mxu0 0.0
    %1399 = vmatprep.subr.mxu0 0.0
    %1400 = vmatpush1.xpose.msra.mxu0 0.0
    %1401 = vmatprep.subr.mxu0 0.0
    %1402 = vmatpush1.xpose.msra.mxu0 0.0
    %1403 = vmatprep.subr.mxu0 0.0
    %1404 = vmatpush1.xpose.msra.mxu0 0.0
    %1405 = vmatprep.subr.mxu0 0.0
    %1406 = vmatpush1.xpose.msra.mxu0 0.0
    %1407 = vmatprep.subr.mxu0 0.0
    %1408 = vmatpush1.xpose.msra.mxu0 0.0
    %1409 = vmatprep.subr.mxu0 0.0
    %1410 = vmatpush1.xpose.msra.mxu0 0.0
    %1411 = vmatprep.subr.mxu0 0.0
    %1412 = vmatpush1.xpose.msra.mxu0 0.0
    %1413 = vmatprep.subr.mxu0 0.0
    %1414 = vmatpush1.xpose.msra.mxu0 0.0
    %1415 = vmatprep.subr.mxu0 0.0
    %1416 = vmatpush1.xpose.msra.mxu0 0.0
    %1417 = vmatprep.subr.mxu0 0.0
    %1418 = vmatpush1.xpose.msra.mxu0 0.0
    %1419 = vmatprep.subr.mxu0 0.0
    %1420 = vmatpush1.xpose.msra.mxu0 0.0
    %1421 = vmatprep.subr.mxu0 0.0
    %1422 = vmatpush1.xpose.msra.mxu0 0.0
    %1423 = vmatprep.subr.mxu0 0.0
    %1424 = vmatpush1.xpose.msra.mxu0 0.0
    %1425 = vmatprep.mubr.f32.mxu0 0.0
    %1426 = vmatmul.mubr.f32.gmra.mrb[0].mxu0 %v1356
    %v1427 = vpop.f32.mrb[0].mxu0
    %v1428 = vadd.f32 0.0, %v1427
    %v1429 = vpop.f32.mrb[0].mxu0
    %1430 = vdwg.mxu0
    %v1432 = vsel %vm1050, %v455, 0
    %v1435 = vsel %vm1050, %v751, 0
    %1437 = vmatprep.subr.mxu0 0.0
    %1438 = vmatpush1.xpose.msra.mxu0 %v1435
    %1439 = vmatprep.subr.mxu0 0.0
    %1440 = vmatpush1.xpose.msra.mxu0 0.0
    %1441 = vmatprep.subr.mxu0 0.0
    %1442 = vmatpush1.xpose.msra.mxu0 0.0
    %1443 = vmatprep.subr.mxu0 0.0
    %1444 = vmatpush1.xpose.msra.mxu0 0.0
    %1445 = vmatprep.subr.mxu0 0.0
    %1446 = vmatpush1.xpose.msra.mxu0 0.0
    %1447 = vmatprep.subr.mxu0 0.0
    %1448 = vmatpush1.xpose.msra.mxu0 0.0
    %1449 = vmatprep.subr.mxu0 0.0
    %1450 = vmatpush1.xpose.msra.mxu0 0.0
    %1451 = vmatprep.subr.mxu0 0.0
    %1452 = vmatpush1.xpose.msra.mxu0 0.0
    %1453 = vmatprep.subr.mxu0 0.0
    %1454 = vmatpush1.xpose.msra.mxu0 0.0
    %1455 = vmatprep.subr.mxu0 0.0
    %1456 = vmatpush1.xpose.msra.mxu0 0.0
    %1457 = vmatprep.subr.mxu0 0.0
    %1458 = vmatpush1.xpose.msra.mxu0 0.0
    %1459 = vmatprep.subr.mxu0 0.0
    %1460 = vmatpush1.xpose.msra.mxu0 0.0
    %1461 = vmatprep.subr.mxu0 0.0
    %1462 = vmatpush1.xpose.msra.mxu0 0.0
    %1463 = vmatprep.subr.mxu0 0.0
    %1464 = vmatpush1.xpose.msra.mxu0 0.0
    %1465 = vmatprep.subr.mxu0 0.0
    %1466 = vmatpush1.xpose.msra.mxu0 0.0
    %1467 = vmatprep.subr.mxu0 0.0
    %1468 = vmatpush1.xpose.msra.mxu0 0.0
    %1469 = vmatprep.subr.mxu0 0.0
    %1470 = vmatpush1.xpose.msra.mxu0 0.0
    %1471 = vmatprep.subr.mxu0 0.0
    %1472 = vmatpush1.xpose.msra.mxu0 0.0
    %1473 = vmatprep.subr.mxu0 0.0
    %1474 = vmatpush1.xpose.msra.mxu0 0.0
    %1475 = vmatprep.subr.mxu0 0.0
    %1476 = vmatpush1.xpose.msra.mxu0 0.0
    %1477 = vmatprep.subr.mxu0 0.0
    %1478 = vmatpush1.xpose.msra.mxu0 0.0
    %1479 = vmatprep.subr.mxu0 0.0
    %1480 = vmatpush1.xpose.msra.mxu0 0.0
    %1481 = vmatprep.subr.mxu0 0.0
    %1482 = vmatpush1.xpose.msra.mxu0 0.0
    %1483 = vmatprep.subr.mxu0 0.0
    %1484 = vmatpush1.xpose.msra.mxu0 0.0
    %1485 = vmatprep.subr.mxu0 0.0
    %1486 = vmatpush1.xpose.msra.mxu0 0.0
    %1487 = vmatprep.subr.mxu0 0.0
    %1488 = vmatpush1.xpose.msra.mxu0 0.0
    %1489 = vmatprep.subr.mxu0 0.0
    %1490 = vmatpush1.xpose.msra.mxu0 0.0
    %1491 = vmatprep.subr.mxu0 0.0
    %1492 = vmatpush1.xpose.msra.mxu0 0.0
    %1493 = vmatprep.subr.mxu0 0.0
    %1494 = vmatpush1.xpose.msra.mxu0 0.0
    %1495 = vmatprep.subr.mxu0 0.0
    %1496 = vmatpush1.xpose.msra.mxu0 0.0
    %1497 = vmatprep.subr.mxu0 0.0
    %1498 = vmatpush1.xpose.msra.mxu0 0.0
    %1499 = vmatprep.subr.mxu0 0.0
    %1500 = vmatpush1.xpose.msra.mxu0 0.0
    %1501 = vmatprep.mubr.f32.mxu0 0.0
    %1502 = vmatmul.mubr.f32.gmra.mrb[0].mxu0 %v1432
    %v1503 = vpop.f32.mrb[0].mxu0
    %v1504 = vadd.f32 0.0, %v1503
    %v1505 = vpop.f32.mrb[0].mxu0
    %1506 = vdwg.mxu0
    %v1508 = vsel %vm1050, %v456, 0
    %v1511 = vsel %vm1050, %v752, 0
    %1513 = vmatprep.subr.mxu0 0.0
    %1514 = vmatpush1.xpose.msra.mxu0 %v1511
    %1515 = vmatprep.subr.mxu0 0.0
    %1516 = vmatpush1.xpose.msra.mxu0 0.0
    %1517 = vmatprep.subr.mxu0 0.0
    %1518 = vmatpush1.xpose.msra.mxu0 0.0
    %1519 = vmatprep.subr.mxu0 0.0
    %1520 = vmatpush1.xpose.msra.mxu0 0.0
    %1521 = vmatprep.subr.mxu0 0.0
    %1522 = vmatpush1.xpose.msra.mxu0 0.0
    %1523 = vmatprep.subr.mxu0 0.0
    %1524 = vmatpush1.xpose.msra.mxu0 0.0
    %1525 = vmatprep.subr.mxu0 0.0
    %1526 = vmatpush1.xpose.msra.mxu0 0.0
    %1527 = vmatprep.subr.mxu0 0.0
    %1528 = vmatpush1.xpose.msra.mxu0 0.0
    %1529 = vmatprep.subr.mxu0 0.0
    %1530 = vmatpush1.xpose.msra.mxu0 0.0
    %1531 = vmatprep.subr.mxu0 0.0
    %1532 = vmatpush1.xpose.msra.mxu0 0.0
    %1533 = vmatprep.subr.mxu0 0.0
    %1534 = vmatpush1.xpose.msra.mxu0 0.0
    %1535 = vmatprep.subr.mxu0 0.0
    %1536 = vmatpush1.xpose.msra.mxu0 0.0
    %1537 = vmatprep.subr.mxu0 0.0
    %1538 = vmatpush1.xpose.msra.mxu0 0.0
    %1539 = vmatprep.subr.mxu0 0.0
    %1540 = vmatpush1.xpose.msra.mxu0 0.0
    %1541 = vmatprep.subr.mxu0 0.0
    %1542 = vmatpush1.xpose.msra.mxu0 0.0
    %1543 = vmatprep.subr.mxu0 0.0
    %1544 = vmatpush1.xpose.msra.mxu0 0.0
    %1545 = vmatprep.subr.mxu0 0.0
    %1546 = vmatpush1.xpose.msra.mxu0 0.0
    %1547 = vmatprep.subr.mxu0 0.0
    %1548 = vmatpush1.xpose.msra.mxu0 0.0
    %1549 = vmatprep.subr.mxu0 0.0
    %1550 = vmatpush1.xpose.msra.mxu0 0.0
    %1551 = vmatprep.subr.mxu0 0.0
    %1552 = vmatpush1.xpose.msra.mxu0 0.0
    %1553 = vmatprep.subr.mxu0 0.0
    %1554 = vmatpush1.xpose.msra.mxu0 0.0
    %1555 = vmatprep.subr.mxu0 0.0
    %1556 = vmatpush1.xpose.msra.mxu0 0.0
    %1557 = vmatprep.subr.mxu0 0.0
    %1558 = vmatpush1.xpose.msra.mxu0 0.0
    %1559 = vmatprep.subr.mxu0 0.0
    %1560 = vmatpush1.xpose.msra.mxu0 0.0
    %1561 = vmatprep.subr.mxu0 0.0
    %1562 = vmatpush1.xpose.msra.mxu0 0.0
    %1563 = vmatprep.subr.mxu0 0.0
    %1564 = vmatpush1.xpose.msra.mxu0 0.0
    %1565 = vmatprep.subr.mxu0 0.0
    %1566 = vmatpush1.xpose.msra.mxu0 0.0
    %1567 = vmatprep.subr.mxu0 0.0
    %1568 = vmatpush1.xpose.msra.mxu0 0.0
    %1569 = vmatprep.subr.mxu0 0.0
    %1570 = vmatpush1.xpose.msra.mxu0 0.0
    %1571 = vmatprep.subr.mxu0 0.0
    %1572 = vmatpush1.xpose.msra.mxu0 0.0
    %1573 = vmatprep.subr.mxu0 0.0
    %1574 = vmatpush1.xpose.msra.mxu0 0.0
    %1575 = vmatprep.subr.mxu0 0.0
    %1576 = vmatpush1.xpose.msra.mxu0 0.0
    %1577 = vmatprep.mubr.f32.mxu0 0.0
    %1578 = vmatmul.mubr.f32.gmra.mrb[0].mxu0 %v1508
    %v1579 = vpop.f32.mrb[0].mxu0
    %v1580 = vadd.f32 0.0, %v1579
    %v1581 = vpop.f32.mrb[0].mxu0
    %1582 = vdwg.mxu0
    %v1584 = vsel %vm1050, %v457, 0
    %v1587 = vsel %vm1050, %v753, 0
    %1589 = vmatprep.subr.mxu0 0.0
    %1590 = vmatpush1.xpose.msra.mxu0 %v1587
    %1591 = vmatprep.subr.mxu0 0.0
    %1592 = vmatpush1.xpose.msra.mxu0 0.0
    %1593 = vmatprep.subr.mxu0 0.0
    %1594 = vmatpush1.xpose.msra.mxu0 0.0
    %1595 = vmatprep.subr.mxu0 0.0
    %1596 = vmatpush1.xpose.msra.mxu0 0.0
    %1597 = vmatprep.subr.mxu0 0.0
    %1598 = vmatpush1.xpose.msra.mxu0 0.0
    %1599 = vmatprep.subr.mxu0 0.0
    %1600 = vmatpush1.xpose.msra.mxu0 0.0
    %1601 = vmatprep.subr.mxu0 0.0
    %1602 = vmatpush1.xpose.msra.mxu0 0.0
    %1603 = vmatprep.subr.mxu0 0.0
    %1604 = vmatpush1.xpose.msra.mxu0 0.0
    %1605 = vmatprep.subr.mxu0 0.0
    %1606 = vmatpush1.xpose.msra.mxu0 0.0
    %1607 = vmatprep.subr.mxu0 0.0
    %1608 = vmatpush1.xpose.msra.mxu0 0.0
    %1609 = vmatprep.subr.mxu0 0.0
    %1610 = vmatpush1.xpose.msra.mxu0 0.0
    %1611 = vmatprep.subr.mxu0 0.0
    %1612 = vmatpush1.xpose.msra.mxu0 0.0
    %1613 = vmatprep.subr.mxu0 0.0
    %1614 = vmatpush1.xpose.msra.mxu0 0.0
    %1615 = vmatprep.subr.mxu0 0.0
    %1616 = vmatpush1.xpose.msra.mxu0 0.0
    %1617 = vmatprep.subr.mxu0 0.0
    %1618 = vmatpush1.xpose.msra.mxu0 0.0
    %1619 = vmatprep.subr.mxu0 0.0
    %1620 = vmatpush1.xpose.msra.mxu0 0.0
    %1621 = vmatprep.subr.mxu0 0.0
    %1622 = vmatpush1.xpose.msra.mxu0 0.0
    %1623 = vmatprep.subr.mxu0 0.0
    %1624 = vmatpush1.xpose.msra.mxu0 0.0
    %1625 = vmatprep.subr.mxu0 0.0
    %1626 = vmatpush1.xpose.msra.mxu0 0.0
    %1627 = vmatprep.subr.mxu0 0.0
    %1628 = vmatpush1.xpose.msra.mxu0 0.0
    %1629 = vmatprep.subr.mxu0 0.0
    %1630 = vmatpush1.xpose.msra.mxu0 0.0
    %1631 = vmatprep.subr.mxu0 0.0
    %1632 = vmatpush1.xpose.msra.mxu0 0.0
    %1633 = vmatprep.subr.mxu0 0.0
    %1634 = vmatpush1.xpose.msra.mxu0 0.0
    %1635 = vmatprep.subr.mxu0 0.0
    %1636 = vmatpush1.xpose.msra.mxu0 0.0
    %1637 = vmatprep.subr.mxu0 0.0
    %1638 = vmatpush1.xpose.msra.mxu0 0.0
    %1639 = vmatprep.subr.mxu0 0.0
    %1640 = vmatpush1.xpose.msra.mxu0 0.0
    %1641 = vmatprep.subr.mxu0 0.0
    %1642 = vmatpush1.xpose.msra.mxu0 0.0
    %1643 = vmatprep.subr.mxu0 0.0
    %1644 = vmatpush1.xpose.msra.mxu0 0.0
    %1645 = vmatprep.subr.mxu0 0.0
    %1646 = vmatpush1.xpose.msra.mxu0 0.0
    %1647 = vmatprep.subr.mxu0 0.0
    %1648 = vmatpush1.xpose.msra.mxu0 0.0
    %1649 = vmatprep.subr.mxu0 0.0
    %1650 = vmatpush1.xpose.msra.mxu0 0.0
    %1651 = vmatprep.subr.mxu0 0.0
    %1652 = vmatpush1.xpose.msra.mxu0 0.0
    %1653 = vmatprep.mubr.f32.mxu0 0.0
    %1654 = vmatmul.mubr.f32.gmra.mrb[0].mxu0 %v1584
    %v1655 = vpop.f32.mrb[0].mxu0
    %v1656 = vadd.f32 0.0, %v1655
    %v1657 = vpop.f32.mrb[0].mxu0
    %1658 = vdwg.mxu0
    %v1659 = vsel %vm1050, %v1124, -inf
    %1660 = vmax.xlane.f32.xlu0 %v1659
    %v1661 = vpop.xlane.xlu0 %1660
    %v1662 = vsel %vm1050, %v1200, -inf
    %1663 = vmax.xlane.f32.xlu0 %v1662
    %v1664 = vpop.xlane.xlu0 %1663
    %v1665 = vsel %vm1050, %v1276, -inf
    %1666 = vmax.xlane.f32.xlu0 %v1665
    %v1667 = vpop.xlane.xlu0 %1666
    %v1668 = vsel %vm1050, %v1352, -inf
    %1669 = vmax.xlane.f32.xlu0 %v1668
    %v1670 = vpop.xlane.xlu0 %1669
    %v1671 = vsel %vm1050, %v1428, -inf
    %1672 = vmax.xlane.f32.xlu0 %v1671
    %v1673 = vpop.xlane.xlu0 %1672
    %v1674 = vsel %vm1050, %v1504, -inf
    %1675 = vmax.xlane.f32.xlu0 %v1674
    %v1676 = vpop.xlane.xlu0 %1675
    %v1677 = vsel %vm1050, %v1580, -inf
    %1678 = vmax.xlane.f32.xlu0 %v1677
    %v1679 = vpop.xlane.xlu0 %1678
    %v1680 = vsel %vm1050, %v1656, -inf
    %1681 = vmax.xlane.f32.xlu0 %v1680
    %v1682 = vpop.xlane.xlu0 %1681
    %v1683 = vsub.f32 %v1124, %v1661
    %v1684 = vsub.f32 %v1200, %v1664
    %v1685 = vsub.f32 %v1276, %v1667
    %v1686 = vsub.f32 %v1352, %v1670
    %v1687 = vsub.f32 %v1428, %v1673
    %v1688 = vsub.f32 %v1504, %v1676
    %v1689 = vsub.f32 %v1580, %v1679
    %v1690 = vsub.f32 %v1656, %v1682
    %v1691 = vmul.f32 %v1683, 1.442695
    %v1692 = vpow.pop %v1691
    %v1693 = vmul.f32 %v1684, 1.442695
    %v1694 = vpow.pop %v1693
    %v1695 = vmul.f32 %v1685, 1.442695
    %v1696 = vpow.pop %v1695
    %v1697 = vmul.f32 %v1686, 1.442695
    %v1698 = vpow.pop %v1697
    %v1699 = vmul.f32 %v1687, 1.442695
    %v1700 = vpow.pop %v1699
    %v1701 = vmul.f32 %v1688, 1.442695
    %v1702 = vpow.pop %v1701
    %v1703 = vmul.f32 %v1689, 1.442695
    %v1704 = vpow.pop %v1703
    %v1705 = vmul.f32 %v1690, 1.442695
    %v1706 = vpow.pop %v1705
    %v1707 = vsel %vm1050, %v1692, 0.0
    %1708 = vadd.xlane.f32.xlu0 %v1707
    %v1709 = vpop.xlane.xlu0 %1708
    %v1710 = vsel %vm1050, %v1694, 0.0
    %1711 = vadd.xlane.f32.xlu0 %v1710
    %v1712 = vpop.xlane.xlu0 %1711
    %v1713 = vsel %vm1050, %v1696, 0.0
    %1714 = vadd.xlane.f32.xlu0 %v1713
    %v1715 = vpop.xlane.xlu0 %1714
    %v1716 = vsel %vm1050, %v1698, 0.0
    %1717 = vadd.xlane.f32.xlu0 %v1716
    %v1718 = vpop.xlane.xlu0 %1717
    %v1719 = vsel %vm1050, %v1700, 0.0
    %1720 = vadd.xlane.f32.xlu0 %v1719
    %v1721 = vpop.xlane.xlu0 %1720
    %v1722 = vsel %vm1050, %v1702, 0.0
    %1723 = vadd.xlane.f32.xlu0 %v1722
    %v1724 = vpop.xlane.xlu0 %1723
    %v1725 = vsel %vm1050, %v1704, 0.0
    %1726 = vadd.xlane.f32.xlu0 %v1725
    %v1727 = vpop.xlane.xlu0 %1726
    %v1728 = vsel %vm1050, %v1706, 0.0
    %1729 = vadd.xlane.f32.xlu0 %v1728
    %v1730 = vpop.xlane.xlu0 %1729
    %v1731 = vrcp.pop %v1709
    %v1732 = vrcp.pop %v1712
    %v1733 = vrcp.pop %v1715
    %v1734 = vrcp.pop %v1718
    %v1735 = vrcp.pop %v1721
    %v1736 = vrcp.pop %v1724
    %v1737 = vrcp.pop %v1727
    %v1738 = vrcp.pop %v1730
    %v1739 = vmul.f32 %v1692, %v1731
    %v1740 = vmul.f32 %v1694, %v1732
    %v1741 = vmul.f32 %v1696, %v1733
    %v1742 = vmul.f32 %v1698, %v1734
    %v1743 = vmul.f32 %v1700, %v1735
    %v1744 = vmul.f32 %v1702, %v1736
    %v1745 = vmul.f32 %v1704, %v1737
    %v1746 = vmul.f32 %v1706, %v1738
    %v1748 = vsel %vm1050, %v1739, 0
    %1750 = vmatprep.subr.mxu0 0.0
    %1751 = vmatpush1.msra.mxu0 %v978
    %1752 = vmatprep.subr.mxu0 0.0
    %1753 = vmatpush1.msra.mxu0 0.0
    %1754 = vmatprep.subr.mxu0 0.0
    %1755 = vmatpush1.msra.mxu0 0.0
    %1756 = vmatprep.subr.mxu0 0.0
    %1757 = vmatpush1.msra.mxu0 0.0
    %1758 = vmatprep.subr.mxu0 0.0
    %1759 = vmatpush1.msra.mxu0 0.0
    %1760 = vmatprep.subr.mxu0 0.0
    %1761 = vmatpush1.msra.mxu0 0.0
    %1762 = vmatprep.subr.mxu0 0.0
    %1763 = vmatpush1.msra.mxu0 0.0
    %1764 = vmatprep.subr.mxu0 0.0
    %1765 = vmatpush1.msra.mxu0 0.0
    %1766 = vmatprep.subr.mxu0 0.0
    %1767 = vmatpush1.msra.mxu0 0.0
    %1768 = vmatprep.subr.mxu0 0.0
    %1769 = vmatpush1.msra.mxu0 0.0
    %1770 = vmatprep.subr.mxu0 0.0
    %1771 = vmatpush1.msra.mxu0 0.0
    %1772 = vmatprep.subr.mxu0 0.0
    %1773 = vmatpush1.msra.mxu0 0.0
    %1774 = vmatprep.subr.mxu0 0.0
    %1775 = vmatpush1.msra.mxu0 0.0
    %1776 = vmatprep.subr.mxu0 0.0
    %1777 = vmatpush1.msra.mxu0 0.0
    %1778 = vmatprep.subr.mxu0 0.0
    %1779 = vmatpush1.msra.mxu0 0.0
    %1780 = vmatprep.subr.mxu0 0.0
    %1781 = vmatpush1.msra.mxu0 0.0
    %1782 = vmatprep.subr.mxu0 0.0
    %1783 = vmatpush1.msra.mxu0 0.0
    %1784 = vmatprep.subr.mxu0 0.0
    %1785 = vmatpush1.msra.mxu0 0.0
    %1786 = vmatprep.subr.mxu0 0.0
    %1787 = vmatpush1.msra.mxu0 0.0
    %1788 = vmatprep.subr.mxu0 0.0
    %1789 = vmatpush1.msra.mxu0 0.0
    %1790 = vmatprep.subr.mxu0 0.0
    %1791 = vmatpush1.msra.mxu0 0.0
    %1792 = vmatprep.subr.mxu0 0.0
    %1793 = vmatpush1.msra.mxu0 0.0
    %1794 = vmatprep.subr.mxu0 0.0
    %1795 = vmatpush1.msra.mxu0 0.0
    %1796 = vmatprep.subr.mxu0 0.0
    %1797 = vmatpush1.msra.mxu0 0.0
    %1798 = vmatprep.subr.mxu0 0.0
    %1799 = vmatpush1.msra.mxu0 0.0
    %1800 = vmatprep.subr.mxu0 0.0
    %1801 = vmatpush1.msra.mxu0 0.0
    %1802 = vmatprep.subr.mxu0 0.0
    %1803 = vmatpush1.msra.mxu0 0.0
    %1804 = vmatprep.subr.mxu0 0.0
    %1805 = vmatpush1.msra.mxu0 0.0
    %1806 = vmatprep.subr.mxu0 0.0
    %1807 = vmatpush1.msra.mxu0 0.0
    %1808 = vmatprep.subr.mxu0 0.0
    %1809 = vmatpush1.msra.mxu0 0.0
    %1810 = vmatprep.subr.mxu0 0.0
    %1811 = vmatpush1.msra.mxu0 0.0
    %1812 = vmatprep.subr.mxu0 0.0
    %1813 = vmatpush1.msra.mxu0 0.0
    %1814 = vmatprep.mubr.f32.mxu0 0.0
    %1815 = vmatmul.mubr.f32.gmra.mrb[0].mxu0 %v1748
    %v1816 = vpop.f32.mrb[0].mxu0
    %v1817 = vadd.f32 0.0, %v1816
    %v1818 = vpop.f32.mrb[0].mxu0
    %1819 = vdwg.mxu0
    %v1821 = vsel %vm1050, %v1740, 0
    %1823 = vmatprep.subr.mxu0 0.0
    %1824 = vmatpush1.msra.mxu0 %v979
    %1825 = vmatprep.subr.mxu0 0.0
    %1826 = vmatpush1.msra.mxu0 0.0
    %1827 = vmatprep.subr.mxu0 0.0
    %1828 = vmatpush1.msra.mxu0 0.0
    %1829 = vmatprep.subr.mxu0 0.0
    %1830 = vmatpush1.msra.mxu0 0.0
    %1831 = vmatprep.subr.mxu0 0.0
    %1832 = vmatpush1.msra.mxu0 0.0
    %1833 = vmatprep.subr.mxu0 0.0
    %1834 = vmatpush1.msra.mxu0 0.0
    %1835 = vmatprep.subr.mxu0 0.0
    %1836 = vmatpush1.msra.mxu0 0.0
    %1837 = vmatprep.subr.mxu0 0.0
    %1838 = vmatpush1.msra.mxu0 0.0
    %1839 = vmatprep.subr.mxu0 0.0
    %1840 = vmatpush1.msra.mxu0 0.0
    %1841 = vmatprep.subr.mxu0 0.0
    %1842 = vmatpush1.msra.mxu0 0.0
    %1843 = vmatprep.subr.mxu0 0.0
    %1844 = vmatpush1.msra.mxu0 0.0
    %1845 = vmatprep.subr.mxu0 0.0
    %1846 = vmatpush1.msra.mxu0 0.0
    %1847 = vmatprep.subr.mxu0 0.0
    %1848 = vmatpush1.msra.mxu0 0.0
    %1849 = vmatprep.subr.mxu0 0.0
    %1850 = vmatpush1.msra.mxu0 0.0
    %1851 = vmatprep.subr.mxu0 0.0
    %1852 = vmatpush1.msra.mxu0 0.0
    %1853 = vmatprep.subr.mxu0 0.0
    %1854 = vmatpush1.msra.mxu0 0.0
    %1855 = vmatprep.subr.mxu0 0.0
    %1856 = vmatpush1.msra.mxu0 0.0
    %1857 = vmatprep.subr.mxu0 0.0
    %1858 = vmatpush1.msra.mxu0 0.0
    %1859 = vmatprep.subr.mxu0 0.0
    %1860 = vmatpush1.msra.mxu0 0.0
    %1861 = vmatprep.subr.mxu0 0.0
    %1862 = vmatpush1.msra.mxu0 0.0
    %1863 = vmatprep.subr.mxu0 0.0
    %1864 = vmatpush1.msra.mxu0 0.0
    %1865 = vmatprep.subr.mxu0 0.0
    %1866 = vmatpush1.msra.mxu0 0.0
    %1867 = vmatprep.subr.mxu0 0.0
    %1868 = vmatpush1.msra.mxu0 0.0
    %1869 = vmatprep.subr.mxu0 0.0
    %1870 = vmatpush1.msra.mxu0 0.0
    %1871 = vmatprep.subr.mxu0 0.0
    %1872 = vmatpush1.msra.mxu0 0.0
    %1873 = vmatprep.subr.mxu0 0.0
    %1874 = vmatpush1.msra.mxu0 0.0
    %1875 = vmatprep.subr.mxu0 0.0
    %1876 = vmatpush1.msra.mxu0 0.0
    %1877 = vmatprep.subr.mxu0 0.0
    %1878 = vmatpush1.msra.mxu0 0.0
    %1879 = vmatprep.subr.mxu0 0.0
    %1880 = vmatpush1.msra.mxu0 0.0
    %1881 = vmatprep.subr.mxu0 0.0
    %1882 = vmatpush1.msra.mxu0 0.0
    %1883 = vmatprep.subr.mxu0 0.0
    %1884 = vmatpush1.msra.mxu0 0.0
    %1885 = vmatprep.subr.mxu0 0.0
    %1886 = vmatpush1.msra.mxu0 0.0
    %1887 = vmatprep.mubr.f32.mxu0 0.0
    %1888 = vmatmul.mubr.f32.gmra.mrb[0].mxu0 %v1821
    %v1889 = vpop.f32.mrb[0].mxu0
    %v1890 = vadd.f32 0.0, %v1889
    %v1891 = vpop.f32.mrb[0].mxu0
    %1892 = vdwg.mxu0
    %v1894 = vsel %vm1050, %v1741, 0
    %1896 = vmatprep.subr.mxu0 0.0
    %1897 = vmatpush1.msra.mxu0 %v980
    %1898 = vmatprep.subr.mxu0 0.0
    %1899 = vmatpush1.msra.mxu0 0.0
    %1900 = vmatprep.subr.mxu0 0.0
    %1901 = vmatpush1.msra.mxu0 0.0
    %1902 = vmatprep.subr.mxu0 0.0
    %1903 = vmatpush1.msra.mxu0 0.0
    %1904 = vmatprep.subr.mxu0 0.0
    %1905 = vmatpush1.msra.mxu0 0.0
    %1906 = vmatprep.subr.mxu0 0.0
    %1907 = vmatpush1.msra.mxu0 0.0
    %1908 = vmatprep.subr.mxu0 0.0
    %1909 = vmatpush1.msra.mxu0 0.0
    %1910 = vmatprep.subr.mxu0 0.0
    %1911 = vmatpush1.msra.mxu0 0.0
    %1912 = vmatprep.subr.mxu0 0.0
    %1913 = vmatpush1.msra.mxu0 0.0
    %1914 = vmatprep.subr.mxu0 0.0
    %1915 = vmatpush1.msra.mxu0 0.0
    %1916 = vmatprep.subr.mxu0 0.0
    %1917 = vmatpush1.msra.mxu0 0.0
    %1918 = vmatprep.subr.mxu0 0.0
    %1919 = vmatpush1.msra.mxu0 0.0
    %1920 = vmatprep.subr.mxu0 0.0
    %1921 = vmatpush1.msra.mxu0 0.0
    %1922 = vmatprep.subr.mxu0 0.0
    %1923 = vmatpush1.msra.mxu0 0.0
    %1924 = vmatprep.subr.mxu0 0.0
    %1925 = vmatpush1.msra.mxu0 0.0
    %1926 = vmatprep.subr.mxu0 0.0
    %1927 = vmatpush1.msra.mxu0 0.0
    %1928 = vmatprep.subr.mxu0 0.0
    %1929 = vmatpush1.msra.mxu0 0.0
    %1930 = vmatprep.subr.mxu0 0.0
    %1931 = vmatpush1.msra.mxu0 0.0
    %1932 = vmatprep.subr.mxu0 0.0
    %1933 = vmatpush1.msra.mxu0 0.0
    %1934 = vmatprep.subr.mxu0 0.0
    %1935 = vmatpush1.msra.mxu0 0.0
    %1936 = vmatprep.subr.mxu0 0.0
    %1937 = vmatpush1.msra.mxu0 0.0
    %1938 = vmatprep.subr.mxu0 0.0
    %1939 = vmatpush1.msra.mxu0 0.0
    %1940 = vmatprep.subr.mxu0 0.0
    %1941 = vmatpush1.msra.mxu0 0.0
    %1942 = vmatprep.subr.mxu0 0.0
    %1943 = vmatpush1.msra.mxu0 0.0
    %1944 = vmatprep.subr.mxu0 0.0
    %1945 = vmatpush1.msra.mxu0 0.0
    %1946 = vmatprep.subr.mxu0 0.0
    %1947 = vmatpush1.msra.mxu0 0.0
    %1948 = vmatprep.subr.mxu0 0.0
    %1949 = vmatpush1.msra.mxu0 0.0
    %1950 = vmatprep.subr.mxu0 0.0
    %1951 = vmatpush1.msra.mxu0 0.0
    %1952 = vmatprep.subr.mxu0 0.0
    %1953 = vmatpush1.msra.mxu0 0.0
    %1954 = vmatprep.subr.mxu0 0.0
    %1955 = vmatpush1.msra.mxu0 0.0
    %1956 = vmatprep.subr.mxu0 0.0
    %1957 = vmatpush1.msra.mxu0 0.0
    %1958 = vmatprep.subr.mxu0 0.0
    %1959 = vmatpush1.msra.mxu0 0.0
    %1960 = vmatprep.mubr.f32.mxu0 0.0
    %1961 = vmatmul.mubr.f32.gmra.mrb[0].mxu0 %v1894
    %v1962 = vpop.f32.mrb[0].mxu0
    %v1963 = vadd.f32 0.0, %v1962
    %v1964 = vpop.f32.mrb[0].mxu0
    %1965 = vdwg.mxu0
    %v1967 = vsel %vm1050, %v1742, 0
    %1969 = vmatprep.subr.mxu0 0.0
    %1970 = vmatpush1.msra.mxu0 %v981
    %1971 = vmatprep.subr.mxu0 0.0
    %1972 = vmatpush1.msra.mxu0 0.0
    %1973 = vmatprep.subr.mxu0 0.0
    %1974 = vmatpush1.msra.mxu0 0.0
    %1975 = vmatprep.subr.mxu0 0.0
    %1976 = vmatpush1.msra.mxu0 0.0
    %1977 = vmatprep.subr.mxu0 0.0
    %1978 = vmatpush1.msra.mxu0 0.0
    %1979 = vmatprep.subr.mxu0 0.0
    %1980 = vmatpush1.msra.mxu0 0.0
    %1981 = vmatprep.subr.mxu0 0.0
    %1982 = vmatpush1.msra.mxu0 0.0
    %1983 = vmatprep.subr.mxu0 0.0
    %1984 = vmatpush1.msra.mxu0 0.0
    %1985 = vmatprep.subr.mxu0 0.0
    %1986 = vmatpush1.msra.mxu0 0.0
    %1987 = vmatprep.subr.mxu0 0.0
    %1988 = vmatpush1.msra.mxu0 0.0
    %1989 = vmatprep.subr.mxu0 0.0
    %1990 = vmatpush1.msra.mxu0 0.0
    %1991 = vmatprep.subr.mxu0 0.0
    %1992 = vmatpush1.msra.mxu0 0.0
    %1993 = vmatprep.subr.mxu0 0.0
    %1994 = vmatpush1.msra.mxu0 0.0
    %1995 = vmatprep.subr.mxu0 0.0
    %1996 = vmatpush1.msra.mxu0 0.0
    %1997 = vmatprep.subr.mxu0 0.0
    %1998 = vmatpush1.msra.mxu0 0.0
    %1999 = vmatprep.subr.mxu0 0.0
    %2000 = vmatpush1.msra.mxu0 0.0
    %2001 = vmatprep.subr.mxu0 0.0
    %2002 = vmatpush1.msra.mxu0 0.0
    %2003 = vmatprep.subr.mxu0 0.0
    %2004 = vmatpush1.msra.mxu0 0.0
    %2005 = vmatprep.subr.mxu0 0.0
    %2006 = vmatpush1.msra.mxu0 0.0
    %2007 = vmatprep.subr.mxu0 0.0
    %2008 = vmatpush1.msra.mxu0 0.0
    %2009 = vmatprep.subr.mxu0 0.0
    %2010 = vmatpush1.msra.mxu0 0.0
    %2011 = vmatprep.subr.mxu0 0.0
    %2012 = vmatpush1.msra.mxu0 0.0
    %2013 = vmatprep.subr.mxu0 0.0
    %2014 = vmatpush1.msra.mxu0 0.0
    %2015 = vmatprep.subr.mxu0 0.0
    %2016 = vmatpush1.msra.mxu0 0.0
    %2017 = vmatprep.subr.mxu0 0.0
    %2018 = vmatpush1.msra.mxu0 0.0
    %2019 = vmatprep.subr.mxu0 0.0
    %2020 = vmatpush1.msra.mxu0 0.0
    %2021 = vmatprep.subr.mxu0 0.0
    %2022 = vmatpush1.msra.mxu0 0.0
    %2023 = vmatprep.subr.mxu0 0.0
    %2024 = vmatpush1.msra.mxu0 0.0
    %2025 = vmatprep.subr.mxu0 0.0
    %2026 = vmatpush1.msra.mxu0 0.0
    %2027 = vmatprep.subr.mxu0 0.0
    %2028 = vmatpush1.msra.mxu0 0.0
    %2029 = vmatprep.subr.mxu0 0.0
    %2030 = vmatpush1.msra.mxu0 0.0
    %2031 = vmatprep.subr.mxu0 0.0
    %2032 = vmatpush1.msra.mxu0 0.0
    %2033 = vmatprep.mubr.f32.mxu0 0.0
    %2034 = vmatmul.mubr.f32.gmra.mrb[0].mxu0 %v1967
    %v2035 = vpop.f32.mrb[0].mxu0
    %v2036 = vadd.f32 0.0, %v2035
    %v2037 = vpop.f32.mrb[0].mxu0
    %2038 = vdwg.mxu0
    %v2040 = vsel %vm1050, %v1743, 0
    %2042 = vmatprep.subr.mxu0 0.0
    %2043 = vmatpush1.msra.mxu0 %v1046
    %2044 = vmatprep.subr.mxu0 0.0
    %2045 = vmatpush1.msra.mxu0 0.0
    %2046 = vmatprep.subr.mxu0 0.0
    %2047 = vmatpush1.msra.mxu0 0.0
    %2048 = vmatprep.subr.mxu0 0.0
    %2049 = vmatpush1.msra.mxu0 0.0
    %2050 = vmatprep.subr.mxu0 0.0
    %2051 = vmatpush1.msra.mxu0 0.0
    %2052 = vmatprep.subr.mxu0 0.0
    %2053 = vmatpush1.msra.mxu0 0.0
    %2054 = vmatprep.subr.mxu0 0.0
    %2055 = vmatpush1.msra.mxu0 0.0
    %2056 = vmatprep.subr.mxu0 0.0
    %2057 = vmatpush1.msra.mxu0 0.0
    %2058 = vmatprep.subr.mxu0 0.0
    %2059 = vmatpush1.msra.mxu0 0.0
    %2060 = vmatprep.subr.mxu0 0.0
    %2061 = vmatpush1.msra.mxu0 0.0
    %2062 = vmatprep.subr.mxu0 0.0
    %2063 = vmatpush1.msra.mxu0 0.0
    %2064 = vmatprep.subr.mxu0 0.0
    %2065 = vmatpush1.msra.mxu0 0.0
    %2066 = vmatprep.subr.mxu0 0.0
    %2067 = vmatpush1.msra.mxu0 0.0
    %2068 = vmatprep.subr.mxu0 0.0
    %2069 = vmatpush1.msra.mxu0 0.0
    %2070 = vmatprep.subr.mxu0 0.0
    %2071 = vmatpush1.msra.mxu0 0.0
    %2072 = vmatprep.subr.mxu0 0.0
    %2073 = vmatpush1.msra.mxu0 0.0
    %2074 = vmatprep.subr.mxu0 0.0
    %2075 = vmatpush1.msra.mxu0 0.0
    %2076 = vmatprep.subr.mxu0 0.0
    %2077 = vmatpush1.msra.mxu0 0.0
    %2078 = vmatprep.subr.mxu0 0.0
    %2079 = vmatpush1.msra.mxu0 0.0
    %2080 = vmatprep.subr.mxu0 0.0
    %2081 = vmatpush1.msra.mxu0 0.0
    %2082 = vmatprep.subr.mxu0 0.0
    %2083 = vmatpush1.msra.mxu0 0.0
    %2084 = vmatprep.subr.mxu0 0.0
    %2085 = vmatpush1.msra.mxu0 0.0
    %2086 = vmatprep.subr.mxu0 0.0
    %2087 = vmatpush1.msra.mxu0 0.0
    %2088 = vmatprep.subr.mxu0 0.0
    %2089 = vmatpush1.msra.mxu0 0.0
    %2090 = vmatprep.subr.mxu0 0.0
    %2091 = vmatpush1.msra.mxu0 0.0
    %2092 = vmatprep.subr.mxu0 0.0
    %2093 = vmatpush1.msra.mxu0 0.0
    %2094 = vmatprep.subr.mxu0 0.0
    %2095 = vmatpush1.msra.mxu0 0.0
    %2096 = vmatprep.subr.mxu0 0.0
    %2097 = vmatpush1.msra.mxu0 0.0
    %2098 = vmatprep.subr.mxu0 0.0
    %2099 = vmatpush1.msra.mxu0 0.0
    %2100 = vmatprep.subr.mxu0 0.0
    %2101 = vmatpush1.msra.mxu0 0.0
    %2102 = vmatprep.subr.mxu0 0.0
    %2103 = vmatpush1.msra.mxu0 0.0
    %2104 = vmatprep.subr.mxu0 0.0
    %2105 = vmatpush1.msra.mxu0 0.0
    %2106 = vmatprep.mubr.f32.mxu0 0.0
    %2107 = vmatmul.mubr.f32.gmra.mrb[0].mxu0 %v2040
    %v2108 = vpop.f32.mrb[0].mxu0
    %v2109 = vadd.f32 0.0, %v2108
    %v2110 = vpop.f32.mrb[0].mxu0
    %2111 = vdwg.mxu0
    %v2113 = vsel %vm1050, %v1744, 0
    %2115 = vmatprep.subr.mxu0 0.0
    %2116 = vmatpush1.msra.mxu0 %v1047
    %2117 = vmatprep.subr.mxu0 0.0
    %2118 = vmatpush1.msra.mxu0 0.0
    %2119 = vmatprep.subr.mxu0 0.0
    %2120 = vmatpush1.msra.mxu0 0.0
    %2121 = vmatprep.subr.mxu0 0.0
    %2122 = vmatpush1.msra.mxu0 0.0
    %2123 = vmatprep.subr.mxu0 0.0
    %2124 = vmatpush1.msra.mxu0 0.0
    %2125 = vmatprep.subr.mxu0 0.0
    %2126 = vmatpush1.msra.mxu0 0.0
    %2127 = vmatprep.subr.mxu0 0.0
    %2128 = vmatpush1.msra.mxu0 0.0
    %2129 = vmatprep.subr.mxu0 0.0
    %2130 = vmatpush1.msra.mxu0 0.0
    %2131 = vmatprep.subr.mxu0 0.0
    %2132 = vmatpush1.msra.mxu0 0.0
    %2133 = vmatprep.subr.mxu0 0.0
    %2134 = vmatpush1.msra.mxu0 0.0
    %2135 = vmatprep.subr.mxu0 0.0
    %2136 = vmatpush1.msra.mxu0 0.0
    %2137 = vmatprep.subr.mxu0 0.0
    %2138 = vmatpush1.msra.mxu0 0.0
    %2139 = vmatprep.subr.mxu0 0.0
    %2140 = vmatpush1.msra.mxu0 0.0
    %2141 = vmatprep.subr.mxu0 0.0
    %2142 = vmatpush1.msra.mxu0 0.0
    %2143 = vmatprep.subr.mxu0 0.0
    %2144 = vmatpush1.msra.mxu0 0.0
    %2145 = vmatprep.subr.mxu0 0.0
    %2146 = vmatpush1.msra.mxu0 0.0
    %2147 = vmatprep.subr.mxu0 0.0
    %2148 = vmatpush1.msra.mxu0 0.0
    %2149 = vmatprep.subr.mxu0 0.0
    %2150 = vmatpush1.msra.mxu0 0.0
    %2151 = vmatprep.subr.mxu0 0.0
    %2152 = vmatpush1.msra.mxu0 0.0
    %2153 = vmatprep.subr.mxu0 0.0
    %2154 = vmatpush1.msra.mxu0 0.0
    %2155 = vmatprep.subr.mxu0 0.0
    %2156 = vmatpush1.msra.mxu0 0.0
    %2157 = vmatprep.subr.mxu0 0.0
    %2158 = vmatpush1.msra.mxu0 0.0
    %2159 = vmatprep.subr.mxu0 0.0
    %2160 = vmatpush1.msra.mxu0 0.0
    %2161 = vmatprep.subr.mxu0 0.0
    %2162 = vmatpush1.msra.mxu0 0.0
    %2163 = vmatprep.subr.mxu0 0.0
    %2164 = vmatpush1.msra.mxu0 0.0
    %2165 = vmatprep.subr.mxu0 0.0
    %2166 = vmatpush1.msra.mxu0 0.0
    %2167 = vmatprep.subr.mxu0 0.0
    %2168 = vmatpush1.msra.mxu0 0.0
    %2169 = vmatprep.subr.mxu0 0.0
    %2170 = vmatpush1.msra.mxu0 0.0
    %2171 = vmatprep.subr.mxu0 0.0
    %2172 = vmatpush1.msra.mxu0 0.0
    %2173 = vmatprep.subr.mxu0 0.0
    %2174 = vmatpush1.msra.mxu0 0.0
    %2175 = vmatprep.subr.mxu0 0.0
    %2176 = vmatpush1.msra.mxu0 0.0
    %2177 = vmatprep.subr.mxu0 0.0
    %2178 = vmatpush1.msra.mxu0 0.0
    %2179 = vmatprep.mubr.f32.mxu0 0.0
    %2180 = vmatmul.mubr.f32.gmra.mrb[0].mxu0 %v2113
    %v2181 = vpop.f32.mrb[0].mxu0
    %v2182 = vadd.f32 0.0, %v2181
    %v2183 = vpop.f32.mrb[0].mxu0
    %2184 = vdwg.mxu0
    %v2186 = vsel %vm1050, %v1745, 0
    %2188 = vmatprep.subr.mxu0 0.0
    %2189 = vmatpush1.msra.mxu0 %v1048
    %2190 = vmatprep.subr.mxu0 0.0
    %2191 = vmatpush1.msra.mxu0 0.0
    %2192 = vmatprep.subr.mxu0 0.0
    %2193 = vmatpush1.msra.mxu0 0.0
    %2194 = vmatprep.subr.mxu0 0.0
    %2195 = vmatpush1.msra.mxu0 0.0
    %2196 = vmatprep.subr.mxu0 0.0
    %2197 = vmatpush1.msra.mxu0 0.0
    %2198 = vmatprep.subr.mxu0 0.0
    %2199 = vmatpush1.msra.mxu0 0.0
    %2200 = vmatprep.subr.mxu0 0.0
    %2201 = vmatpush1.msra.mxu0 0.0
    %2202 = vmatprep.subr.mxu0 0.0
    %2203 = vmatpush1.msra.mxu0 0.0
    %2204 = vmatprep.subr.mxu0 0.0
    %2205 = vmatpush1.msra.mxu0 0.0
    %2206 = vmatprep.subr.mxu0 0.0
    %2207 = vmatpush1.msra.mxu0 0.0
    %2208 = vmatprep.subr.mxu0 0.0
    %2209 = vmatpush1.msra.mxu0 0.0
    %2210 = vmatprep.subr.mxu0 0.0
    %2211 = vmatpush1.msra.mxu0 0.0
    %2212 = vmatprep.subr.mxu0 0.0
    %2213 = vmatpush1.msra.mxu0 0.0
    %2214 = vmatprep.subr.mxu0 0.0
    %2215 = vmatpush1.msra.mxu0 0.0
    %2216 = vmatprep.subr.mxu0 0.0
    %2217 = vmatpush1.msra.mxu0 0.0
    %2218 = vmatprep.subr.mxu0 0.0
    %2219 = vmatpush1.msra.mxu0 0.0
    %2220 = vmatprep.subr.mxu0 0.0
    %2221 = vmatpush1.msra.mxu0 0.0
    %2222 = vmatprep.subr.mxu0 0.0
    %2223 = vmatpush1.msra.mxu0 0.0
    %2224 = vmatprep.subr.mxu0 0.0
    %2225 = vmatpush1.msra.mxu0 0.0
    %2226 = vmatprep.subr.mxu0 0.0
    %2227 = vmatpush1.msra.mxu0 0.0
    %2228 = vmatprep.subr.mxu0 0.0
    %2229 = vmatpush1.msra.mxu0 0.0
    %2230 = vmatprep.subr.mxu0 0.0
    %2231 = vmatpush1.msra.mxu0 0.0
    %2232 = vmatprep.subr.mxu0 0.0
    %2233 = vmatpush1.msra.mxu0 0.0
    %2234 = vmatprep.subr.mxu0 0.0
    %2235 = vmatpush1.msra.mxu0 0.0
    %2236 = vmatprep.subr.mxu0 0.0
    %2237 = vmatpush1.msra.mxu0 0.0
    %2238 = vmatprep.subr.mxu0 0.0
    %2239 = vmatpush1.msra.mxu0 0.0
    %2240 = vmatprep.subr.mxu0 0.0
    %2241 = vmatpush1.msra.mxu0 0.0
    %2242 = vmatprep.subr.mxu0 0.0
    %2243 = vmatpush1.msra.mxu0 0.0
    %2244 = vmatprep.subr.mxu0 0.0
    %2245 = vmatpush1.msra.mxu0 0.0
    %2246 = vmatprep.subr.mxu0 0.0
    %2247 = vmatpush1.msra.mxu0 0.0
    %2248 = vmatprep.subr.mxu0 0.0
    %2249 = vmatpush1.msra.mxu0 0.0
    %2250 = vmatprep.subr.mxu0 0.0
    %2251 = vmatpush1.msra.mxu0 0.0
    %2252 = vmatprep.mubr.f32.mxu0 0.0
    %2253 = vmatmul.mubr.f32.gmra.mrb[0].mxu0 %v2186
    %v2254 = vpop.f32.mrb[0].mxu0
    %v2255 = vadd.f32 0.0, %v2254
    %v2256 = vpop.f32.mrb[0].mxu0
    %2257 = vdwg.mxu0
    %v2259 = vsel %vm1050, %v1746, 0
    %2261 = vmatprep.subr.mxu0 0.0
    %2262 = vmatpush1.msra.mxu0 %v1049
    %2263 = vmatprep.subr.mxu0 0.0
    %2264 = vmatpush1.msra.mxu0 0.0
    %2265 = vmatprep.subr.mxu0 0.0
    %2266 = vmatpush1.msra.mxu0 0.0
    %2267 = vmatprep.subr.mxu0 0.0
    %2268 = vmatpush1.msra.mxu0 0.0
    %2269 = vmatprep.subr.mxu0 0.0
    %2270 = vmatpush1.msra.mxu0 0.0
    %2271 = vmatprep.subr.mxu0 0.0
    %2272 = vmatpush1.msra.mxu0 0.0
    %2273 = vmatprep.subr.mxu0 0.0
    %2274 = vmatpush1.msra.mxu0 0.0
    %2275 = vmatprep.subr.mxu0 0.0
    %2276 = vmatpush1.msra.mxu0 0.0
    %2277 = vmatprep.subr.mxu0 0.0
    %2278 = vmatpush1.msra.mxu0 0.0
    %2279 = vmatprep.subr.mxu0 0.0
    %2280 = vmatpush1.msra.mxu0 0.0
    %2281 = vmatprep.subr.mxu0 0.0
    %2282 = vmatpush1.msra.mxu0 0.0
    %2283 = vmatprep.subr.mxu0 0.0
    %2284 = vmatpush1.msra.mxu0 0.0
    %2285 = vmatprep.subr.mxu0 0.0
    %2286 = vmatpush1.msra.mxu0 0.0
    %2287 = vmatprep.subr.mxu0 0.0
    %2288 = vmatpush1.msra.mxu0 0.0
    %2289 = vmatprep.subr.mxu0 0.0
    %2290 = vmatpush1.msra.mxu0 0.0
    %2291 = vmatprep.subr.mxu0 0.0
    %2292 = vmatpush1.msra.mxu0 0.0
    %2293 = vmatprep.subr.mxu0 0.0
    %2294 = vmatpush1.msra.mxu0 0.0
    %2295 = vmatprep.subr.mxu0 0.0
    %2296 = vmatpush1.msra.mxu0 0.0
    %2297 = vmatprep.subr.mxu0 0.0
    %2298 = vmatpush1.msra.mxu0 0.0
    %2299 = vmatprep.subr.mxu0 0.0
    %2300 = vmatpush1.msra.mxu0 0.0
    %2301 = vmatprep.subr.mxu0 0.0
    %2302 = vmatpush1.msra.mxu0 0.0
    %2303 = vmatprep.subr.mxu0 0.0
    %2304 = vmatpush1.msra.mxu0 0.0
    %2305 = vmatprep.subr.mxu0 0.0
    %2306 = vmatpush1.msra.mxu0 0.0
    %2307 = vmatprep.subr.mxu0 0.0
    %2308 = vmatpush1.msra.mxu0 0.0
    %2309 = vmatprep.subr.mxu0 0.0
    %2310 = vmatpush1.msra.mxu0 0.0
    %2311 = vmatprep.subr.mxu0 0.0
    %2312 = vmatpush1.msra.mxu0 0.0
    %2313 = vmatprep.subr.mxu0 0.0
    %2314 = vmatpush1.msra.mxu0 0.0
    %2315 = vmatprep.subr.mxu0 0.0
    %2316 = vmatpush1.msra.mxu0 0.0
    %2317 = vmatprep.subr.mxu0 0.0
    %2318 = vmatpush1.msra.mxu0 0.0
    %2319 = vmatprep.subr.mxu0 0.0
    %2320 = vmatpush1.msra.mxu0 0.0
    %2321 = vmatprep.subr.mxu0 0.0
    %2322 = vmatpush1.msra.mxu0 0.0
    %2323 = vmatprep.subr.mxu0 0.0
    %2324 = vmatpush1.msra.mxu0 0.0
    %2325 = vmatprep.mubr.f32.mxu0 0.0
    %2326 = vmatmul.mubr.f32.gmra.mrb[0].mxu0 %v2259
    %v2327 = vpop.f32.mrb[0].mxu0
    %v2328 = vadd.f32 0.0, %v2327
    %v2329 = vpop.f32.mrb[0].mxu0
    %2330 = vdwg.mxu0
    %v2331 = vcombine.low %v1817, %v1963
    %v2332 = vcombine.high %v1817, %v1963
    %v2334 = vunpack.c.l.s4 1983009808
    %v2335 = vunpack.c.0.s8 %v2334
    %v2336 = vlaneseq
    %v2337 = vshrl.u32 %v2336, 7
    %v2338 = vsub.s32 %v2335, %v2337
    %v2339 = vrot.slane %v2331, %v2338
    %v2341 = vunpack.c.l.s4 1983009808
    %v2342 = vunpack.c.0.s8 %v2341
    %v2343 = vlaneseq
    %v2344 = vshrl.u32 %v2343, 7
    %v2345 = vsub.s32 %v2342, %v2344
    %v2346 = vrot.slane %v2332, %v2345
    %v2347 = vcombine.low %v1890, %v2036
    %v2348 = vcombine.high %v1890, %v2036
    %v2350 = vunpack.c.l.s4 1983009808
    %v2351 = vunpack.c.0.s8 %v2350
    %v2352 = vlaneseq
    %v2353 = vshrl.u32 %v2352, 7
    %v2354 = vsub.s32 %v2351, %v2353
    %v2355 = vrot.slane %v2347, %v2354
    %v2357 = vunpack.c.l.s4 1983009808
    %v2358 = vunpack.c.0.s8 %v2357
    %v2359 = vlaneseq
    %v2360 = vshrl.u32 %v2359, 7
    %v2361 = vsub.s32 %v2358, %v2360
    %v2362 = vrot.slane %v2348, %v2361
    %v2363 = vcombine.low %v2339, %v2355
    %v2364 = vcombine.high %v2339, %v2355
    %v2366 = vunpack.c.l.s4 1934713408
    %v2367 = vunpack.c.0.s8 %v2366
    %v2368 = vlaneseq
    %v2369 = vshrl.u32 %v2368, 7
    %v2370 = vsub.s32 %v2367, %v2369
    %v2371 = vrot.slane %v2363, %v2370
    %v2373 = vunpack.c.l.s4 1934713408
    %v2374 = vunpack.c.0.s8 %v2373
    %v2375 = vlaneseq
    %v2376 = vshrl.u32 %v2375, 7
    %v2377 = vsub.s32 %v2374, %v2376
    %v2378 = vrot.slane %v2364, %v2377
    %v2379 = vcombine.low %v2346, %v2362
    %v2380 = vcombine.high %v2346, %v2362
    %v2382 = vunpack.c.l.s4 1934713408
    %v2383 = vunpack.c.0.s8 %v2382
    %v2384 = vlaneseq
    %v2385 = vshrl.u32 %v2384, 7
    %v2386 = vsub.s32 %v2383, %v2385
    %v2387 = vrot.slane %v2379, %v2386
    %v2389 = vunpack.c.l.s4 1934713408
    %v2390 = vunpack.c.0.s8 %v2389
    %v2391 = vlaneseq
    %v2392 = vshrl.u32 %v2391, 7
    %v2393 = vsub.s32 %v2390, %v2392
    %v2394 = vrot.slane %v2380, %v2393
    %v2395 = vcombine.high %v2371, 0.0
    %v2396 = vcombine.high %v2378, 0.0
    %v2397 = vcombine.high %v2387, 0.0
    %v2398 = vcombine.high %v2394, 0.0
    %v2399 = vcombine.low %v2109, %v2255
    %v2400 = vcombine.high %v2109, %v2255
    %v2402 = vunpack.c.l.s4 1983009808
    %v2403 = vunpack.c.0.s8 %v2402
    %v2404 = vlaneseq
    %v2405 = vshrl.u32 %v2404, 7
    %v2406 = vsub.s32 %v2403, %v2405
    %v2407 = vrot.slane %v2399, %v2406
    %v2409 = vunpack.c.l.s4 1983009808
    %v2410 = vunpack.c.0.s8 %v2409
    %v2411 = vlaneseq
    %v2412 = vshrl.u32 %v2411, 7
    %v2413 = vsub.s32 %v2410, %v2412
    %v2414 = vrot.slane %v2400, %v2413
    %v2415 = vcombine.low %v2182, %v2328
    %v2416 = vcombine.high %v2182, %v2328
    %v2418 = vunpack.c.l.s4 1983009808
    %v2419 = vunpack.c.0.s8 %v2418
    %v2420 = vlaneseq
    %v2421 = vshrl.u32 %v2420, 7
    %v2422 = vsub.s32 %v2419, %v2421
    %v2423 = vrot.slane %v2415, %v2422
    %v2425 = vunpack.c.l.s4 1983009808
    %v2426 = vunpack.c.0.s8 %v2425
    %v2427 = vlaneseq
    %v2428 = vshrl.u32 %v2427, 7
    %v2429 = vsub.s32 %v2426, %v2428
    %v2430 = vrot.slane %v2416, %v2429
    %v2431 = vcombine.low %v2407, %v2423
    %v2432 = vcombine.high %v2407, %v2423
    %v2434 = vunpack.c.l.s4 1934713408
    %v2435 = vunpack.c.0.s8 %v2434
    %v2436 = vlaneseq
    %v2437 = vshrl.u32 %v2436, 7
    %v2438 = vsub.s32 %v2435, %v2437
    %v2439 = vrot.slane %v2431, %v2438
    %v2441 = vunpack.c.l.s4 1934713408
    %v2442 = vunpack.c.0.s8 %v2441
    %v2443 = vlaneseq
    %v2444 = vshrl.u32 %v2443, 7
    %v2445 = vsub.s32 %v2442, %v2444
    %v2446 = vrot.slane %v2432, %v2445
    %v2447 = vcombine.low %v2414, %v2430
    %v2448 = vcombine.high %v2414, %v2430
    %v2450 = vunpack.c.l.s4 1934713408
    %v2451 = vunpack.c.0.s8 %v2450
    %v2452 = vlaneseq
    %v2453 = vshrl.u32 %v2452, 7
    %v2454 = vsub.s32 %v2451, %v2453
    %v2455 = vrot.slane %v2447, %v2454
    %v2457 = vunpack.c.l.s4 1934713408
    %v2458 = vunpack.c.0.s8 %v2457
    %v2459 = vlaneseq
    %v2460 = vshrl.u32 %v2459, 7
    %v2461 = vsub.s32 %v2458, %v2460
    %v2462 = vrot.slane %v2448, %v2461
    %v2463 = vcombine.high %v2439, 0.0
    %v2464 = vcombine.high %v2446, 0.0
    %v2465 = vcombine.high %v2455, 0.0
    %v2466 = vcombine.high %v2462, 0.0
    %v2467 = vcombine.low %v2371, %v2378
    %v2469 = vunpack.c.l.s4 1983009808
    %v2470 = vunpack.c.0.s8 %v2469
    %v2471 = vlaneseq
    %v2472 = vshrl.u32 %v2471, 7
    %v2473 = vsub.s32 %v2470, %v2472
    %v2474 = vrot.slane %v2467, %v2473
    %v2475 = vcombine.low %v2395, %v2396
    %v2477 = vunpack.c.l.s4 1983009808
    %v2478 = vunpack.c.0.s8 %v2477
    %v2479 = vlaneseq
    %v2480 = vshrl.u32 %v2479, 7
    %v2481 = vsub.s32 %v2478, %v2480
    %v2482 = vrot.slane %v2475, %v2481
    %v2483 = vcombine.low %v2387, %v2394
    %v2485 = vunpack.c.l.s4 1983009808
    %v2486 = vunpack.c.0.s8 %v2485
    %v2487 = vlaneseq
    %v2488 = vshrl.u32 %v2487, 7
    %v2489 = vsub.s32 %v2486, %v2488
    %v2490 = vrot.slane %v2483, %v2489
    %v2491 = vcombine.low %v2397, %v2398
    %v2493 = vunpack.c.l.s4 1983009808
    %v2494 = vunpack.c.0.s8 %v2493
    %v2495 = vlaneseq
    %v2496 = vshrl.u32 %v2495, 7
    %v2497 = vsub.s32 %v2494, %v2496
    %v2498 = vrot.slane %v2491, %v2497
    %v2499 = vcombine.low %v2474, %v2482
    %v2500 = vcombine.high %v2474, %v2482
    %v2502 = vunpack.c.l.s4 1934713408
    %v2503 = vunpack.c.0.s8 %v2502
    %v2504 = vlaneseq
    %v2505 = vshrl.u32 %v2504, 7
    %v2506 = vsub.s32 %v2503, %v2505
    %v2507 = vrot.slane %v2499, %v2506
    %v2509 = vunpack.c.l.s4 1934713408
    %v2510 = vunpack.c.0.s8 %v2509
    %v2511 = vlaneseq
    %v2512 = vshrl.u32 %v2511, 7
    %v2513 = vsub.s32 %v2510, %v2512
    %v2514 = vrot.slane %v2500, %v2513
    %v2515 = vcombine.low %v2490, %v2498
    %v2516 = vcombine.high %v2490, %v2498
    %v2518 = vunpack.c.l.s4 1934713408
    %v2519 = vunpack.c.0.s8 %v2518
    %v2520 = vlaneseq
    %v2521 = vshrl.u32 %v2520, 7
    %v2522 = vsub.s32 %v2519, %v2521
    %v2523 = vrot.slane %v2515, %v2522
    %v2525 = vunpack.c.l.s4 1934713408
    %v2526 = vunpack.c.0.s8 %v2525
    %v2527 = vlaneseq
    %v2528 = vshrl.u32 %v2527, 7
    %v2529 = vsub.s32 %v2526, %v2528
    %v2530 = vrot.slane %v2516, %v2529
    %v2531 = vcombine.low %v2507, %v2523
    %v2532 = vcombine.high %v2507, %v2523
    %v2533 = vcombine.low %v2514, %v2530
    %v2534 = vcombine.high %v2514, %v2530
    %v2535 = vcombine.low %v2439, %v2446
    %v2537 = vunpack.c.l.s4 1983009808
    %v2538 = vunpack.c.0.s8 %v2537
    %v2539 = vlaneseq
    %v2540 = vshrl.u32 %v2539, 7
    %v2541 = vsub.s32 %v2538, %v2540
    %v2542 = vrot.slane %v2535, %v2541
    %v2543 = vcombine.low %v2463, %v2464
    %v2545 = vunpack.c.l.s4 1983009808
    %v2546 = vunpack.c.0.s8 %v2545
    %v2547 = vlaneseq
    %v2548 = vshrl.u32 %v2547, 7
    %v2549 = vsub.s32 %v2546, %v2548
    %v2550 = vrot.slane %v2543, %v2549
    %v2551 = vcombine.low %v2455, %v2462
    %v2553 = vunpack.c.l.s4 1983009808
    %v2554 = vunpack.c.0.s8 %v2553
    %v2555 = vlaneseq
    %v2556 = vshrl.u32 %v2555, 7
    %v2557 = vsub.s32 %v2554, %v2556
    %v2558 = vrot.slane %v2551, %v2557
    %v2559 = vcombine.low %v2465, %v2466
    %v2561 = vunpack.c.l.s4 1983009808
    %v2562 = vunpack.c.0.s8 %v2561
    %v2563 = vlaneseq
    %v2564 = vshrl.u32 %v2563, 7
    %v2565 = vsub.s32 %v2562, %v2564
    %v2566 = vrot.slane %v2559, %v2565
    %v2567 = vcombine.low %v2542, %v2550
    %v2568 = vcombine.high %v2542, %v2550
    %v2570 = vunpack.c.l.s4 1934713408
    %v2571 = vunpack.c.0.s8 %v2570
    %v2572 = vlaneseq
    %v2573 = vshrl.u32 %v2572, 7
    %v2574 = vsub.s32 %v2571, %v2573
    %v2575 = vrot.slane %v2567, %v2574
    %v2577 = vunpack.c.l.s4 1934713408
    %v2578 = vunpack.c.0.s8 %v2577
    %v2579 = vlaneseq
    %v2580 = vshrl.u32 %v2579, 7
    %v2581 = vsub.s32 %v2578, %v2580
    %v2582 = vrot.slane %v2568, %v2581
    %v2583 = vcombine.low %v2558, %v2566
    %v2584 = vcombine.high %v2558, %v2566
    %v2586 = vunpack.c.l.s4 1934713408
    %v2587 = vunpack.c.0.s8 %v2586
    %v2588 = vlaneseq
    %v2589 = vshrl.u32 %v2588, 7
    %v2590 = vsub.s32 %v2587, %v2589
    %v2591 = vrot.slane %v2583, %v2590
    %v2593 = vunpack.c.l.s4 1934713408
    %v2594 = vunpack.c.0.s8 %v2593
    %v2595 = vlaneseq
    %v2596 = vshrl.u32 %v2595, 7
    %v2597 = vsub.s32 %v2594, %v2596
    %v2598 = vrot.slane %v2584, %v2597
    %v2599 = vcombine.low %v2575, %v2591
    %v2600 = vcombine.high %v2575, %v2591
    %v2601 = vcombine.low %v2582, %v2598
    %v2602 = vcombine.high %v2582, %v2598
    %2605 = vrot.lane.b32.xlu0 %v2532, 8
    %v2606 = vpop.permute.xlu0 %2605
    %2607 = vrot.lane.b32.xlu0 %v2600, 8
    %v2608 = vpop.permute.xlu0 %2607
    %2613 = vrot.lane.b32.xlu0 %v2533, 16
    %v2614 = vpop.permute.xlu0 %2613
    %2615 = vrot.lane.b32.xlu0 %v2601, 16
    %v2616 = vpop.permute.xlu0 %2615
    %2621 = vrot.lane.b32.xlu0 %v2534, 24
    %v2622 = vpop.permute.xlu0 %2621
    %2623 = vrot.lane.b32.xlu0 %v2602, 24
    %v2624 = vpop.permute.xlu0 %2623
    %v2627 = vsel %vm1050, %v2531, %v2606
    %v2628 = vsel %vm1050, %v2599, %v2608
    %vm2629 = vcmask 130048
    %v2630 = vsel %vm2629, %v2627, %v2614
    %v2631 = vsel %vm2629, %v2628, %v2616
    %vm2632 = vcmask 195584
    %v2633 = vsel %vm2632, %v2630, %v2622
    %v2634 = vsel %vm2632, %v2631, %v2624
    %v2635 = vpack.c.bf16 %v2634, %v2633
    %v2636 = vld [vmem:[#allocation5 + $0x10] sm:$0xf]
    %v2637 = vld [vmem:[#allocation5 + $0x14] sm:$0xf]
    %v2638 = vld [vmem:[#allocation5 + $0x18] sm:$0xf]
    %v2639 = vld [vmem:[#allocation5 + $0x1c] sm:$0xf]
    %v2644 = vunpack.c.l.b16 %v2636
    %v2645 = vunpack.c.l.b16 %v2637
    %v2646 = vunpack.c.l.b16 %v2638
    %v2647 = vunpack.c.l.b16 %v2639
    %v2648 = vpack.c.b16 %v2645, %v2644
    %v2649 = vpack.c.b16 %v2647, %v2646
    %v2653 = vsel %vm61, %v2635, 0
    %2655 = vmatprep.subr.bf16.mxu0 0
    %2656 = vmatpush1.bf16.msra.mxu0 %v2648
    %2657 = vmatprep.subr.bf16.mxu0 0
    %2658 = vmatpush1.bf16.msra.mxu0 %v2649
    %2659 = vmatprep.subr.bf16.mxu0 0
    %2660 = vmatpush1.bf16.msra.mxu0 0
    %2661 = vmatprep.subr.bf16.mxu0 0
    %2662 = vmatpush1.bf16.msra.mxu0 0
    %2663 = vmatprep.subr.bf16.mxu0 0
    %2664 = vmatpush1.bf16.msra.mxu0 0
    %2665 = vmatprep.subr.bf16.mxu0 0
    %2666 = vmatpush1.bf16.msra.mxu0 0
    %2667 = vmatprep.subr.bf16.mxu0 0
    %2668 = vmatpush1.bf16.msra.mxu0 0
    %2669 = vmatprep.subr.bf16.mxu0 0
    %2670 = vmatpush1.bf16.msra.mxu0 0
    %2671 = vmatprep.subr.bf16.mxu0 0
    %2672 = vmatpush1.bf16.msra.mxu0 0
    %2673 = vmatprep.subr.bf16.mxu0 0
    %2674 = vmatpush1.bf16.msra.mxu0 0
    %2675 = vmatprep.subr.bf16.mxu0 0
    %2676 = vmatpush1.bf16.msra.mxu0 0
    %2677 = vmatprep.subr.bf16.mxu0 0
    %2678 = vmatpush1.bf16.msra.mxu0 0
    %2679 = vmatprep.subr.bf16.mxu0 0
    %2680 = vmatpush1.bf16.msra.mxu0 0
    %2681 = vmatprep.subr.bf16.mxu0 0
    %2682 = vmatpush1.bf16.msra.mxu0 0
    %2683 = vmatprep.subr.bf16.mxu0 0
    %2684 = vmatpush1.bf16.msra.mxu0 0
    %2685 = vmatprep.subr.bf16.mxu0 0
    %2686 = vmatpush1.bf16.msra.mxu0 0
    %2687 = vmatprep.mubr.bf16.mxu0 0
    %2688 = vmatmul.mubr.bf16.gmra.mrb[0].mxu0 %v2653
    %v2689 = vpop.f32.mrb[0].mxu0
    %v2690 = vadd.f32 0.0, %v2689
    %v2691 = vpop.f32.mrb[0].mxu0
    %v2692 = vpop.f32.mrb[0].mxu0
    %v2693 = vadd.f32 0.0, %v2692
    %v2694 = vpop.f32.mrb[0].mxu0
    %2695 = vdwg.mxu0
    %v2696 = vadd.f32 %v57, %v2690
    %v2697 = vadd.f32 %v58, %v2693
    %v2698 = vlaneseq
    %v2699 = vshrl.u32 %v2698, 7
    %v2700 = vsub.s32 3, %v2699
    %v2701 = vrot.slane %v60, %v2700
    %v2702 = vadd.f32 %v2696, %v2701
    %v2703 = vadd.f32 %v2697, %v2701
    %v2704 = vsel %vm61, %v2702, 0.0
    %2705 = vadd.xlane.f32.xlu0 %v2704
    %v2706 = vpop.xlane.xlu0 %2705
    %v2707 = vsel %vm61, %v2703, 0.0
    %2708 = vadd.xlane.f32.xlu0 %v2707
    %v2709 = vpop.xlane.xlu0 %2708
    %v2710 = vmul.f32 %v2706, %v68
    %v2711 = vmul.f32 %v2709, %v68
    %v2712 = vsub.f32 %v2702, %v2710
    %v2713 = vsub.f32 %v2703, %v2711
    %v2714 = vmul.f32 %v2712, %v2712
    %v2715 = vmul.f32 %v2713, %v2713
    %v2716 = vsel %vm61, %v2714, 0.0
    %2717 = vadd.xlane.f32.xlu0 %v2716
    %v2718 = vpop.xlane.xlu0 %2717
    %v2719 = vsel %vm61, %v2715, 0.0
    %2720 = vadd.xlane.f32.xlu0 %v2719
    %v2721 = vpop.xlane.xlu0 %2720
    %v2722 = vmul.f32 %v2718, %v68
    %v2723 = vmul.f32 %v2721, %v68
    %v2724 = vadd.f32 %v2722, 1e-05
    %v2725 = vadd.f32 %v2723, 1e-05
    %v2726 = vrsqrt.pop %v2724
    %v2727 = vrsqrt.pop %v2725
    %v2728 = vmul.f32 %v2712, %v2726
    %v2729 = vmul.f32 %v2713, %v2727
    %v2730 = vlaneseq
    %v2731 = vshrl.u32 %v2730, 7
    %v2732 = vsub.s32 4, %v2731
    %v2733 = vrot.slane %v60, %v2732
    %v2734 = vmul.f32 %v2728, %v2733
    %v2735 = vmul.f32 %v2729, %v2733
    %v2736 = vlaneseq
    %v2737 = vshrl.u32 %v2736, 7
    %v2738 = vsub.s32 5, %v2737
    %v2739 = vrot.slane %v60, %v2738
    %v2740 = vadd.f32 %v2734, %v2739
    %v2741 = vadd.f32 %v2735, %v2739
    %v2742 = vpack.c.bf16 %v2741, %v2740
    %v2743 = vld [vmem:[#allocation5 + $0x20] sm:$0xf]
    %v2744 = vld [vmem:[#allocation5 + $0x24] sm:$0xf]
    %v2745 = vld [vmem:[#allocation5 + $0x28] sm:$0xf]
    %v2746 = vld [vmem:[#allocation5 + $0x2c] sm:$0xf]
    %v2747 = vlaneseq
    %v2748 = vshrl.u32 %v2747, 7
    %v2749 = vsub.s32 6, %v2748
    %v2750 = vrot.slane %v60, %v2749
    %v2755 = vunpack.c.l.b16 %v2743
    %v2756 = vunpack.c.l.b16 %v2744
    %v2757 = vunpack.c.l.b16 %v2745
    %v2758 = vunpack.c.l.b16 %v2746
    %v2759 = vpack.c.b16 %v2756, %v2755
    %v2760 = vpack.c.b16 %v2758, %v2757
    %v2764 = vsel %vm61, %v2742, 0
    %2766 = vmatprep.subr.bf16.mxu0 0
    %2767 = vmatpush1.bf16.msra.mxu0 %v2759
    %2768 = vmatprep.subr.bf16.mxu0 0
    %2769 = vmatpush1.bf16.msra.mxu0 %v2760
    %2770 = vmatprep.subr.bf16.mxu0 0
    %2771 = vmatpush1.bf16.msra.mxu0 0
    %2772 = vmatprep.subr.bf16.mxu0 0
    %2773 = vmatpush1.bf16.msra.mxu0 0
    %2774 = vmatprep.subr.bf16.mxu0 0
    %2775 = vmatpush1.bf16.msra.mxu0 0
    %2776 = vmatprep.subr.bf16.mxu0 0
    %2777 = vmatpush1.bf16.msra.mxu0 0
    %2778 = vmatprep.subr.bf16.mxu0 0
    %2779 = vmatpush1.bf16.msra.mxu0 0
    %2780 = vmatprep.subr.bf16.mxu0 0
    %2781 = vmatpush1.bf16.msra.mxu0 0
    %2782 = vmatprep.subr.bf16.mxu0 0
    %2783 = vmatpush1.bf16.msra.mxu0 0
    %2784 = vmatprep.subr.bf16.mxu0 0
    %2785 = vmatpush1.bf16.msra.mxu0 0
    %2786 = vmatprep.subr.bf16.mxu0 0
    %2787 = vmatpush1.bf16.msra.mxu0 0
    %2788 = vmatprep.subr.bf16.mxu0 0
    %2789 = vmatpush1.bf16.msra.mxu0 0
    %2790 = vmatprep.subr.bf16.mxu0 0
    %2791 = vmatpush1.bf16.msra.mxu0 0
    %2792 = vmatprep.subr.bf16.mxu0 0
    %2793 = vmatpush1.bf16.msra.mxu0 0
    %2794 = vmatprep.subr.bf16.mxu0 0
    %2795 = vmatpush1.bf16.msra.mxu0 0
    %2796 = vmatprep.subr.bf16.mxu0 0
    %2797 = vmatpush1.bf16.msra.mxu0 0
    %2798 = vmatprep.mubr.bf16.mxu0 0
    %2799 = vmatmul.mubr.bf16.gmra.mrb[0].mxu0 %v2764
    %v2800 = vpop.f32.mrb[0].mxu0
    %v2801 = vadd.f32 %v2750, %v2800
    %v2802 = vpop.f32.mrb[0].mxu0
    %v2803 = vpop.f32.mrb[0].mxu0
    %v2804 = vadd.f32 %v2750, %v2803
    %v2805 = vpop.f32.mrb[0].mxu0
    %2806 = vdwg.mxu0
    %v2807 = vmax.f32 %v2801, 0.0
    %v2808 = vmax.f32 %v2804, 0.0
    %v2809 = vpack.c.bf16 %v2808, %v2807
    %v2810 = vld [vmem:[#allocation5 + $0x30] sm:$0xf]
    %v2811 = vld [vmem:[#allocation5 + $0x34] sm:$0xf]
    %v2812 = vld [vmem:[#allocation5 + $0x38] sm:$0xf]
    %v2813 = vld [vmem:[#allocation5 + $0x3c] sm:$0xf]
    %v2814 = vld [vmem:[#allocation5 + $0x40] sm:$0xf]
    %v2815 = vld [vmem:[#allocation5 + $0x44] sm:$0xf]
    %v2816 = vld [vmem:[#allocation5 + $0x48] sm:$0xf]
    %v2817 = vld [vmem:[#allocation5 + $0x4c] sm:$0xf]
    %v2818 = vld [vmem:[#allocation5 + $0x50] sm:$0xf]
    %v2819 = vld [vmem:[#allocation5 + $0x54] sm:$0xf]
    %v2820 = vld [vmem:[#allocation5 + $0x58] sm:$0xf]
    %v2821 = vld [vmem:[#allocation5 + $0x5c] sm:$0xf]
    %v2822 = vld [vmem:[#allocation5 + $0x60] sm:$0xf]
    %v2823 = vld [vmem:[#allocation5 + $0x64] sm:$0xf]
    %v2824 = vld [vmem:[#allocation5 + $0x68] sm:$0xf]
    %v2825 = vld [vmem:[#allocation5 + $0x6c] sm:$0xf]
    %v2842 = vunpack.c.l.b16 %v2810
    %v2843 = vunpack.c.l.b16 %v2811
    %v2844 = vunpack.c.l.b16 %v2812
    %v2845 = vunpack.c.l.b16 %v2813
    %v2846 = vunpack.c.l.b16 %v2814
    %v2847 = vunpack.c.l.b16 %v2815
    %v2848 = vunpack.c.l.b16 %v2816
    %v2849 = vunpack.c.l.b16 %v2817
    %v2850 = vunpack.c.l.b16 %v2818
    %v2851 = vunpack.c.l.b16 %v2819
    %v2852 = vunpack.c.l.b16 %v2820
    %v2853 = vunpack.c.l.b16 %v2821
    %v2854 = vunpack.c.l.b16 %v2822
    %v2855 = vunpack.c.l.b16 %v2823
    %v2856 = vunpack.c.l.b16 %v2824
    %v2857 = vunpack.c.l.b16 %v2825
    %v2858 = vpack.c.b16 %v2843, %v2842
    %v2859 = vpack.c.b16 %v2845, %v2844
    %v2860 = vpack.c.b16 %v2847, %v2846
    %v2861 = vpack.c.b16 %v2849, %v2848
    %v2862 = vpack.c.b16 %v2851, %v2850
    %v2863 = vpack.c.b16 %v2853, %v2852
    %v2864 = vpack.c.b16 %v2855, %v2854
    %v2865 = vpack.c.b16 %v2857, %v2856
    %2874 = vmatprep.subr.bf16.mxu0 0
    %2875 = vmatpush1.bf16.msra.mxu0 %v2858
    %2876 = vmatprep.subr.bf16.mxu0 0
    %2877 = vmatpush1.bf16.msra.mxu0 %v2859
    %2878 = vmatprep.subr.bf16.mxu0 0
    %2879 = vmatpush1.bf16.msra.mxu0 %v2860
    %2880 = vmatprep.subr.bf16.mxu0 0
    %2881 = vmatpush1.bf16.msra.mxu0 %v2861
    %2882 = vmatprep.subr.bf16.mxu0 0
    %2883 = vmatpush1.bf16.msra.mxu0 %v2862
    %2884 = vmatprep.subr.bf16.mxu0 0
    %2885 = vmatpush1.bf16.msra.mxu0 %v2863
    %2886 = vmatprep.subr.bf16.mxu0 0
    %2887 = vmatpush1.bf16.msra.mxu0 %v2864
    %2888 = vmatprep.subr.bf16.mxu0 0
    %2889 = vmatpush1.bf16.msra.mxu0 %v2865
    %2890 = vmatprep.subr.bf16.mxu0 0
    %2891 = vmatpush1.bf16.msra.mxu0 0
    %2892 = vmatprep.subr.bf16.mxu0 0
    %2893 = vmatpush1.bf16.msra.mxu0 0
    %2894 = vmatprep.subr.bf16.mxu0 0
    %2895 = vmatpush1.bf16.msra.mxu0 0
    %2896 = vmatprep.subr.bf16.mxu0 0
    %2897 = vmatpush1.bf16.msra.mxu0 0
    %2898 = vmatprep.subr.bf16.mxu0 0
    %2899 = vmatpush1.bf16.msra.mxu0 0
    %2900 = vmatprep.subr.bf16.mxu0 0
    %2901 = vmatpush1.bf16.msra.mxu0 0
    %2902 = vmatprep.subr.bf16.mxu0 0
    %2903 = vmatpush1.bf16.msra.mxu0 0
    %2904 = vmatprep.subr.bf16.mxu0 0
    %2905 = vmatpush1.bf16.msra.mxu0 0
    %2906 = vmatprep.mubr.bf16.mxu0 0
    %2907 = vmatmul.mubr.bf16.gmra.mrb[0].mxu0 %v2809
    %v2908 = vpop.f32.mrb[0].mxu0
    %v2909 = vadd.f32 0.0, %v2908
    %v2910 = vpop.f32.mrb[0].mxu0
    %v2911 = vpop.f32.mrb[0].mxu0
    %v2912 = vadd.f32 0.0, %v2911
    %v2913 = vpop.f32.mrb[0].mxu0
    %2914 = vdwg.mxu0
    %v2915 = vadd.f32 %v2702, %v2909
    %v2916 = vadd.f32 %v2703, %v2912
    %v2917 = vlaneseq
    %v2918 = vshrl.u32 %v2917, 7
    %v2919 = vsub.s32 7, %v2918
    %v2920 = vrot.slane %v60, %v2919
    %v2921 = vadd.f32 %v2915, %v2920
    %v2922 = vadd.f32 %v2916, %v2920
    %s2923 = scalar_lea.vmem [#allocation5], 116
    %v2924 = vld [vmem:[%s2923 + $0x70] sm:$0xf]
    %v2925 = vunpack.c.l.bf16 %v2924
    %v2926 = vsel %vm61, %v2921, 0.0
    %2927 = vadd.xlane.f32.xlu0 %v2926
    %v2928 = vpop.xlane.xlu0 %2927
    %v2929 = vsel %vm61, %v2922, 0.0
    %2930 = vadd.xlane.f32.xlu0 %v2929
    %v2931 = vpop.xlane.xlu0 %2930
    %v2932 = vmul.f32 %v2928, %v68
    %v2933 = vmul.f32 %v2931, %v68
    %v2934 = vsub.f32 %v2921, %v2932
    %v2935 = vsub.f32 %v2922, %v2933
    %v2936 = vmul.f32 %v2934, %v2934
    %v2937 = vmul.f32 %v2935, %v2935
    %v2938 = vsel %vm61, %v2936, 0.0
    %2939 = vadd.xlane.f32.xlu0 %v2938
    %v2940 = vpop.xlane.xlu0 %2939
    %v2941 = vsel %vm61, %v2937, 0.0
    %2942 = vadd.xlane.f32.xlu0 %v2941
    %v2943 = vpop.xlane.xlu0 %2942
    %v2944 = vmul.f32 %v2940, %v68
    %v2945 = vmul.f32 %v2943, %v68
    %v2946 = vadd.f32 %v2944, 1e-05
    %v2947 = vadd.f32 %v2945, 1e-05
    %v2948 = vrsqrt.pop %v2946
    %v2949 = vrsqrt.pop %v2947
    %v2950 = vmul.f32 %v2934, %v2948
    %v2951 = vmul.f32 %v2935, %v2949
    %v2952 = vlaneseq
    %v2953 = vshrl.u32 %v2952, 7
    %v2954 = vsub.s32 0, %v2953
    %v2955 = vrot.slane %v2925, %v2954
    %v2956 = vmul.f32 %v2950, %v2955
    %v2957 = vmul.f32 %v2951, %v2955
    %v2958 = vlaneseq
    %v2959 = vshrl.u32 %v2958, 7
    %v2960 = vsub.s32 1, %v2959
    %v2961 = vrot.slane %v2925, %v2960
    %v2962 = vadd.f32 %v2956, %v2961
    %v2963 = vadd.f32 %v2957, %v2961
    %v2964 = vpack.c.bf16 %v2963, %v2962
    %v2965 = vld [vmem:[%s2923] sm:$0xf]
    %v2966 = vld [vmem:[%s2923 + $0x4] sm:$0xf]
    %v2967 = vld [vmem:[%s2923 + $0x8] sm:$0xf]
    %v2968 = vld [vmem:[%s2923 + $0xc] sm:$0xf]
    %v2969 = vlaneseq
    %v2970 = vshrl.u32 %v2969, 7
    %v2971 = vsub.s32 2, %v2970
    %v2972 = vrot.slane %v2925, %v2971
    %v2977 = vunpack.c.l.b16 %v2965
    %v2978 = vunpack.c.l.b16 %v2966
    %v2979 = vunpack.c.l.b16 %v2967
    %v2980 = vunpack.c.l.b16 %v2968
    %v2981 = vpack.c.b16 %v2978, %v2977
    %v2982 = vpack.c.b16 %v2980, %v2979
    %v2986 = vsel %vm61, %v2964, 0
    %2988 = vmatprep.subr.bf16.mxu0 0
    %2989 = vmatpush1.bf16.msra.mxu0 %v2981
    %2990 = vmatprep.subr.bf16.mxu0 0
    %2991 = vmatpush1.bf16.msra.mxu0 %v2982
    %2992 = vmatprep.subr.bf16.mxu0 0
    %2993 = vmatpush1.bf16.msra.mxu0 0
    %2994 = vmatprep.subr.bf16.mxu0 0
    %2995 = vmatpush1.bf16.msra.mxu0 0
    %2996 = vmatprep.subr.bf16.mxu0 0
    %2997 = vmatpush1.bf16.msra.mxu0 0
    %2998 = vmatprep.subr.bf16.mxu0 0
    %2999 = vmatpush1.bf16.msra.mxu0 0
    %3000 = vmatprep.subr.bf16.mxu0 0
    %3001 = vmatpush1.bf16.msra.mxu0 0
    %3002 = vmatprep.subr.bf16.mxu0 0
    %3003 = vmatpush1.bf16.msra.mxu0 0
    %3004 = vmatprep.subr.bf16.mxu0 0
    %3005 = vmatpush1.bf16.msra.mxu0 0
    %3006 = vmatprep.subr.bf16.mxu0 0
    %3007 = vmatpush1.bf16.msra.mxu0 0
    %3008 = vmatprep.subr.bf16.mxu0 0
    %3009 = vmatpush1.bf16.msra.mxu0 0
    %3010 = vmatprep.subr.bf16.mxu0 0
    %3011 = vmatpush1.bf16.msra.mxu0 0
    %3012 = vmatprep.subr.bf16.mxu0 0
    %3013 = vmatpush1.bf16.msra.mxu0 0
    %3014 = vmatprep.subr.bf16.mxu0 0
    %3015 = vmatpush1.bf16.msra.mxu0 0
    %3016 = vmatprep.subr.bf16.mxu0 0
    %3017 = vmatpush1.bf16.msra.mxu0 0
    %3018 = vmatprep.subr.bf16.mxu0 0
    %3019 = vmatpush1.bf16.msra.mxu0 0
    %3020 = vmatprep.mubr.bf16.mxu0 0
    %3021 = vmatmul.mubr.bf16.gmra.mrb[0].mxu0 %v2986
    %v3022 = vpop.f32.mrb[0].mxu0
    %v3023 = vadd.f32 %v2972, %v3022
    %v3024 = vpop.f32.mrb[0].mxu0
    %v3025 = vpop.f32.mrb[0].mxu0
    %v3026 = vadd.f32 %v2972, %v3025
    %v3027 = vpop.f32.mrb[0].mxu0
    %3028 = vdwg.mxu0
    %3031 = vrot.lane.b32.xlu0 %v3023, 120
    %v3032 = vpop.permute.xlu0 %3031
    %3033 = vrot.lane.b32.xlu0 %v3026, 120
    %v3034 = vpop.permute.xlu0 %3033
    %3037 = vrot.lane.b32.xlu0 %v3023, 112
    %v3038 = vpop.permute.xlu0 %3037
    %3039 = vrot.lane.b32.xlu0 %v3026, 112
    %v3040 = vpop.permute.xlu0 %3039
    %3043 = vrot.lane.b32.xlu0 %v3023, 104
    %v3044 = vpop.permute.xlu0 %3043
    %3045 = vrot.lane.b32.xlu0 %v3026, 104
    %v3046 = vpop.permute.xlu0 %3045
    %v3049 = vcombine.low %v3023, %v3038
    %v3050 = vcombine.high %v3023, %v3038
    %v3052 = vunpack.c.l.s4 1983009808
    %v3053 = vunpack.c.0.s8 %v3052
    %v3054 = vlaneseq
    %v3055 = vshrl.u32 %v3054, 7
    %v3056 = vsub.s32 %v3053, %v3055
    %v3057 = vrot.slane %v3049, %v3056
    %v3059 = vunpack.c.l.s4 1983009808
    %v3060 = vunpack.c.0.s8 %v3059
    %v3061 = vlaneseq
    %v3062 = vshrl.u32 %v3061, 7
    %v3063 = vsub.s32 %v3060, %v3062
    %v3064 = vrot.slane %v3050, %v3063
    %v3065 = vcombine.low %v3032, %v3044
    %v3066 = vcombine.high %v3032, %v3044
    %v3068 = vunpack.c.l.s4 1983009808
    %v3069 = vunpack.c.0.s8 %v3068
    %v3070 = vlaneseq
    %v3071 = vshrl.u32 %v3070, 7
    %v3072 = vsub.s32 %v3069, %v3071
    %v3073 = vrot.slane %v3065, %v3072
    %v3075 = vunpack.c.l.s4 1983009808
    %v3076 = vunpack.c.0.s8 %v3075
    %v3077 = vlaneseq
    %v3078 = vshrl.u32 %v3077, 7
    %v3079 = vsub.s32 %v3076, %v3078
    %v3080 = vrot.slane %v3066, %v3079
    %v3081 = vcombine.low %v3057, %v3073
    %v3082 = vcombine.high %v3057, %v3073
    %v3084 = vunpack.c.l.s4 1934713408
    %v3085 = vunpack.c.0.s8 %v3084
    %v3086 = vlaneseq
    %v3087 = vshrl.u32 %v3086, 7
    %v3088 = vsub.s32 %v3085, %v3087
    %v3089 = vrot.slane %v3081, %v3088
    %v3091 = vunpack.c.l.s4 1934713408
    %v3092 = vunpack.c.0.s8 %v3091
    %v3093 = vlaneseq
    %v3094 = vshrl.u32 %v3093, 7
    %v3095 = vsub.s32 %v3092, %v3094
    %v3096 = vrot.slane %v3082, %v3095
    %v3097 = vcombine.low %v3064, %v3080
    %v3098 = vcombine.high %v3064, %v3080
    %v3100 = vunpack.c.l.s4 1934713408
    %v3101 = vunpack.c.0.s8 %v3100
    %v3102 = vlaneseq
    %v3103 = vshrl.u32 %v3102, 7
    %v3104 = vsub.s32 %v3101, %v3103
    %v3105 = vrot.slane %v3097, %v3104
    %v3107 = vunpack.c.l.s4 1934713408
    %v3108 = vunpack.c.0.s8 %v3107
    %v3109 = vlaneseq
    %v3110 = vshrl.u32 %v3109, 7
    %v3111 = vsub.s32 %v3108, %v3110
    %v3112 = vrot.slane %v3098, %v3111
    %v3113 = vcombine.high %v3089, 0.0
    %v3114 = vcombine.high %v3096, 0.0
    %v3115 = vcombine.high %v3105, 0.0
    %v3116 = vcombine.high %v3112, 0.0
    %v3117 = vcombine.low %v3026, %v3040
    %v3118 = vcombine.high %v3026, %v3040
    %v3120 = vunpack.c.l.s4 1983009808
    %v3121 = vunpack.c.0.s8 %v3120
    %v3122 = vlaneseq
    %v3123 = vshrl.u32 %v3122, 7
    %v3124 = vsub.s32 %v3121, %v3123
    %v3125 = vrot.slane %v3117, %v3124
    %v3127 = vunpack.c.l.s4 1983009808
    %v3128 = vunpack.c.0.s8 %v3127
    %v3129 = vlaneseq
    %v3130 = vshrl.u32 %v3129, 7
    %v3131 = vsub.s32 %v3128, %v3130
    %v3132 = vrot.slane %v3118, %v3131
    %v3133 = vcombine.low %v3034, %v3046
    %v3134 = vcombine.high %v3034, %v3046
    %v3136 = vunpack.c.l.s4 1983009808
    %v3137 = vunpack.c.0.s8 %v3136
    %v3138 = vlaneseq
    %v3139 = vshrl.u32 %v3138, 7
    %v3140 = vsub.s32 %v3137, %v3139
    %v3141 = vrot.slane %v3133, %v3140
    %v3143 = vunpack.c.l.s4 1983009808
    %v3144 = vunpack.c.0.s8 %v3143
    %v3145 = vlaneseq
    %v3146 = vshrl.u32 %v3145, 7
    %v3147 = vsub.s32 %v3144, %v3146
    %v3148 = vrot.slane %v3134, %v3147
    %v3149 = vcombine.low %v3125, %v3141
    %v3150 = vcombine.high %v3125, %v3141
    %v3152 = vunpack.c.l.s4 1934713408
    %v3153 = vunpack.c.0.s8 %v3152
    %v3154 = vlaneseq
    %v3155 = vshrl.u32 %v3154, 7
    %v3156 = vsub.s32 %v3153, %v3155
    %v3157 = vrot.slane %v3149, %v3156
    %v3159 = vunpack.c.l.s4 1934713408
    %v3160 = vunpack.c.0.s8 %v3159
    %v3161 = vlaneseq
    %v3162 = vshrl.u32 %v3161, 7
    %v3163 = vsub.s32 %v3160, %v3162
    %v3164 = vrot.slane %v3150, %v3163
    %v3165 = vcombine.low %v3132, %v3148
    %v3166 = vcombine.high %v3132, %v3148
    %v3168 = vunpack.c.l.s4 1934713408
    %v3169 = vunpack.c.0.s8 %v3168
    %v3170 = vlaneseq
    %v3171 = vshrl.u32 %v3170, 7
    %v3172 = vsub.s32 %v3169, %v3171
    %v3173 = vrot.slane %v3165, %v3172
    %v3175 = vunpack.c.l.s4 1934713408
    %v3176 = vunpack.c.0.s8 %v3175
    %v3177 = vlaneseq
    %v3178 = vshrl.u32 %v3177, 7
    %v3179 = vsub.s32 %v3176, %v3178
    %v3180 = vrot.slane %v3166, %v3179
    %v3181 = vcombine.high %v3157, 0.0
    %v3182 = vcombine.high %v3164, 0.0
    %v3183 = vcombine.high %v3173, 0.0
    %v3184 = vcombine.high %v3180, 0.0
    %v3185 = vcombine.low %v3089, %v3096
    %v3187 = vunpack.c.l.s4 1983009808
    %v3188 = vunpack.c.0.s8 %v3187
    %v3189 = vlaneseq
    %v3190 = vshrl.u32 %v3189, 7
    %v3191 = vsub.s32 %v3188, %v3190
    %v3192 = vrot.slane %v3185, %v3191
    %v3193 = vcombine.low %v3113, %v3114
    %v3195 = vunpack.c.l.s4 1983009808
    %v3196 = vunpack.c.0.s8 %v3195
    %v3197 = vlaneseq
    %v3198 = vshrl.u32 %v3197, 7
    %v3199 = vsub.s32 %v3196, %v3198
    %v3200 = vrot.slane %v3193, %v3199
    %v3201 = vcombine.low %v3105, %v3112
    %v3203 = vunpack.c.l.s4 1983009808
    %v3204 = vunpack.c.0.s8 %v3203
    %v3205 = vlaneseq
    %v3206 = vshrl.u32 %v3205, 7
    %v3207 = vsub.s32 %v3204, %v3206
    %v3208 = vrot.slane %v3201, %v3207
    %v3209 = vcombine.low %v3115, %v3116
    %v3211 = vunpack.c.l.s4 1983009808
    %v3212 = vunpack.c.0.s8 %v3211
    %v3213 = vlaneseq
    %v3214 = vshrl.u32 %v3213, 7
    %v3215 = vsub.s32 %v3212, %v3214
    %v3216 = vrot.slane %v3209, %v3215
    %v3217 = vcombine.low %v3192, %v3200
    %v3218 = vcombine.high %v3192, %v3200
    %v3220 = vunpack.c.l.s4 1934713408
    %v3221 = vunpack.c.0.s8 %v3220
    %v3222 = vlaneseq
    %v3223 = vshrl.u32 %v3222, 7
    %v3224 = vsub.s32 %v3221, %v3223
    %v3225 = vrot.slane %v3217, %v3224
    %v3227 = vunpack.c.l.s4 1934713408
    %v3228 = vunpack.c.0.s8 %v3227
    %v3229 = vlaneseq
    %v3230 = vshrl.u32 %v3229, 7
    %v3231 = vsub.s32 %v3228, %v3230
    %v3232 = vrot.slane %v3218, %v3231
    %v3233 = vcombine.low %v3208, %v3216
    %v3234 = vcombine.high %v3208, %v3216
    %v3236 = vunpack.c.l.s4 1934713408
    %v3237 = vunpack.c.0.s8 %v3236
    %v3238 = vlaneseq
    %v3239 = vshrl.u32 %v3238, 7
    %v3240 = vsub.s32 %v3237, %v3239
    %v3241 = vrot.slane %v3233, %v3240
    %v3243 = vunpack.c.l.s4 1934713408
    %v3244 = vunpack.c.0.s8 %v3243
    %v3245 = vlaneseq
    %v3246 = vshrl.u32 %v3245, 7
    %v3247 = vsub.s32 %v3244, %v3246
    %v3248 = vrot.slane %v3234, %v3247
    %v3249 = vcombine.low %v3225, %v3241
    %v3250 = vcombine.high %v3225, %v3241
    %v3251 = vcombine.low %v3232, %v3248
    %v3252 = vcombine.high %v3232, %v3248
    %v3253 = vcombine.low %v3157, %v3164
    %v3255 = vunpack.c.l.s4 1983009808
    %v3256 = vunpack.c.0.s8 %v3255
    %v3257 = vlaneseq
    %v3258 = vshrl.u32 %v3257, 7
    %v3259 = vsub.s32 %v3256, %v3258
    %v3260 = vrot.slane %v3253, %v3259
    %v3261 = vcombine.low %v3181, %v3182
    %v3263 = vunpack.c.l.s4 1983009808
    %v3264 = vunpack.c.0.s8 %v3263
    %v3265 = vlaneseq
    %v3266 = vshrl.u32 %v3265, 7
    %v3267 = vsub.s32 %v3264, %v3266
    %v3268 = vrot.slane %v3261, %v3267
    %v3269 = vcombine.low %v3173, %v3180
    %v3271 = vunpack.c.l.s4 1983009808
    %v3272 = vunpack.c.0.s8 %v3271
    %v3273 = vlaneseq
    %v3274 = vshrl.u32 %v3273, 7
    %v3275 = vsub.s32 %v3272, %v3274
    %v3276 = vrot.slane %v3269, %v3275
    %v3277 = vcombine.low %v3183, %v3184
    %v3279 = vunpack.c.l.s4 1983009808
    %v3280 = vunpack.c.0.s8 %v3279
    %v3281 = vlaneseq
    %v3282 = vshrl.u32 %v3281, 7
    %v3283 = vsub.s32 %v3280, %v3282
    %v3284 = vrot.slane %v3277, %v3283
    %v3285 = vcombine.low %v3260, %v3268
    %v3286 = vcombine.high %v3260, %v3268
    %v3288 = vunpack.c.l.s4 1934713408
    %v3289 = vunpack.c.0.s8 %v3288
    %v3290 = vlaneseq
    %v3291 = vshrl.u32 %v3290, 7
    %v3292 = vsub.s32 %v3289, %v3291
    %v3293 = vrot.slane %v3285, %v3292
    %v3295 = vunpack.c.l.s4 1934713408
    %v3296 = vunpack.c.0.s8 %v3295
    %v3297 = vlaneseq
    %v3298 = vshrl.u32 %v3297, 7
    %v3299 = vsub.s32 %v3296, %v3298
    %v3300 = vrot.slane %v3286, %v3299
    %v3301 = vcombine.low %v3276, %v3284
    %v3302 = vcombine.high %v3276, %v3284
    %v3304 = vunpack.c.l.s4 1934713408
    %v3305 = vunpack.c.0.s8 %v3304
    %v3306 = vlaneseq
    %v3307 = vshrl.u32 %v3306, 7
    %v3308 = vsub.s32 %v3305, %v3307
    %v3309 = vrot.slane %v3301, %v3308
    %v3311 = vunpack.c.l.s4 1934713408
    %v3312 = vunpack.c.0.s8 %v3311
    %v3313 = vlaneseq
    %v3314 = vshrl.u32 %v3313, 7
    %v3315 = vsub.s32 %v3312, %v3314
    %v3316 = vrot.slane %v3302, %v3315
    %v3317 = vcombine.low %v3293, %v3309
    %v3318 = vcombine.high %v3293, %v3309
    %v3319 = vcombine.low %v3300, %v3316
    %v3320 = vcombine.high %v3300, %v3316
    %3321 = vrot.lane.b32.xlu0 %v3023, 96
    %v3322 = vpop.permute.xlu0 %3321
    %3323 = vrot.lane.b32.xlu0 %v3026, 96
    %v3324 = vpop.permute.xlu0 %3323
    %3325 = vrot.lane.b32.xlu0 %v3032, 96
    %v3326 = vpop.permute.xlu0 %3325
    %3327 = vrot.lane.b32.xlu0 %v3034, 96
    %v3328 = vpop.permute.xlu0 %3327
    %3329 = vrot.lane.b32.xlu0 %v3038, 96
    %v3330 = vpop.permute.xlu0 %3329
    %3331 = vrot.lane.b32.xlu0 %v3040, 96
    %v3332 = vpop.permute.xlu0 %3331
    %3333 = vrot.lane.b32.xlu0 %v3044, 96
    %v3334 = vpop.permute.xlu0 %3333
    %3335 = vrot.lane.b32.xlu0 %v3046, 96
    %v3336 = vpop.permute.xlu0 %3335
    %v3345 = vcombine.low %v3322, %v3330
    %v3346 = vcombine.high %v3322, %v3330
    %v3348 = vunpack.c.l.s4 1983009808
    %v3349 = vunpack.c.0.s8 %v3348
    %v3350 = vlaneseq
    %v3351 = vshrl.u32 %v3350, 7
    %v3352 = vsub.s32 %v3349, %v3351
    %v3353 = vrot.slane %v3345, %v3352
    %v3355 = vunpack.c.l.s4 1983009808
    %v3356 = vunpack.c.0.s8 %v3355
    %v3357 = vlaneseq
    %v3358 = vshrl.u32 %v3357, 7
    %v3359 = vsub.s32 %v3356, %v3358
    %v3360 = vrot.slane %v3346, %v3359
    %v3361 = vcombine.low %v3326, %v3334
    %v3362 = vcombine.high %v3326, %v3334
    %v3364 = vunpack.c.l.s4 1983009808
    %v3365 = vunpack.c.0.s8 %v3364
    %v3366 = vlaneseq
    %v3367 = vshrl.u32 %v3366, 7
    %v3368 = vsub.s32 %v3365, %v3367
    %v3369 = vrot.slane %v3361, %v3368
    %v3371 = vunpack.c.l.s4 1983009808
    %v3372 = vunpack.c.0.s8 %v3371
    %v3373 = vlaneseq
    %v3374 = vshrl.u32 %v3373, 7
    %v3375 = vsub.s32 %v3372, %v3374
    %v3376 = vrot.slane %v3362, %v3375
    %v3377 = vcombine.low %v3353, %v3369
    %v3378 = vcombine.high %v3353, %v3369
    %v3380 = vunpack.c.l.s4 1934713408
    %v3381 = vunpack.c.0.s8 %v3380
    %v3382 = vlaneseq
    %v3383 = vshrl.u32 %v3382, 7
    %v3384 = vsub.s32 %v3381, %v3383
    %v3385 = vrot.slane %v3377, %v3384
    %v3387 = vunpack.c.l.s4 1934713408
    %v3388 = vunpack.c.0.s8 %v3387
    %v3389 = vlaneseq
    %v3390 = vshrl.u32 %v3389, 7
    %v3391 = vsub.s32 %v3388, %v3390
    %v3392 = vrot.slane %v3378, %v3391
    %v3393 = vcombine.low %v3360, %v3376
    %v3394 = vcombine.high %v3360, %v3376
    %v3396 = vunpack.c.l.s4 1934713408
    %v3397 = vunpack.c.0.s8 %v3396
    %v3398 = vlaneseq
    %v3399 = vshrl.u32 %v3398, 7
    %v3400 = vsub.s32 %v3397, %v3399
    %v3401 = vrot.slane %v3393, %v3400
    %v3403 = vunpack.c.l.s4 1934713408
    %v3404 = vunpack.c.0.s8 %v3403
    %v3405 = vlaneseq
    %v3406 = vshrl.u32 %v3405, 7
    %v3407 = vsub.s32 %v3404, %v3406
    %v3408 = vrot.slane %v3394, %v3407
    %v3409 = vcombine.high %v3385, 0.0
    %v3410 = vcombine.high %v3392, 0.0
    %v3411 = vcombine.high %v3401, 0.0
    %v3412 = vcombine.high %v3408, 0.0
    %v3413 = vcombine.low %v3324, %v3332
    %v3414 = vcombine.high %v3324, %v3332
    %v3416 = vunpack.c.l.s4 1983009808
    %v3417 = vunpack.c.0.s8 %v3416
    %v3418 = vlaneseq
    %v3419 = vshrl.u32 %v3418, 7
    %v3420 = vsub.s32 %v3417, %v3419
    %v3421 = vrot.slane %v3413, %v3420
    %v3423 = vunpack.c.l.s4 1983009808
    %v3424 = vunpack.c.0.s8 %v3423
    %v3425 = vlaneseq
    %v3426 = vshrl.u32 %v3425, 7
    %v3427 = vsub.s32 %v3424, %v3426
    %v3428 = vrot.slane %v3414, %v3427
    %v3429 = vcombine.low %v3328, %v3336
    %v3430 = vcombine.high %v3328, %v3336
    %v3432 = vunpack.c.l.s4 1983009808
    %v3433 = vunpack.c.0.s8 %v3432
    %v3434 = vlaneseq
    %v3435 = vshrl.u32 %v3434, 7
    %v3436 = vsub.s32 %v3433, %v3435
    %v3437 = vrot.slane %v3429, %v3436
    %v3439 = vunpack.c.l.s4 1983009808
    %v3440 = vunpack.c.0.s8 %v3439
    %v3441 = vlaneseq
    %v3442 = vshrl.u32 %v3441, 7
    %v3443 = vsub.s32 %v3440, %v3442
    %v3444 = vrot.slane %v3430, %v3443
    %v3445 = vcombine.low %v3421, %v3437
    %v3446 = vcombine.high %v3421, %v3437
    %v3448 = vunpack.c.l.s4 1934713408
    %v3449 = vunpack.c.0.s8 %v3448
    %v3450 = vlaneseq
    %v3451 = vshrl.u32 %v3450, 7
    %v3452 = vsub.s32 %v3449, %v3451
    %v3453 = vrot.slane %v3445, %v3452
    %v3455 = vunpack.c.l.s4 1934713408
    %v3456 = vunpack.c.0.s8 %v3455
    %v3457 = vlaneseq
    %v3458 = vshrl.u32 %v3457, 7
    %v3459 = vsub.s32 %v3456, %v3458
    %v3460 = vrot.slane %v3446, %v3459
    %v3461 = vcombine.low %v3428, %v3444
    %v3462 = vcombine.high %v3428, %v3444
    %v3464 = vunpack.c.l.s4 1934713408
    %v3465 = vunpack.c.0.s8 %v3464
    %v3466 = vlaneseq
    %v3467 = vshrl.u32 %v3466, 7
    %v3468 = vsub.s32 %v3465, %v3467
    %v3469 = vrot.slane %v3461, %v3468
    %v3471 = vunpack.c.l.s4 1934713408
    %v3472 = vunpack.c.0.s8 %v3471
    %v3473 = vlaneseq
    %v3474 = vshrl.u32 %v3473, 7
    %v3475 = vsub.s32 %v3472, %v3474
    %v3476 = vrot.slane %v3462, %v3475
    %v3477 = vcombine.high %v3453, 0.0
    %v3478 = vcombine.high %v3460, 0.0
    %v3479 = vcombine.high %v3469, 0.0
    %v3480 = vcombine.high %v3476, 0.0
    %v3481 = vcombine.low %v3385, %v3392
    %v3483 = vunpack.c.l.s4 1983009808
    %v3484 = vunpack.c.0.s8 %v3483
    %v3485 = vlaneseq
    %v3486 = vshrl.u32 %v3485, 7
    %v3487 = vsub.s32 %v3484, %v3486
    %v3488 = vrot.slane %v3481, %v3487
    %v3489 = vcombine.low %v3409, %v3410
    %v3491 = vunpack.c.l.s4 1983009808
    %v3492 = vunpack.c.0.s8 %v3491
    %v3493 = vlaneseq
    %v3494 = vshrl.u32 %v3493, 7
    %v3495 = vsub.s32 %v3492, %v3494
    %v3496 = vrot.slane %v3489, %v3495
    %v3497 = vcombine.low %v3401, %v3408
    %v3499 = vunpack.c.l.s4 1983009808
    %v3500 = vunpack.c.0.s8 %v3499
    %v3501 = vlaneseq
    %v3502 = vshrl.u32 %v3501, 7
    %v3503 = vsub.s32 %v3500, %v3502
    %v3504 = vrot.slane %v3497, %v3503
    %v3505 = vcombine.low %v3411, %v3412
    %v3507 = vunpack.c.l.s4 1983009808
    %v3508 = vunpack.c.0.s8 %v3507
    %v3509 = vlaneseq
    %v3510 = vshrl.u32 %v3509, 7
    %v3511 = vsub.s32 %v3508, %v3510
    %v3512 = vrot.slane %v3505, %v3511
    %v3513 = vcombine.low %v3488, %v3496
    %v3514 = vcombine.high %v3488, %v3496
    %v3516 = vunpack.c.l.s4 1934713408
    %v3517 = vunpack.c.0.s8 %v3516
    %v3518 = vlaneseq
    %v3519 = vshrl.u32 %v3518, 7
    %v3520 = vsub.s32 %v3517, %v3519
    %v3521 = vrot.slane %v3513, %v3520
    %v3523 = vunpack.c.l.s4 1934713408
    %v3524 = vunpack.c.0.s8 %v3523
    %v3525 = vlaneseq
    %v3526 = vshrl.u32 %v3525, 7
    %v3527 = vsub.s32 %v3524, %v3526
    %v3528 = vrot.slane %v3514, %v3527
    %v3529 = vcombine.low %v3504, %v3512
    %v3530 = vcombine.high %v3504, %v3512
    %v3532 = vunpack.c.l.s4 1934713408
    %v3533 = vunpack.c.0.s8 %v3532
    %v3534 = vlaneseq
    %v3535 = vshrl.u32 %v3534, 7
    %v3536 = vsub.s32 %v3533, %v3535
    %v3537 = vrot.slane %v3529, %v3536
    %v3539 = vunpack.c.l.s4 1934713408
    %v3540 = vunpack.c.0.s8 %v3539
    %v3541 = vlaneseq
    %v3542 = vshrl.u32 %v3541, 7
    %v3543 = vsub.s32 %v3540, %v3542
    %v3544 = vrot.slane %v3530, %v3543
    %v3545 = vcombine.low %v3521, %v3537
    %v3546 = vcombine.high %v3521, %v3537
    %v3547 = vcombine.low %v3528, %v3544
    %v3548 = vcombine.high %v3528, %v3544
    %v3549 = vcombine.low %v3453, %v3460
    %v3551 = vunpack.c.l.s4 1983009808
    %v3552 = vunpack.c.0.s8 %v3551
    %v3553 = vlaneseq
    %v3554 = vshrl.u32 %v3553, 7
    %v3555 = vsub.s32 %v3552, %v3554
    %v3556 = vrot.slane %v3549, %v3555
    %v3557 = vcombine.low %v3477, %v3478
    %v3559 = vunpack.c.l.s4 1983009808
    %v3560 = vunpack.c.0.s8 %v3559
    %v3561 = vlaneseq
    %v3562 = vshrl.u32 %v3561, 7
    %v3563 = vsub.s32 %v3560, %v3562
    %v3564 = vrot.slane %v3557, %v3563
    %v3565 = vcombine.low %v3469, %v3476
    %v3567 = vunpack.c.l.s4 1983009808
    %v3568 = vunpack.c.0.s8 %v3567
    %v3569 = vlaneseq
    %v3570 = vshrl.u32 %v3569, 7
    %v3571 = vsub.s32 %v3568, %v3570
    %v3572 = vrot.slane %v3565, %v3571
    %v3573 = vcombine.low %v3479, %v3480
    %v3575 = vunpack.c.l.s4 1983009808
    %v3576 = vunpack.c.0.s8 %v3575
    %v3577 = vlaneseq
    %v3578 = vshrl.u32 %v3577, 7
    %v3579 = vsub.s32 %v3576, %v3578
    %v3580 = vrot.slane %v3573, %v3579
    %v3581 = vcombine.low %v3556, %v3564
    %v3582 = vcombine.high %v3556, %v3564
    %v3584 = vunpack.c.l.s4 1934713408
    %v3585 = vunpack.c.0.s8 %v3584
    %v3586 = vlaneseq
    %v3587 = vshrl.u32 %v3586, 7
    %v3588 = vsub.s32 %v3585, %v3587
    %v3589 = vrot.slane %v3581, %v3588
    %v3591 = vunpack.c.l.s4 1934713408
    %v3592 = vunpack.c.0.s8 %v3591
    %v3593 = vlaneseq
    %v3594 = vshrl.u32 %v3593, 7
    %v3595 = vsub.s32 %v3592, %v3594
    %v3596 = vrot.slane %v3582, %v3595
    %v3597 = vcombine.low %v3572, %v3580
    %v3598 = vcombine.high %v3572, %v3580
    %v3600 = vunpack.c.l.s4 1934713408
    %v3601 = vunpack.c.0.s8 %v3600
    %v3602 = vlaneseq
    %v3603 = vshrl.u32 %v3602, 7
    %v3604 = vsub.s32 %v3601, %v3603
    %v3605 = vrot.slane %v3597, %v3604
    %v3607 = vunpack.c.l.s4 1934713408
    %v3608 = vunpack.c.0.s8 %v3607
    %v3609 = vlaneseq
    %v3610 = vshrl.u32 %v3609, 7
    %v3611 = vsub.s32 %v3608, %v3610
    %v3612 = vrot.slane %v3598, %v3611
    %v3613 = vcombine.low %v3589, %v3605
    %v3614 = vcombine.high %v3589, %v3605
    %v3615 = vcombine.low %v3596, %v3612
    %v3616 = vcombine.high %v3596, %v3612
    %3617 = vrot.lane.b32.xlu0 %v3023, 64
    %v3618 = vpop.permute.xlu0 %3617
    %3619 = vrot.lane.b32.xlu0 %v3026, 64
    %v3620 = vpop.permute.xlu0 %3619
    %3621 = vrot.lane.b32.xlu0 %v3032, 64
    %v3622 = vpop.permute.xlu0 %3621
    %3623 = vrot.lane.b32.xlu0 %v3034, 64
    %v3624 = vpop.permute.xlu0 %3623
    %3625 = vrot.lane.b32.xlu0 %v3038, 64
    %v3626 = vpop.permute.xlu0 %3625
    %3627 = vrot.lane.b32.xlu0 %v3040, 64
    %v3628 = vpop.permute.xlu0 %3627
    %3629 = vrot.lane.b32.xlu0 %v3044, 64
    %v3630 = vpop.permute.xlu0 %3629
    %3631 = vrot.lane.b32.xlu0 %v3046, 64
    %v3632 = vpop.permute.xlu0 %3631
    %v3641 = vcombine.low %v3618, %v3626
    %v3642 = vcombine.high %v3618, %v3626
    %v3644 = vunpack.c.l.s4 1983009808
    %v3645 = vunpack.c.0.s8 %v3644
    %v3646 = vlaneseq
    %v3647 = vshrl.u32 %v3646, 7
    %v3648 = vsub.s32 %v3645, %v3647
    %v3649 = vrot.slane %v3641, %v3648
    %v3651 = vunpack.c.l.s4 1983009808
    %v3652 = vunpack.c.0.s8 %v3651
    %v3653 = vlaneseq
    %v3654 = vshrl.u32 %v3653, 7
    %v3655 = vsub.s32 %v3652, %v3654
    %v3656 = vrot.slane %v3642, %v3655
    %v3657 = vcombine.low %v3622, %v3630
    %v3658 = vcombine.high %v3622, %v3630
    %v3660 = vunpack.c.l.s4 1983009808
    %v3661 = vunpack.c.0.s8 %v3660
    %v3662 = vlaneseq
    %v3663 = vshrl.u32 %v3662, 7
    %v3664 = vsub.s32 %v3661, %v3663
    %v3665 = vrot.slane %v3657, %v3664
    %v3667 = vunpack.c.l.s4 1983009808
    %v3668 = vunpack.c.0.s8 %v3667
    %v3669 = vlaneseq
    %v3670 = vshrl.u32 %v3669, 7
    %v3671 = vsub.s32 %v3668, %v3670
    %v3672 = vrot.slane %v3658, %v3671
    %v3673 = vcombine.low %v3649, %v3665
    %v3674 = vcombine.high %v3649, %v3665
    %v3676 = vunpack.c.l.s4 1934713408
    %v3677 = vunpack.c.0.s8 %v3676
    %v3678 = vlaneseq
    %v3679 = vshrl.u32 %v3678, 7
    %v3680 = vsub.s32 %v3677, %v3679
    %v3681 = vrot.slane %v3673, %v3680
    %v3683 = vunpack.c.l.s4 1934713408
    %v3684 = vunpack.c.0.s8 %v3683
    %v3685 = vlaneseq
    %v3686 = vshrl.u32 %v3685, 7
    %v3687 = vsub.s32 %v3684, %v3686
    %v3688 = vrot.slane %v3674, %v3687
    %v3689 = vcombine.low %v3656, %v3672
    %v3690 = vcombine.high %v3656, %v3672
    %v3692 = vunpack.c.l.s4 1934713408
    %v3693 = vunpack.c.0.s8 %v3692
    %v3694 = vlaneseq
    %v3695 = vshrl.u32 %v3694, 7
    %v3696 = vsub.s32 %v3693, %v3695
    %v3697 = vrot.slane %v3689, %v3696
    %v3699 = vunpack.c.l.s4 1934713408
    %v3700 = vunpack.c.0.s8 %v3699
    %v3701 = vlaneseq
    %v3702 = vshrl.u32 %v3701, 7
    %v3703 = vsub.s32 %v3700, %v3702
    %v3704 = vrot.slane %v3690, %v3703
    %v3705 = vcombine.high %v3681, 0.0
    %v3706 = vcombine.high %v3688, 0.0
    %v3707 = vcombine.high %v3697, 0.0
    %v3708 = vcombine.high %v3704, 0.0
    %v3709 = vcombine.low %v3620, %v3628
    %v3710 = vcombine.high %v3620, %v3628
    %v3712 = vunpack.c.l.s4 1983009808
    %v3713 = vunpack.c.0.s8 %v3712
    %v3714 = vlaneseq
    %v3715 = vshrl.u32 %v3714, 7
    %v3716 = vsub.s32 %v3713, %v3715
    %v3717 = vrot.slane %v3709, %v3716
    %v3719 = vunpack.c.l.s4 1983009808
    %v3720 = vunpack.c.0.s8 %v3719
    %v3721 = vlaneseq
    %v3722 = vshrl.u32 %v3721, 7
    %v3723 = vsub.s32 %v3720, %v3722
    %v3724 = vrot.slane %v3710, %v3723
    %v3725 = vcombine.low %v3624, %v3632
    %v3726 = vcombine.high %v3624, %v3632
    %v3728 = vunpack.c.l.s4 1983009808
    %v3729 = vunpack.c.0.s8 %v3728
    %v3730 = vlaneseq
    %v3731 = vshrl.u32 %v3730, 7
    %v3732 = vsub.s32 %v3729, %v3731
    %v3733 = vrot.slane %v3725, %v3732
    %v3735 = vunpack.c.l.s4 1983009808
    %v3736 = vunpack.c.0.s8 %v3735
    %v3737 = vlaneseq
    %v3738 = vshrl.u32 %v3737, 7
    %v3739 = vsub.s32 %v3736, %v3738
    %v3740 = vrot.slane %v3726, %v3739
    %v3741 = vcombine.low %v3717, %v3733
    %v3742 = vcombine.high %v3717, %v3733
    %v3744 = vunpack.c.l.s4 1934713408
    %v3745 = vunpack.c.0.s8 %v3744
    %v3746 = vlaneseq
    %v3747 = vshrl.u32 %v3746, 7
    %v3748 = vsub.s32 %v3745, %v3747
    %v3749 = vrot.slane %v3741, %v3748
    %v3751 = vunpack.c.l.s4 1934713408
    %v3752 = vunpack.c.0.s8 %v3751
    %v3753 = vlaneseq
    %v3754 = vshrl.u32 %v3753, 7
    %v3755 = vsub.s32 %v3752, %v3754
    %v3756 = vrot.slane %v3742, %v3755
    %v3757 = vcombine.low %v3724, %v3740
    %v3758 = vcombine.high %v3724, %v3740
    %v3760 = vunpack.c.l.s4 1934713408
    %v3761 = vunpack.c.0.s8 %v3760
    %v3762 = vlaneseq
    %v3763 = vshrl.u32 %v3762, 7
    %v3764 = vsub.s32 %v3761, %v3763
    %v3765 = vrot.slane %v3757, %v3764
    %v3767 = vunpack.c.l.s4 1934713408
    %v3768 = vunpack.c.0.s8 %v3767
    %v3769 = vlaneseq
    %v3770 = vshrl.u32 %v3769, 7
    %v3771 = vsub.s32 %v3768, %v3770
    %v3772 = vrot.slane %v3758, %v3771
    %v3773 = vcombine.high %v3749, 0.0
    %v3774 = vcombine.high %v3756, 0.0
    %v3775 = vcombine.high %v3765, 0.0
    %v3776 = vcombine.high %v3772, 0.0
    %v3777 = vcombine.low %v3681, %v3688
    %v3779 = vunpack.c.l.s4 1983009808
    %v3780 = vunpack.c.0.s8 %v3779
    %v3781 = vlaneseq
    %v3782 = vshrl.u32 %v3781, 7
    %v3783 = vsub.s32 %v3780, %v3782
    %v3784 = vrot.slane %v3777, %v3783
    %v3785 = vcombine.low %v3705, %v3706
    %v3787 = vunpack.c.l.s4 1983009808
    %v3788 = vunpack.c.0.s8 %v3787
    %v3789 = vlaneseq
    %v3790 = vshrl.u32 %v3789, 7
    %v3791 = vsub.s32 %v3788, %v3790
    %v3792 = vrot.slane %v3785, %v3791
    %v3793 = vcombine.low %v3697, %v3704
    %v3795 = vunpack.c.l.s4 1983009808
    %v3796 = vunpack.c.0.s8 %v3795
    %v3797 = vlaneseq
    %v3798 = vshrl.u32 %v3797, 7
    %v3799 = vsub.s32 %v3796, %v3798
    %v3800 = vrot.slane %v3793, %v3799
    %v3801 = vcombine.low %v3707, %v3708
    %v3803 = vunpack.c.l.s4 1983009808
    %v3804 = vunpack.c.0.s8 %v3803
    %v3805 = vlaneseq
    %v3806 = vshrl.u32 %v3805, 7
    %v3807 = vsub.s32 %v3804, %v3806
    %v3808 = vrot.slane %v3801, %v3807
    %v3809 = vcombine.low %v3784, %v3792
    %v3810 = vcombine.high %v3784, %v3792
    %v3812 = vunpack.c.l.s4 1934713408
    %v3813 = vunpack.c.0.s8 %v3812
    %v3814 = vlaneseq
    %v3815 = vshrl.u32 %v3814, 7
    %v3816 = vsub.s32 %v3813, %v3815
    %v3817 = vrot.slane %v3809, %v3816
    %v3819 = vunpack.c.l.s4 1934713408
    %v3820 = vunpack.c.0.s8 %v3819
    %v3821 = vlaneseq
    %v3822 = vshrl.u32 %v3821, 7
    %v3823 = vsub.s32 %v3820, %v3822
    %v3824 = vrot.slane %v3810, %v3823
    %v3825 = vcombine.low %v3800, %v3808
    %v3826 = vcombine.high %v3800, %v3808
    %v3828 = vunpack.c.l.s4 1934713408
    %v3829 = vunpack.c.0.s8 %v3828
    %v3830 = vlaneseq
    %v3831 = vshrl.u32 %v3830, 7
    %v3832 = vsub.s32 %v3829, %v3831
    %v3833 = vrot.slane %v3825, %v3832
    %v3835 = vunpack.c.l.s4 1934713408
    %v3836 = vunpack.c.0.s8 %v3835
    %v3837 = vlaneseq
    %v3838 = vshrl.u32 %v3837, 7
    %v3839 = vsub.s32 %v3836, %v3838
    %v3840 = vrot.slane %v3826, %v3839
    %v3841 = vcombine.low %v3817, %v3833
    %v3842 = vcombine.high %v3817, %v3833
    %v3843 = vcombine.low %v3824, %v3840
    %v3844 = vcombine.high %v3824, %v3840
    %v3845 = vcombine.low %v3749, %v3756
    %v3847 = vunpack.c.l.s4 1983009808
    %v3848 = vunpack.c.0.s8 %v3847
    %v3849 = vlaneseq
    %v3850 = vshrl.u32 %v3849, 7
    %v3851 = vsub.s32 %v3848, %v3850
    %v3852 = vrot.slane %v3845, %v3851
    %v3853 = vcombine.low %v3773, %v3774
    %v3855 = vunpack.c.l.s4 1983009808
    %v3856 = vunpack.c.0.s8 %v3855
    %v3857 = vlaneseq
    %v3858 = vshrl.u32 %v3857, 7
    %v3859 = vsub.s32 %v3856, %v3858
    %v3860 = vrot.slane %v3853, %v3859
    %v3861 = vcombine.low %v3765, %v3772
    %v3863 = vunpack.c.l.s4 1983009808
    %v3864 = vunpack.c.0.s8 %v3863
    %v3865 = vlaneseq
    %v3866 = vshrl.u32 %v3865, 7
    %v3867 = vsub.s32 %v3864, %v3866
    %v3868 = vrot.slane %v3861, %v3867
    %v3869 = vcombine.low %v3775, %v3776
    %v3871 = vunpack.c.l.s4 1983009808
    %v3872 = vunpack.c.0.s8 %v3871
    %v3873 = vlaneseq
    %v3874 = vshrl.u32 %v3873, 7
    %v3875 = vsub.s32 %v3872, %v3874
    %v3876 = vrot.slane %v3869, %v3875
    %v3877 = vcombine.low %v3852, %v3860
    %v3878 = vcombine.high %v3852, %v3860
    %v3880 = vunpack.c.l.s4 1934713408
    %v3881 = vunpack.c.0.s8 %v3880
    %v3882 = vlaneseq
    %v3883 = vshrl.u32 %v3882, 7
    %v3884 = vsub.s32 %v3881, %v3883
    %v3885 = vrot.slane %v3877, %v3884
    %v3887 = vunpack.c.l.s4 1934713408
    %v3888 = vunpack.c.0.s8 %v3887
    %v3889 = vlaneseq
    %v3890 = vshrl.u32 %v3889, 7
    %v3891 = vsub.s32 %v3888, %v3890
    %v3892 = vrot.slane %v3878, %v3891
    %v3893 = vcombine.low %v3868, %v3876
    %v3894 = vcombine.high %v3868, %v3876
    %v3896 = vunpack.c.l.s4 1934713408
    %v3897 = vunpack.c.0.s8 %v3896
    %v3898 = vlaneseq
    %v3899 = vshrl.u32 %v3898, 7
    %v3900 = vsub.s32 %v3897, %v3899
    %v3901 = vrot.slane %v3893, %v3900
    %v3903 = vunpack.c.l.s4 1934713408
    %v3904 = vunpack.c.0.s8 %v3903
    %v3905 = vlaneseq
    %v3906 = vshrl.u32 %v3905, 7
    %v3907 = vsub.s32 %v3904, %v3906
    %v3908 = vrot.slane %v3894, %v3907
    %v3909 = vcombine.low %v3885, %v3901
    %v3910 = vcombine.high %v3885, %v3901
    %v3911 = vcombine.low %v3892, %v3908
    %v3912 = vcombine.high %v3892, %v3908
    %v3914 = vsel %vm1050, %v3249, 0
    %v3917 = vsel %vm1050, %v3545, 0
    %3919 = vmatprep.subr.mxu0 0.0
    %3920 = vmatpush1.xpose.msra.mxu0 %v3917
    %3921 = vmatprep.subr.mxu0 0.0
    %3922 = vmatpush1.xpose.msra.mxu0 0.0
    %3923 = vmatprep.subr.mxu0 0.0
    %3924 = vmatpush1.xpose.msra.mxu0 0.0
    %3925 = vmatprep.subr.mxu0 0.0
    %3926 = vmatpush1.xpose.msra.mxu0 0.0
    %3927 = vmatprep.subr.mxu0 0.0
    %3928 = vmatpush1.xpose.msra.mxu0 0.0
    %3929 = vmatprep.subr.mxu0 0.0
    %3930 = vmatpush1.xpose.msra.mxu0 0.0
    %3931 = vmatprep.subr.mxu0 0.0
    %3932 = vmatpush1.xpose.msra.mxu0 0.0
    %3933 = vmatprep.subr.mxu0 0.0
    %3934 = vmatpush1.xpose.msra.mxu0 0.0
    %3935 = vmatprep.subr.mxu0 0.0
    %3936 = vmatpush1.xpose.msra.mxu0 0.0
    %3937 = vmatprep.subr.mxu0 0.0
    %3938 = vmatpush1.xpose.msra.mxu0 0.0
    %3939 = vmatprep.subr.mxu0 0.0
    %3940 = vmatpush1.xpose.msra.mxu0 0.0
    %3941 = vmatprep.subr.mxu0 0.0
    %3942 = vmatpush1.xpose.msra.mxu0 0.0
    %3943 = vmatprep.subr.mxu0 0.0
    %3944 = vmatpush1.xpose.msra.mxu0 0.0
    %3945 = vmatprep.subr.mxu0 0.0
    %3946 = vmatpush1.xpose.msra.mxu0 0.0
    %3947 = vmatprep.subr.mxu0 0.0
    %3948 = vmatpush1.xpose.msra.mxu0 0.0
    %3949 = vmatprep.subr.mxu0 0.0
    %3950 = vmatpush1.xpose.msra.mxu0 0.0
    %3951 = vmatprep.subr.mxu0 0.0
    %3952 = vmatpush1.xpose.msra.mxu0 0.0
    %3953 = vmatprep.subr.mxu0 0.0
    %3954 = vmatpush1.xpose.msra.mxu0 0.0
    %3955 = vmatprep.subr.mxu0 0.0
    %3956 = vmatpush1.xpose.msra.mxu0 0.0
    %3957 = vmatprep.subr.mxu0 0.0
    %3958 = vmatpush1.xpose.msra.mxu0 0.0
    %3959 = vmatprep.subr.mxu0 0.0
    %3960 = vmatpush1.xpose.msra.mxu0 0.0
    %3961 = vmatprep.subr.mxu0 0.0
    %3962 = vmatpush1.xpose.msra.mxu0 0.0
    %3963 = vmatprep.subr.mxu0 0.0
    %3964 = vmatpush1.xpose.msra.mxu0 0.0
    %3965 = vmatprep.subr.mxu0 0.0
    %3966 = vmatpush1.xpose.msra.mxu0 0.0
    %3967 = vmatprep.subr.mxu0 0.0
    %3968 = vmatpush1.xpose.msra.mxu0 0.0
    %3969 = vmatprep.subr.mxu0 0.0
    %3970 = vmatpush1.xpose.msra.mxu0 0.0
    %3971 = vmatprep.subr.mxu0 0.0
    %3972 = vmatpush1.xpose.msra.mxu0 0.0
    %3973 = vmatprep.subr.mxu0 0.0
    %3974 = vmatpush1.xpose.msra.mxu0 0.0
    %3975 = vmatprep.subr.mxu0 0.0
    %3976 = vmatpush1.xpose.msra.mxu0 0.0
    %3977 = vmatprep.subr.mxu0 0.0
    %3978 = vmatpush1.xpose.msra.mxu0 0.0
    %3979 = vmatprep.subr.mxu0 0.0
    %3980 = vmatpush1.xpose.msra.mxu0 0.0
    %3981 = vmatprep.subr.mxu0 0.0
    %3982 = vmatpush1.xpose.msra.mxu0 0.0
    %3983 = vmatprep.mubr.f32.mxu0 0.0
    %3984 = vmatmul.mubr.f32.gmra.mrb[0].mxu0 %v3914
    %v3985 = vpop.f32.mrb[0].mxu0
    %v3986 = vadd.f32 0.0, %v3985
    %v3987 = vpop.f32.mrb[0].mxu0
    %3988 = vdwg.mxu0
    %v3990 = vsel %vm1050, %v3250, 0
    %v3993 = vsel %vm1050, %v3546, 0
    %3995 = vmatprep.subr.mxu0 0.0
    %3996 = vmatpush1.xpose.msra.mxu0 %v3993
    %3997 = vmatprep.subr.mxu0 0.0
    %3998 = vmatpush1.xpose.msra.mxu0 0.0
    %3999 = vmatprep.subr.mxu0 0.0
    %4000 = vmatpush1.xpose.msra.mxu0 0.0
    %4001 = vmatprep.subr.mxu0 0.0
    %4002 = vmatpush1.xpose.msra.mxu0 0.0
    %4003 = vmatprep.subr.mxu0 0.0
    %4004 = vmatpush1.xpose.msra.mxu0 0.0
    %4005 = vmatprep.subr.mxu0 0.0
    %4006 = vmatpush1.xpose.msra.mxu0 0.0
    %4007 = vmatprep.subr.mxu0 0.0
    %4008 = vmatpush1.xpose.msra.mxu0 0.0
    %4009 = vmatprep.subr.mxu0 0.0
    %4010 = vmatpush1.xpose.msra.mxu0 0.0
    %4011 = vmatprep.subr.mxu0 0.0
    %4012 = vmatpush1.xpose.msra.mxu0 0.0
    %4013 = vmatprep.subr.mxu0 0.0
    %4014 = vmatpush1.xpose.msra.mxu0 0.0
    %4015 = vmatprep.subr.mxu0 0.0
    %4016 = vmatpush1.xpose.msra.mxu0 0.0
    %4017 = vmatprep.subr.mxu0 0.0
    %4018 = vmatpush1.xpose.msra.mxu0 0.0
    %4019 = vmatprep.subr.mxu0 0.0
    %4020 = vmatpush1.xpose.msra.mxu0 0.0
    %4021 = vmatprep.subr.mxu0 0.0
    %4022 = vmatpush1.xpose.msra.mxu0 0.0
    %4023 = vmatprep.subr.mxu0 0.0
    %4024 = vmatpush1.xpose.msra.mxu0 0.0
    %4025 = vmatprep.subr.mxu0 0.0
    %4026 = vmatpush1.xpose.msra.mxu0 0.0
    %4027 = vmatprep.subr.mxu0 0.0
    %4028 = vmatpush1.xpose.msra.mxu0 0.0
    %4029 = vmatprep.subr.mxu0 0.0
    %4030 = vmatpush1.xpose.msra.mxu0 0.0
    %4031 = vmatprep.subr.mxu0 0.0
    %4032 = vmatpush1.xpose.msra.mxu0 0.0
    %4033 = vmatprep.subr.mxu0 0.0
    %4034 = vmatpush1.xpose.msra.mxu0 0.0
    %4035 = vmatprep.subr.mxu0 0.0
    %4036 = vmatpush1.xpose.msra.mxu0 0.0
    %4037 = vmatprep.subr.mxu0 0.0
    %4038 = vmatpush1.xpose.msra.mxu0 0.0
    %4039 = vmatprep.subr.mxu0 0.0
    %4040 = vmatpush1.xpose.msra.mxu0 0.0
    %4041 = vmatprep.subr.mxu0 0.0
    %4042 = vmatpush1.xpose.msra.mxu0 0.0
    %4043 = vmatprep.subr.mxu0 0.0
    %4044 = vmatpush1.xpose.msra.mxu0 0.0
    %4045 = vmatprep.subr.mxu0 0.0
    %4046 = vmatpush1.xpose.msra.mxu0 0.0
    %4047 = vmatprep.subr.mxu0 0.0
    %4048 = vmatpush1.xpose.msra.mxu0 0.0
    %4049 = vmatprep.subr.mxu0 0.0
    %4050 = vmatpush1.xpose.msra.mxu0 0.0
    %4051 = vmatprep.subr.mxu0 0.0
    %4052 = vmatpush1.xpose.msra.mxu0 0.0
    %4053 = vmatprep.subr.mxu0 0.0
    %4054 = vmatpush1.xpose.msra.mxu0 0.0
    %4055 = vmatprep.subr.mxu0 0.0
    %4056 = vmatpush1.xpose.msra.mxu0 0.0
    %4057 = vmatprep.subr.mxu0 0.0
    %4058 = vmatpush1.xpose.msra.mxu0 0.0
    %4059 = vmatprep.mubr.f32.mxu0 0.0
    %4060 = vmatmul.mubr.f32.gmra.mrb[0].mxu0 %v3990
    %v4061 = vpop.f32.mrb[0].mxu0
    %v4062 = vadd.f32 0.0, %v4061
    %v4063 = vpop.f32.mrb[0].mxu0
    %4064 = vdwg.mxu0
    %v4066 = vsel %vm1050, %v3251, 0
    %v4069 = vsel %vm1050, %v3547, 0
    %4071 = vmatprep.subr.mxu0 0.0
    %4072 = vmatpush1.xpose.msra.mxu0 %v4069
    %4073 = vmatprep.subr.mxu0 0.0
    %4074 = vmatpush1.xpose.msra.mxu0 0.0
    %4075 = vmatprep.subr.mxu0 0.0
    %4076 = vmatpush1.xpose.msra.mxu0 0.0
    %4077 = vmatprep.subr.mxu0 0.0
    %4078 = vmatpush1.xpose.msra.mxu0 0.0
    %4079 = vmatprep.subr.mxu0 0.0
    %4080 = vmatpush1.xpose.msra.mxu0 0.0
    %4081 = vmatprep.subr.mxu0 0.0
    %4082 = vmatpush1.xpose.msra.mxu0 0.0
    %4083 = vmatprep.subr.mxu0 0.0
    %4084 = vmatpush1.xpose.msra.mxu0 0.0
    %4085 = vmatprep.subr.mxu0 0.0
    %4086 = vmatpush1.xpose.msra.mxu0 0.0
    %4087 = vmatprep.subr.mxu0 0.0
    %4088 = vmatpush1.xpose.msra.mxu0 0.0
    %4089 = vmatprep.subr.mxu0 0.0
    %4090 = vmatpush1.xpose.msra.mxu0 0.0
    %4091 = vmatprep.subr.mxu0 0.0
    %4092 = vmatpush1.xpose.msra.mxu0 0.0
    %4093 = vmatprep.subr.mxu0 0.0
    %4094 = vmatpush1.xpose.msra.mxu0 0.0
    %4095 = vmatprep.subr.mxu0 0.0
    %4096 = vmatpush1.xpose.msra.mxu0 0.0
    %4097 = vmatprep.subr.mxu0 0.0
    %4098 = vmatpush1.xpose.msra.mxu0 0.0
    %4099 = vmatprep.subr.mxu0 0.0
    %4100 = vmatpush1.xpose.msra.mxu0 0.0
    %4101 = vmatprep.subr.mxu0 0.0
    %4102 = vmatpush1.xpose.msra.mxu0 0.0
    %4103 = vmatprep.subr.mxu0 0.0
    %4104 = vmatpush1.xpose.msra.mxu0 0.0
    %4105 = vmatprep.subr.mxu0 0.0
    %4106 = vmatpush1.xpose.msra.mxu0 0.0
    %4107 = vmatprep.subr.mxu0 0.0
    %4108 = vmatpush1.xpose.msra.mxu0 0.0
    %4109 = vmatprep.subr.mxu0 0.0
    %4110 = vmatpush1.xpose.msra.mxu0 0.0
    %4111 = vmatprep.subr.mxu0 0.0
    %4112 = vmatpush1.xpose.msra.mxu0 0.0
    %4113 = vmatprep.subr.mxu0 0.0
    %4114 = vmatpush1.xpose.msra.mxu0 0.0
    %4115 = vmatprep.subr.mxu0 0.0
    %4116 = vmatpush1.xpose.msra.mxu0 0.0
    %4117 = vmatprep.subr.mxu0 0.0
    %4118 = vmatpush1.xpose.msra.mxu0 0.0
    %4119 = vmatprep.subr.mxu0 0.0
    %4120 = vmatpush1.xpose.msra.mxu0 0.0
    %4121 = vmatprep.subr.mxu0 0.0
    %4122 = vmatpush1.xpose.msra.mxu0 0.0
    %4123 = vmatprep.subr.mxu0 0.0
    %4124 = vmatpush1.xpose.msra.mxu0 0.0
    %4125 = vmatprep.subr.mxu0 0.0
    %4126 = vmatpush1.xpose.msra.mxu0 0.0
    %4127 = vmatprep.subr.mxu0 0.0
    %4128 = vmatpush1.xpose.msra.mxu0 0.0
    %4129 = vmatprep.subr.mxu0 0.0
    %4130 = vmatpush1.xpose.msra.mxu0 0.0
    %4131 = vmatprep.subr.mxu0 0.0
    %4132 = vmatpush1.xpose.msra.mxu0 0.0
    %4133 = vmatprep.subr.mxu0 0.0
    %4134 = vmatpush1.xpose.msra.mxu0 0.0
    %4135 = vmatprep.mubr.f32.mxu0 0.0
    %4136 = vmatmul.mubr.f32.gmra.mrb[0].mxu0 %v4066
    %v4137 = vpop.f32.mrb[0].mxu0
    %v4138 = vadd.f32 0.0, %v4137
    %v4139 = vpop.f32.mrb[0].mxu0
    %4140 = vdwg.mxu0
    %v4142 = vsel %vm1050, %v3252, 0
    %v4145 = vsel %vm1050, %v3548, 0
    %4147 = vmatprep.subr.mxu0 0.0
    %4148 = vmatpush1.xpose.msra.mxu0 %v4145
    %4149 = vmatprep.subr.mxu0 0.0
    %4150 = vmatpush1.xpose.msra.mxu0 0.0
    %4151 = vmatprep.subr.mxu0 0.0
    %4152 = vmatpush1.xpose.msra.mxu0 0.0
    %4153 = vmatprep.subr.mxu0 0.0
    %4154 = vmatpush1.xpose.msra.mxu0 0.0
    %4155 = vmatprep.subr.mxu0 0.0
    %4156 = vmatpush1.xpose.msra.mxu0 0.0
    %4157 = vmatprep.subr.mxu0 0.0
    %4158 = vmatpush1.xpose.msra.mxu0 0.0
    %4159 = vmatprep.subr.mxu0 0.0
    %4160 = vmatpush1.xpose.msra.mxu0 0.0
    %4161 = vmatprep.subr.mxu0 0.0
    %4162 = vmatpush1.xpose.msra.mxu0 0.0
    %4163 = vmatprep.subr.mxu0 0.0
    %4164 = vmatpush1.xpose.msra.mxu0 0.0
    %4165 = vmatprep.subr.mxu0 0.0
    %4166 = vmatpush1.xpose.msra.mxu0 0.0
    %4167 = vmatprep.subr.mxu0 0.0
    %4168 = vmatpush1.xpose.msra.mxu0 0.0
    %4169 = vmatprep.subr.mxu0 0.0
    %4170 = vmatpush1.xpose.msra.mxu0 0.0
    %4171 = vmatprep.subr.mxu0 0.0
    %4172 = vmatpush1.xpose.msra.mxu0 0.0
    %4173 = vmatprep.subr.mxu0 0.0
    %4174 = vmatpush1.xpose.msra.mxu0 0.0
    %4175 = vmatprep.subr.mxu0 0.0
    %4176 = vmatpush1.xpose.msra.mxu0 0.0
    %4177 = vmatprep.subr.mxu0 0.0
    %4178 = vmatpush1.xpose.msra.mxu0 0.0
    %4179 = vmatprep.subr.mxu0 0.0
    %4180 = vmatpush1.xpose.msra.mxu0 0.0
    %4181 = vmatprep.subr.mxu0 0.0
    %4182 = vmatpush1.xpose.msra.mxu0 0.0
    %4183 = vmatprep.subr.mxu0 0.0
    %4184 = vmatpush1.xpose.msra.mxu0 0.0
    %4185 = vmatprep.subr.mxu0 0.0
    %4186 = vmatpush1.xpose.msra.mxu0 0.0
    %4187 = vmatprep.subr.mxu0 0.0
    %4188 = vmatpush1.xpose.msra.mxu0 0.0
    %4189 = vmatprep.subr.mxu0 0.0
    %4190 = vmatpush1.xpose.msra.mxu0 0.0
    %4191 = vmatprep.subr.mxu0 0.0
    %4192 = vmatpush1.xpose.msra.mxu0 0.0
    %4193 = vmatprep.subr.mxu0 0.0
    %4194 = vmatpush1.xpose.msra.mxu0 0.0
    %4195 = vmatprep.subr.mxu0 0.0
    %4196 = vmatpush1.xpose.msra.mxu0 0.0
    %4197 = vmatprep.subr.mxu0 0.0
    %4198 = vmatpush1.xpose.msra.mxu0 0.0
    %4199 = vmatprep.subr.mxu0 0.0
    %4200 = vmatpush1.xpose.msra.mxu0 0.0
    %4201 = vmatprep.subr.mxu0 0.0
    %4202 = vmatpush1.xpose.msra.mxu0 0.0
    %4203 = vmatprep.subr.mxu0 0.0
    %4204 = vmatpush1.xpose.msra.mxu0 0.0
    %4205 = vmatprep.subr.mxu0 0.0
    %4206 = vmatpush1.xpose.msra.mxu0 0.0
    %4207 = vmatprep.subr.mxu0 0.0
    %4208 = vmatpush1.xpose.msra.mxu0 0.0
    %4209 = vmatprep.subr.mxu0 0.0
    %4210 = vmatpush1.xpose.msra.mxu0 0.0
    %4211 = vmatprep.mubr.f32.mxu0 0.0
    %4212 = vmatmul.mubr.f32.gmra.mrb[0].mxu0 %v4142
    %v4213 = vpop.f32.mrb[0].mxu0
    %v4214 = vadd.f32 0.0, %v4213
    %v4215 = vpop.f32.mrb[0].mxu0
    %4216 = vdwg.mxu0
    %v4218 = vsel %vm1050, %v3317, 0
    %v4221 = vsel %vm1050, %v3613, 0
    %4223 = vmatprep.subr.mxu0 0.0
    %4224 = vmatpush1.xpose.msra.mxu0 %v4221
    %4225 = vmatprep.subr.mxu0 0.0
    %4226 = vmatpush1.xpose.msra.mxu0 0.0
    %4227 = vmatprep.subr.mxu0 0.0
    %4228 = vmatpush1.xpose.msra.mxu0 0.0
    %4229 = vmatprep.subr.mxu0 0.0
    %4230 = vmatpush1.xpose.msra.mxu0 0.0
    %4231 = vmatprep.subr.mxu0 0.0
    %4232 = vmatpush1.xpose.msra.mxu0 0.0
    %4233 = vmatprep.subr.mxu0 0.0
    %4234 = vmatpush1.xpose.msra.mxu0 0.0
    %4235 = vmatprep.subr.mxu0 0.0
    %4236 = vmatpush1.xpose.msra.mxu0 0.0
    %4237 = vmatprep.subr.mxu0 0.0
    %4238 = vmatpush1.xpose.msra.mxu0 0.0
    %4239 = vmatprep.subr.mxu0 0.0
    %4240 = vmatpush1.xpose.msra.mxu0 0.0
    %4241 = vmatprep.subr.mxu0 0.0
    %4242 = vmatpush1.xpose.msra.mxu0 0.0
    %4243 = vmatprep.subr.mxu0 0.0
    %4244 = vmatpush1.xpose.msra.mxu0 0.0
    %4245 = vmatprep.subr.mxu0 0.0
    %4246 = vmatpush1.xpose.msra.mxu0 0.0
    %4247 = vmatprep.subr.mxu0 0.0
    %4248 = vmatpush1.xpose.msra.mxu0 0.0
    %4249 = vmatprep.subr.mxu0 0.0
    %4250 = vmatpush1.xpose.msra.mxu0 0.0
    %4251 = vmatprep.subr.mxu0 0.0
    %4252 = vmatpush1.xpose.msra.mxu0 0.0
    %4253 = vmatprep.subr.mxu0 0.0
    %4254 = vmatpush1.xpose.msra.mxu0 0.0
    %4255 = vmatprep.subr.mxu0 0.0
    %4256 = vmatpush1.xpose.msra.mxu0 0.0
    %4257 = vmatprep.subr.mxu0 0.0
    %4258 = vmatpush1.xpose.msra.mxu0 0.0
    %4259 = vmatprep.subr.mxu0 0.0
    %4260 = vmatpush1.xpose.msra.mxu0 0.0
    %4261 = vmatprep.subr.mxu0 0.0
    %4262 = vmatpush1.xpose.msra.mxu0 0.0
    %4263 = vmatprep.subr.mxu0 0.0
    %4264 = vmatpush1.xpose.msra.mxu0 0.0
    %4265 = vmatprep.subr.mxu0 0.0
    %4266 = vmatpush1.xpose.msra.mxu0 0.0
    %4267 = vmatprep.subr.mxu0 0.0
    %4268 = vmatpush1.xpose.msra.mxu0 0.0
    %4269 = vmatprep.subr.mxu0 0.0
    %4270 = vmatpush1.xpose.msra.mxu0 0.0
    %4271 = vmatprep.subr.mxu0 0.0
    %4272 = vmatpush1.xpose.msra.mxu0 0.0
    %4273 = vmatprep.subr.mxu0 0.0
    %4274 = vmatpush1.xpose.msra.mxu0 0.0
    %4275 = vmatprep.subr.mxu0 0.0
    %4276 = vmatpush1.xpose.msra.mxu0 0.0
    %4277 = vmatprep.subr.mxu0 0.0
    %4278 = vmatpush1.xpose.msra.mxu0 0.0
    %4279 = vmatprep.subr.mxu0 0.0
    %4280 = vmatpush1.xpose.msra.mxu0 0.0
    %4281 = vmatprep.subr.mxu0 0.0
    %4282 = vmatpush1.xpose.msra.mxu0 0.0
    %4283 = vmatprep.subr.mxu0 0.0
    %4284 = vmatpush1.xpose.msra.mxu0 0.0
    %4285 = vmatprep.subr.mxu0 0.0
    %4286 = vmatpush1.xpose.msra.mxu0 0.0
    %4287 = vmatprep.mubr.f32.mxu0 0.0
    %4288 = vmatmul.mubr.f32.gmra.mrb[0].mxu0 %v4218
    %v4289 = vpop.f32.mrb[0].mxu0
    %v4290 = vadd.f32 0.0, %v4289
    %v4291 = vpop.f32.mrb[0].mxu0
    %4292 = vdwg.mxu0
    %v4294 = vsel %vm1050, %v3318, 0
    %v4297 = vsel %vm1050, %v3614, 0
    %4299 = vmatprep.subr.mxu0 0.0
    %4300 = vmatpush1.xpose.msra.mxu0 %v4297
    %4301 = vmatprep.subr.mxu0 0.0
    %4302 = vmatpush1.xpose.msra.mxu0 0.0
    %4303 = vmatprep.subr.mxu0 0.0
    %4304 = vmatpush1.xpose.msra.mxu0 0.0
    %4305 = vmatprep.subr.mxu0 0.0
    %4306 = vmatpush1.xpose.msra.mxu0 0.0
    %4307 = vmatprep.subr.mxu0 0.0
    %4308 = vmatpush1.xpose.msra.mxu0 0.0
    %4309 = vmatprep.subr.mxu0 0.0
    %4310 = vmatpush1.xpose.msra.mxu0 0.0
    %4311 = vmatprep.subr.mxu0 0.0
    %4312 = vmatpush1.xpose.msra.mxu0 0.0
    %4313 = vmatprep.subr.mxu0 0.0
    %4314 = vmatpush1.xpose.msra.mxu0 0.0
    %4315 = vmatprep.subr.mxu0 0.0
    %4316 = vmatpush1.xpose.msra.mxu0 0.0
    %4317 = vmatprep.subr.mxu0 0.0
    %4318 = vmatpush1.xpose.msra.mxu0 0.0
    %4319 = vmatprep.subr.mxu0 0.0
    %4320 = vmatpush1.xpose.msra.mxu0 0.0
    %4321 = vmatprep.subr.mxu0 0.0
    %4322 = vmatpush1.xpose.msra.mxu0 0.0
    %4323 = vmatprep.subr.mxu0 0.0
    %4324 = vmatpush1.xpose.msra.mxu0 0.0
    %4325 = vmatprep.subr.mxu0 0.0
    %4326 = vmatpush1.xpose.msra.mxu0 0.0
    %4327 = vmatprep.subr.mxu0 0.0
    %4328 = vmatpush1.xpose.msra.mxu0 0.0
    %4329 = vmatprep.subr.mxu0 0.0
    %4330 = vmatpush1.xpose.msra.mxu0 0.0
    %4331 = vmatprep.subr.mxu0 0.0
    %4332 = vmatpush1.xpose.msra.mxu0 0.0
    %4333 = vmatprep.subr.mxu0 0.0
    %4334 = vmatpush1.xpose.msra.mxu0 0.0
    %4335 = vmatprep.subr.mxu0 0.0
    %4336 = vmatpush1.xpose.msra.mxu0 0.0
    %4337 = vmatprep.subr.mxu0 0.0
    %4338 = vmatpush1.xpose.msra.mxu0 0.0
    %4339 = vmatprep.subr.mxu0 0.0
    %4340 = vmatpush1.xpose.msra.mxu0 0.0
    %4341 = vmatprep.subr.mxu0 0.0
    %4342 = vmatpush1.xpose.msra.mxu0 0.0
    %4343 = vmatprep.subr.mxu0 0.0
    %4344 = vmatpush1.xpose.msra.mxu0 0.0
    %4345 = vmatprep.subr.mxu0 0.0
    %4346 = vmatpush1.xpose.msra.mxu0 0.0
    %4347 = vmatprep.subr.mxu0 0.0
    %4348 = vmatpush1.xpose.msra.mxu0 0.0
    %4349 = vmatprep.subr.mxu0 0.0
    %4350 = vmatpush1.xpose.msra.mxu0 0.0
    %4351 = vmatprep.subr.mxu0 0.0
    %4352 = vmatpush1.xpose.msra.mxu0 0.0
    %4353 = vmatprep.subr.mxu0 0.0
    %4354 = vmatpush1.xpose.msra.mxu0 0.0
    %4355 = vmatprep.subr.mxu0 0.0
    %4356 = vmatpush1.xpose.msra.mxu0 0.0
    %4357 = vmatprep.subr.mxu0 0.0
    %4358 = vmatpush1.xpose.msra.mxu0 0.0
    %4359 = vmatprep.subr.mxu0 0.0
    %4360 = vmatpush1.xpose.msra.mxu0 0.0
    %4361 = vmatprep.subr.mxu0 0.0
    %4362 = vmatpush1.xpose.msra.mxu0 0.0
    %4363 = vmatprep.mubr.f32.mxu0 0.0
    %4364 = vmatmul.mubr.f32.gmra.mrb[0].mxu0 %v4294
    %v4365 = vpop.f32.mrb[0].mxu0
    %v4366 = vadd.f32 0.0, %v4365
    %v4367 = vpop.f32.mrb[0].mxu0
    %4368 = vdwg.mxu0
    %v4370 = vsel %vm1050, %v3319, 0
    %v4373 = vsel %vm1050, %v3615, 0
    %4375 = vmatprep.subr.mxu0 0.0
    %4376 = vmatpush1.xpose.msra.mxu0 %v4373
    %4377 = vmatprep.subr.mxu0 0.0
    %4378 = vmatpush1.xpose.msra.mxu0 0.0
    %4379 = vmatprep.subr.mxu0 0.0
    %4380 = vmatpush1.xpose.msra.mxu0 0.0
    %4381 = vmatprep.subr.mxu0 0.0
    %4382 = vmatpush1.xpose.msra.mxu0 0.0
    %4383 = vmatprep.subr.mxu0 0.0
    %4384 = vmatpush1.xpose.msra.mxu0 0.0
    %4385 = vmatprep.subr.mxu0 0.0
    %4386 = vmatpush1.xpose.msra.mxu0 0.0
    %4387 = vmatprep.subr.mxu0 0.0
    %4388 = vmatpush1.xpose.msra.mxu0 0.0
    %4389 = vmatprep.subr.mxu0 0.0
    %4390 = vmatpush1.xpose.msra.mxu0 0.0
    %4391 = vmatprep.subr.mxu0 0.0
    %4392 = vmatpush1.xpose.msra.mxu0 0.0
    %4393 = vmatprep.subr.mxu0 0.0
    %4394 = vmatpush1.xpose.msra.mxu0 0.0
    %4395 = vmatprep.subr.mxu0 0.0
    %4396 = vmatpush1.xpose.msra.mxu0 0.0
    %4397 = vmatprep.subr.mxu0 0.0
    %4398 = vmatpush1.xpose.msra.mxu0 0.0
    %4399 = vmatprep.subr.mxu0 0.0
    %4400 = vmatpush1.xpose.msra.mxu0 0.0
    %4401 = vmatprep.subr.mxu0 0.0
    %4402 = vmatpush1.xpose.msra.mxu0 0.0
    %4403 = vmatprep.subr.mxu0 0.0
    %4404 = vmatpush1.xpose.msra.mxu0 0.0
    %4405 = vmatprep.subr.mxu0 0.0
    %4406 = vmatpush1.xpose.msra.mxu0 0.0
    %4407 = vmatprep.subr.mxu0 0.0
    %4408 = vmatpush1.xpose.msra.mxu0 0.0
    %4409 = vmatprep.subr.mxu0 0.0
    %4410 = vmatpush1.xpose.msra.mxu0 0.0
    %4411 = vmatprep.subr.mxu0 0.0
    %4412 = vmatpush1.xpose.msra.mxu0 0.0
    %4413 = vmatprep.subr.mxu0 0.0
    %4414 = vmatpush1.xpose.msra.mxu0 0.0
    %4415 = vmatprep.subr.mxu0 0.0
    %4416 = vmatpush1.xpose.msra.mxu0 0.0
    %4417 = vmatprep.subr.mxu0 0.0
    %4418 = vmatpush1.xpose.msra.mxu0 0.0
    %4419 = vmatprep.subr.mxu0 0.0
    %4420 = vmatpush1.xpose.msra.mxu0 0.0
    %4421 = vmatprep.subr.mxu0 0.0
    %4422 = vmatpush1.xpose.msra.mxu0 0.0
    %4423 = vmatprep.subr.mxu0 0.0
    %4424 = vmatpush1.xpose.msra.mxu0 0.0
    %4425 = vmatprep.subr.mxu0 0.0
    %4426 = vmatpush1.xpose.msra.mxu0 0.0
    %4427 = vmatprep.subr.mxu0 0.0
    %4428 = vmatpush1.xpose.msra.mxu0 0.0
    %4429 = vmatprep.subr.mxu0 0.0
    %4430 = vmatpush1.xpose.msra.mxu0 0.0
    %4431 = vmatprep.subr.mxu0 0.0
    %4432 = vmatpush1.xpose.msra.mxu0 0.0
    %4433 = vmatprep.subr.mxu0 0.0
    %4434 = vmatpush1.xpose.msra.mxu0 0.0
    %4435 = vmatprep.subr.mxu0 0.0
    %4436 = vmatpush1.xpose.msra.mxu0 0.0
    %4437 = vmatprep.subr.mxu0 0.0
    %4438 = vmatpush1.xpose.msra.mxu0 0.0
    %4439 = vmatprep.mubr.f32.mxu0 0.0
    %4440 = vmatmul.mubr.f32.gmra.mrb[0].mxu0 %v4370
    %v4441 = vpop.f32.mrb[0].mxu0
    %v4442 = vadd.f32 0.0, %v4441
    %v4443 = vpop.f32.mrb[0].mxu0
    %4444 = vdwg.mxu0
    %v4446 = vsel %vm1050, %v3320, 0
    %v4449 = vsel %vm1050, %v3616, 0
    %4451 = vmatprep.subr.mxu0 0.0
    %4452 = vmatpush1.xpose.msra.mxu0 %v4449
    %4453 = vmatprep.subr.mxu0 0.0
    %4454 = vmatpush1.xpose.msra.mxu0 0.0
    %4455 = vmatprep.subr.mxu0 0.0
    %4456 = vmatpush1.xpose.msra.mxu0 0.0
    %4457 = vmatprep.subr.mxu0 0.0
    %4458 = vmatpush1.xpose.msra.mxu0 0.0
    %4459 = vmatprep.subr.mxu0 0.0
    %4460 = vmatpush1.xpose.msra.mxu0 0.0
    %4461 = vmatprep.subr.mxu0 0.0
    %4462 = vmatpush1.xpose.msra.mxu0 0.0
    %4463 = vmatprep.subr.mxu0 0.0
    %4464 = vmatpush1.xpose.msra.mxu0 0.0
    %4465 = vmatprep.subr.mxu0 0.0
    %4466 = vmatpush1.xpose.msra.mxu0 0.0
    %4467 = vmatprep.subr.mxu0 0.0
    %4468 = vmatpush1.xpose.msra.mxu0 0.0
    %4469 = vmatprep.subr.mxu0 0.0
    %4470 = vmatpush1.xpose.msra.mxu0 0.0
    %4471 = vmatprep.subr.mxu0 0.0
    %4472 = vmatpush1.xpose.msra.mxu0 0.0
    %4473 = vmatprep.subr.mxu0 0.0
    %4474 = vmatpush1.xpose.msra.mxu0 0.0
    %4475 = vmatprep.subr.mxu0 0.0
    %4476 = vmatpush1.xpose.msra.mxu0 0.0
    %4477 = vmatprep.subr.mxu0 0.0
    %4478 = vmatpush1.xpose.msra.mxu0 0.0
    %4479 = vmatprep.subr.mxu0 0.0
    %4480 = vmatpush1.xpose.msra.mxu0 0.0
    %4481 = vmatprep.subr.mxu0 0.0
    %4482 = vmatpush1.xpose.msra.mxu0 0.0
    %4483 = vmatprep.subr.mxu0 0.0
    %4484 = vmatpush1.xpose.msra.mxu0 0.0
    %4485 = vmatprep.subr.mxu0 0.0
    %4486 = vmatpush1.xpose.msra.mxu0 0.0
    %4487 = vmatprep.subr.mxu0 0.0
    %4488 = vmatpush1.xpose.msra.mxu0 0.0
    %4489 = vmatprep.subr.mxu0 0.0
    %4490 = vmatpush1.xpose.msra.mxu0 0.0
    %4491 = vmatprep.subr.mxu0 0.0
    %4492 = vmatpush1.xpose.msra.mxu0 0.0
    %4493 = vmatprep.subr.mxu0 0.0
    %4494 = vmatpush1.xpose.msra.mxu0 0.0
    %4495 = vmatprep.subr.mxu0 0.0
    %4496 = vmatpush1.xpose.msra.mxu0 0.0
    %4497 = vmatprep.subr.mxu0 0.0
    %4498 = vmatpush1.xpose.msra.mxu0 0.0
    %4499 = vmatprep.subr.mxu0 0.0
    %4500 = vmatpush1.xpose.msra.mxu0 0.0
    %4501 = vmatprep.subr.mxu0 0.0
    %4502 = vmatpush1.xpose.msra.mxu0 0.0
    %4503 = vmatprep.subr.mxu0 0.0
    %4504 = vmatpush1.xpose.msra.mxu0 0.0
    %4505 = vmatprep.subr.mxu0 0.0
    %4506 = vmatpush1.xpose.msra.mxu0 0.0
    %4507 = vmatprep.subr.mxu0 0.0
    %4508 = vmatpush1.xpose.msra.mxu0 0.0
    %4509 = vmatprep.subr.mxu0 0.0
    %4510 = vmatpush1.xpose.msra.mxu0 0.0
    %4511 = vmatprep.subr.mxu0 0.0
    %4512 = vmatpush1.xpose.msra.mxu0 0.0
    %4513 = vmatprep.subr.mxu0 0.0
    %4514 = vmatpush1.xpose.msra.mxu0 0.0
    %4515 = vmatprep.mubr.f32.mxu0 0.0
    %4516 = vmatmul.mubr.f32.gmra.mrb[0].mxu0 %v4446
    %v4517 = vpop.f32.mrb[0].mxu0
    %v4518 = vadd.f32 0.0, %v4517
    %v4519 = vpop.f32.mrb[0].mxu0
    %4520 = vdwg.mxu0
    %v4521 = vsel %vm1050, %v3986, -inf
    %4522 = vmax.xlane.f32.xlu0 %v4521
    %v4523 = vpop.xlane.xlu0 %4522
    %v4524 = vsel %vm1050, %v4062, -inf
    %4525 = vmax.xlane.f32.xlu0 %v4524
    %v4526 = vpop.xlane.xlu0 %4525
    %v4527 = vsel %vm1050, %v4138, -inf
    %4528 = vmax.xlane.f32.xlu0 %v4527
    %v4529 = vpop.xlane.xlu0 %4528
    %v4530 = vsel %vm1050, %v4214, -inf
    %4531 = vmax.xlane.f32.xlu0 %v4530
    %v4532 = vpop.xlane.xlu0 %4531
    %v4533 = vsel %vm1050, %v4290, -inf
    %4534 = vmax.xlane.f32.xlu0 %v4533
    %v4535 = vpop.xlane.xlu0 %4534
    %v4536 = vsel %vm1050, %v4366, -inf
    %4537 = vmax.xlane.f32.xlu0 %v4536
    %v4538 = vpop.xlane.xlu0 %4537
    %v4539 = vsel %vm1050, %v4442, -inf
    %4540 = vmax.xlane.f32.xlu0 %v4539
    %v4541 = vpop.xlane.xlu0 %4540
    %v4542 = vsel %vm1050, %v4518, -inf
    %4543 = vmax.xlane.f32.xlu0 %v4542
    %v4544 = vpop.xlane.xlu0 %4543
    %v4545 = vsub.f32 %v3986, %v4523
    %v4546 = vsub.f32 %v4062, %v4526
    %v4547 = vsub.f32 %v4138, %v4529
    %v4548 = vsub.f32 %v4214, %v4532
    %v4549 = vsub.f32 %v4290, %v4535
    %v4550 = vsub.f32 %v4366, %v4538
    %v4551 = vsub.f32 %v4442, %v4541
    %v4552 = vsub.f32 %v4518, %v4544
    %v4553 = vmul.f32 %v4545, 1.442695
    %v4554 = vpow.pop %v4553
    %v4555 = vmul.f32 %v4546, 1.442695
    %v4556 = vpow.pop %v4555
    %v4557 = vmul.f32 %v4547, 1.442695
    %v4558 = vpow.pop %v4557
    %v4559 = vmul.f32 %v4548, 1.442695
    %v4560 = vpow.pop %v4559
    %v4561 = vmul.f32 %v4549, 1.442695
    %v4562 = vpow.pop %v4561
    %v4563 = vmul.f32 %v4550, 1.442695
    %v4564 = vpow.pop %v4563
    %v4565 = vmul.f32 %v4551, 1.442695
    %v4566 = vpow.pop %v4565
    %v4567 = vmul.f32 %v4552, 1.442695
    %v4568 = vpow.pop %v4567
    %v4569 = vsel %vm1050, %v4554, 0.0
    %4570 = vadd.xlane.f32.xlu0 %v4569
    %v4571 = vpop.xlane.xlu0 %4570
    %v4572 = vsel %vm1050, %v4556, 0.0
    %4573 = vadd.xlane.f32.xlu0 %v4572
    %v4574 = vpop.xlane.xlu0 %4573
    %v4575 = vsel %vm1050, %v4558, 0.0
    %4576 = vadd.xlane.f32.xlu0 %v4575
    %v4577 = vpop.xlane.xlu0 %4576
    %v4578 = vsel %vm1050, %v4560, 0.0
    %4579 = vadd.xlane.f32.xlu0 %v4578
    %v4580 = vpop.xlane.xlu0 %4579
    %v4581 = vsel %vm1050, %v4562, 0.0
    %4582 = vadd.xlane.f32.xlu0 %v4581
    %v4583 = vpop.xlane.xlu0 %4582
    %v4584 = vsel %vm1050, %v4564, 0.0
    %4585 = vadd.xlane.f32.xlu0 %v4584
    %v4586 = vpop.xlane.xlu0 %4585
    %v4587 = vsel %vm1050, %v4566, 0.0
    %4588 = vadd.xlane.f32.xlu0 %v4587
    %v4589 = vpop.xlane.xlu0 %4588
    %v4590 = vsel %vm1050, %v4568, 0.0
    %4591 = vadd.xlane.f32.xlu0 %v4590
    %v4592 = vpop.xlane.xlu0 %4591
    %v4593 = vrcp.pop %v4571
    %v4594 = vrcp.pop %v4574
    %v4595 = vrcp.pop %v4577
    %v4596 = vrcp.pop %v4580
    %v4597 = vrcp.pop %v4583
    %v4598 = vrcp.pop %v4586
    %v4599 = vrcp.pop %v4589
    %v4600 = vrcp.pop %v4592
    %v4601 = vmul.f32 %v4554, %v4593
    %v4602 = vmul.f32 %v4556, %v4594
    %v4603 = vmul.f32 %v4558, %v4595
    %v4604 = vmul.f32 %v4560, %v4596
    %v4605 = vmul.f32 %v4562, %v4597
    %v4606 = vmul.f32 %v4564, %v4598
    %v4607 = vmul.f32 %v4566, %v4599
    %v4608 = vmul.f32 %v4568, %v4600
    %v4610 = vsel %vm1050, %v4601, 0
    %4612 = vmatprep.subr.mxu0 0.0
    %4613 = vmatpush1.msra.mxu0 %v3841
    %4614 = vmatprep.subr.mxu0 0.0
    %4615 = vmatpush1.msra.mxu0 0.0
    %4616 = vmatprep.subr.mxu0 0.0
    %4617 = vmatpush1.msra.mxu0 0.0
    %4618 = vmatprep.subr.mxu0 0.0
    %4619 = vmatpush1.msra.mxu0 0.0
    %4620 = vmatprep.subr.mxu0 0.0
    %4621 = vmatpush1.msra.mxu0 0.0
    %4622 = vmatprep.subr.mxu0 0.0
    %4623 = vmatpush1.msra.mxu0 0.0
    %4624 = vmatprep.subr.mxu0 0.0
    %4625 = vmatpush1.msra.mxu0 0.0
    %4626 = vmatprep.subr.mxu0 0.0
    %4627 = vmatpush1.msra.mxu0 0.0
    %4628 = vmatprep.subr.mxu0 0.0
    %4629 = vmatpush1.msra.mxu0 0.0
    %4630 = vmatprep.subr.mxu0 0.0
    %4631 = vmatpush1.msra.mxu0 0.0
    %4632 = vmatprep.subr.mxu0 0.0
    %4633 = vmatpush1.msra.mxu0 0.0
    %4634 = vmatprep.subr.mxu0 0.0
    %4635 = vmatpush1.msra.mxu0 0.0
    %4636 = vmatprep.subr.mxu0 0.0
    %4637 = vmatpush1.msra.mxu0 0.0
    %4638 = vmatprep.subr.mxu0 0.0
    %4639 = vmatpush1.msra.mxu0 0.0
    %4640 = vmatprep.subr.mxu0 0.0
    %4641 = vmatpush1.msra.mxu0 0.0
    %4642 = vmatprep.subr.mxu0 0.0
    %4643 = vmatpush1.msra.mxu0 0.0
    %4644 = vmatprep.subr.mxu0 0.0
    %4645 = vmatpush1.msra.mxu0 0.0
    %4646 = vmatprep.subr.mxu0 0.0
    %4647 = vmatpush1.msra.mxu0 0.0
    %4648 = vmatprep.subr.mxu0 0.0
    %4649 = vmatpush1.msra.mxu0 0.0
    %4650 = vmatprep.subr.mxu0 0.0
    %4651 = vmatpush1.msra.mxu0 0.0
    %4652 = vmatprep.subr.mxu0 0.0
    %4653 = vmatpush1.msra.mxu0 0.0
    %4654 = vmatprep.subr.mxu0 0.0
    %4655 = vmatpush1.msra.mxu0 0.0
    %4656 = vmatprep.subr.mxu0 0.0
    %4657 = vmatpush1.msra.mxu0 0.0
    %4658 = vmatprep.subr.mxu0 0.0
    %4659 = vmatpush1.msra.mxu0 0.0
    %4660 = vmatprep.subr.mxu0 0.0
    %4661 = vmatpush1.msra.mxu0 0.0
    %4662 = vmatprep.subr.mxu0 0.0
    %4663 = vmatpush1.msra.mxu0 0.0
    %4664 = vmatprep.subr.mxu0 0.0
    %4665 = vmatpush1.msra.mxu0 0.0
    %4666 = vmatprep.subr.mxu0 0.0
    %4667 = vmatpush1.msra.mxu0 0.0
    %4668 = vmatprep.subr.mxu0 0.0
    %4669 = vmatpush1.msra.mxu0 0.0
    %4670 = vmatprep.subr.mxu0 0.0
    %4671 = vmatpush1.msra.mxu0 0.0
    %4672 = vmatprep.subr.mxu0 0.0
    %4673 = vmatpush1.msra.mxu0 0.0
    %4674 = vmatprep.subr.mxu0 0.0
    %4675 = vmatpush1.msra.mxu0 0.0
    %4676 = vmatprep.mubr.f32.mxu0 0.0
    %4677 = vmatmul.mubr.f32.gmra.mrb[0].mxu0 %v4610
    %v4678 = vpop.f32.mrb[0].mxu0
    %v4679 = vadd.f32 0.0, %v4678
    %v4680 = vpop.f32.mrb[0].mxu0
    %4681 = vdwg.mxu0
    %v4683 = vsel %vm1050, %v4602, 0
    %4685 = vmatprep.subr.mxu0 0.0
    %4686 = vmatpush1.msra.mxu0 %v3842
    %4687 = vmatprep.subr.mxu0 0.0
    %4688 = vmatpush1.msra.mxu0 0.0
    %4689 = vmatprep.subr.mxu0 0.0
    %4690 = vmatpush1.msra.mxu0 0.0
    %4691 = vmatprep.subr.mxu0 0.0
    %4692 = vmatpush1.msra.mxu0 0.0
    %4693 = vmatprep.subr.mxu0 0.0
    %4694 = vmatpush1.msra.mxu0 0.0
    %4695 = vmatprep.subr.mxu0 0.0
    %4696 = vmatpush1.msra.mxu0 0.0
    %4697 = vmatprep.subr.mxu0 0.0
    %4698 = vmatpush1.msra.mxu0 0.0
    %4699 = vmatprep.subr.mxu0 0.0
    %4700 = vmatpush1.msra.mxu0 0.0
    %4701 = vmatprep.subr.mxu0 0.0
    %4702 = vmatpush1.msra.mxu0 0.0
    %4703 = vmatprep.subr.mxu0 0.0
    %4704 = vmatpush1.msra.mxu0 0.0
    %4705 = vmatprep.subr.mxu0 0.0
    %4706 = vmatpush1.msra.mxu0 0.0
    %4707 = vmatprep.subr.mxu0 0.0
    %4708 = vmatpush1.msra.mxu0 0.0
    %4709 = vmatprep.subr.mxu0 0.0
    %4710 = vmatpush1.msra.mxu0 0.0
    %4711 = vmatprep.subr.mxu0 0.0
    %4712 = vmatpush1.msra.mxu0 0.0
    %4713 = vmatprep.subr.mxu0 0.0
    %4714 = vmatpush1.msra.mxu0 0.0
    %4715 = vmatprep.subr.mxu0 0.0
    %4716 = vmatpush1.msra.mxu0 0.0
    %4717 = vmatprep.subr.mxu0 0.0
    %4718 = vmatpush1.msra.mxu0 0.0
    %4719 = vmatprep.subr.mxu0 0.0
    %4720 = vmatpush1.msra.mxu0 0.0
    %4721 = vmatprep.subr.mxu0 0.0
    %4722 = vmatpush1.msra.mxu0 0.0
    %4723 = vmatprep.subr.mxu0 0.0
    %4724 = vmatpush1.msra.mxu0 0.0
    %4725 = vmatprep.subr.mxu0 0.0
    %4726 = vmatpush1.msra.mxu0 0.0
    %4727 = vmatprep.subr.mxu0 0.0
    %4728 = vmatpush1.msra.mxu0 0.0
    %4729 = vmatprep.subr.mxu0 0.0
    %4730 = vmatpush1.msra.mxu0 0.0
    %4731 = vmatprep.subr.mxu0 0.0
    %4732 = vmatpush1.msra.mxu0 0.0
    %4733 = vmatprep.subr.mxu0 0.0
    %4734 = vmatpush1.msra.mxu0 0.0
    %4735 = vmatprep.subr.mxu0 0.0
    %4736 = vmatpush1.msra.mxu0 0.0
    %4737 = vmatprep.subr.mxu0 0.0
    %4738 = vmatpush1.msra.mxu0 0.0
    %4739 = vmatprep.subr.mxu0 0.0
    %4740 = vmatpush1.msra.mxu0 0.0
    %4741 = vmatprep.subr.mxu0 0.0
    %4742 = vmatpush1.msra.mxu0 0.0
    %4743 = vmatprep.subr.mxu0 0.0
    %4744 = vmatpush1.msra.mxu0 0.0
    %4745 = vmatprep.subr.mxu0 0.0
    %4746 = vmatpush1.msra.mxu0 0.0
    %4747 = vmatprep.subr.mxu0 0.0
    %4748 = vmatpush1.msra.mxu0 0.0
    %4749 = vmatprep.mubr.f32.mxu0 0.0
    %4750 = vmatmul.mubr.f32.gmra.mrb[0].mxu0 %v4683
    %v4751 = vpop.f32.mrb[0].mxu0
    %v4752 = vadd.f32 0.0, %v4751
    %v4753 = vpop.f32.mrb[0].mxu0
    %4754 = vdwg.mxu0
    %v4756 = vsel %vm1050, %v4603, 0
    %4758 = vmatprep.subr.mxu0 0.0
    %4759 = vmatpush1.msra.mxu0 %v3843
    %4760 = vmatprep.subr.mxu0 0.0
    %4761 = vmatpush1.msra.mxu0 0.0
    %4762 = vmatprep.subr.mxu0 0.0
    %4763 = vmatpush1.msra.mxu0 0.0
    %4764 = vmatprep.subr.mxu0 0.0
    %4765 = vmatpush1.msra.mxu0 0.0
    %4766 = vmatprep.subr.mxu0 0.0
    %4767 = vmatpush1.msra.mxu0 0.0
    %4768 = vmatprep.subr.mxu0 0.0
    %4769 = vmatpush1.msra.mxu0 0.0
    %4770 = vmatprep.subr.mxu0 0.0
    %4771 = vmatpush1.msra.mxu0 0.0
    %4772 = vmatprep.subr.mxu0 0.0
    %4773 = vmatpush1.msra.mxu0 0.0
    %4774 = vmatprep.subr.mxu0 0.0
    %4775 = vmatpush1.msra.mxu0 0.0
    %4776 = vmatprep.subr.mxu0 0.0
    %4777 = vmatpush1.msra.mxu0 0.0
    %4778 = vmatprep.subr.mxu0 0.0
    %4779 = vmatpush1.msra.mxu0 0.0
    %4780 = vmatprep.subr.mxu0 0.0
    %4781 = vmatpush1.msra.mxu0 0.0
    %4782 = vmatprep.subr.mxu0 0.0
    %4783 = vmatpush1.msra.mxu0 0.0
    %4784 = vmatprep.subr.mxu0 0.0
    %4785 = vmatpush1.msra.mxu0 0.0
    %4786 = vmatprep.subr.mxu0 0.0
    %4787 = vmatpush1.msra.mxu0 0.0
    %4788 = vmatprep.subr.mxu0 0.0
    %4789 = vmatpush1.msra.mxu0 0.0
    %4790 = vmatprep.subr.mxu0 0.0
    %4791 = vmatpush1.msra.mxu0 0.0
    %4792 = vmatprep.subr.mxu0 0.0
    %4793 = vmatpush1.msra.mxu0 0.0
    %4794 = vmatprep.subr.mxu0 0.0
    %4795 = vmatpush1.msra.mxu0 0.0
    %4796 = vmatprep.subr.mxu0 0.0
    %4797 = vmatpush1.msra.mxu0 0.0
    %4798 = vmatprep.subr.mxu0 0.0
    %4799 = vmatpush1.msra.mxu0 0.0
    %4800 = vmatprep.subr.mxu0 0.0
    %4801 = vmatpush1.msra.mxu0 0.0
    %4802 = vmatprep.subr.mxu0 0.0
    %4803 = vmatpush1.msra.mxu0 0.0
    %4804 = vmatprep.subr.mxu0 0.0
    %4805 = vmatpush1.msra.mxu0 0.0
    %4806 = vmatprep.subr.mxu0 0.0
    %4807 = vmatpush1.msra.mxu0 0.0
    %4808 = vmatprep.subr.mxu0 0.0
    %4809 = vmatpush1.msra.mxu0 0.0
    %4810 = vmatprep.subr.mxu0 0.0
    %4811 = vmatpush1.msra.mxu0 0.0
    %4812 = vmatprep.subr.mxu0 0.0
    %4813 = vmatpush1.msra.mxu0 0.0
    %4814 = vmatprep.subr.mxu0 0.0
    %4815 = vmatpush1.msra.mxu0 0.0
    %4816 = vmatprep.subr.mxu0 0.0
    %4817 = vmatpush1.msra.mxu0 0.0
    %4818 = vmatprep.subr.mxu0 0.0
    %4819 = vmatpush1.msra.mxu0 0.0
    %4820 = vmatprep.subr.mxu0 0.0
    %4821 = vmatpush1.msra.mxu0 0.0
    %4822 = vmatprep.mubr.f32.mxu0 0.0
    %4823 = vmatmul.mubr.f32.gmra.mrb[0].mxu0 %v4756
    %v4824 = vpop.f32.mrb[0].mxu0
    %v4825 = vadd.f32 0.0, %v4824
    %v4826 = vpop.f32.mrb[0].mxu0
    %4827 = vdwg.mxu0
    %v4829 = vsel %vm1050, %v4604, 0
    %4831 = vmatprep.subr.mxu0 0.0
    %4832 = vmatpush1.msra.mxu0 %v3844
    %4833 = vmatprep.subr.mxu0 0.0
    %4834 = vmatpush1.msra.mxu0 0.0
    %4835 = vmatprep.subr.mxu0 0.0
    %4836 = vmatpush1.msra.mxu0 0.0
    %4837 = vmatprep.subr.mxu0 0.0
    %4838 = vmatpush1.msra.mxu0 0.0
    %4839 = vmatprep.subr.mxu0 0.0
    %4840 = vmatpush1.msra.mxu0 0.0
    %4841 = vmatprep.subr.mxu0 0.0
    %4842 = vmatpush1.msra.mxu0 0.0
    %4843 = vmatprep.subr.mxu0 0.0
    %4844 = vmatpush1.msra.mxu0 0.0
    %4845 = vmatprep.subr.mxu0 0.0
    %4846 = vmatpush1.msra.mxu0 0.0
    %4847 = vmatprep.subr.mxu0 0.0
    %4848 = vmatpush1.msra.mxu0 0.0
    %4849 = vmatprep.subr.mxu0 0.0
    %4850 = vmatpush1.msra.mxu0 0.0
    %4851 = vmatprep.subr.mxu0 0.0
    %4852 = vmatpush1.msra.mxu0 0.0
    %4853 = vmatprep.subr.mxu0 0.0
    %4854 = vmatpush1.msra.mxu0 0.0
    %4855 = vmatprep.subr.mxu0 0.0
    %4856 = vmatpush1.msra.mxu0 0.0
    %4857 = vmatprep.subr.mxu0 0.0
    %4858 = vmatpush1.msra.mxu0 0.0
    %4859 = vmatprep.subr.mxu0 0.0
    %4860 = vmatpush1.msra.mxu0 0.0
    %4861 = vmatprep.subr.mxu0 0.0
    %4862 = vmatpush1.msra.mxu0 0.0
    %4863 = vmatprep.subr.mxu0 0.0
    %4864 = vmatpush1.msra.mxu0 0.0
    %4865 = vmatprep.subr.mxu0 0.0
    %4866 = vmatpush1.msra.mxu0 0.0
    %4867 = vmatprep.subr.mxu0 0.0
    %4868 = vmatpush1.msra.mxu0 0.0
    %4869 = vmatprep.subr.mxu0 0.0
    %4870 = vmatpush1.msra.mxu0 0.0
    %4871 = vmatprep.subr.mxu0 0.0
    %4872 = vmatpush1.msra.mxu0 0.0
    %4873 = vmatprep.subr.mxu0 0.0
    %4874 = vmatpush1.msra.mxu0 0.0
    %4875 = vmatprep.subr.mxu0 0.0
    %4876 = vmatpush1.msra.mxu0 0.0
    %4877 = vmatprep.subr.mxu0 0.0
    %4878 = vmatpush1.msra.mxu0 0.0
    %4879 = vmatprep.subr.mxu0 0.0
    %4880 = vmatpush1.msra.mxu0 0.0
    %4881 = vmatprep.subr.mxu0 0.0
    %4882 = vmatpush1.msra.mxu0 0.0
    %4883 = vmatprep.subr.mxu0 0.0
    %4884 = vmatpush1.msra.mxu0 0.0
    %4885 = vmatprep.subr.mxu0 0.0
    %4886 = vmatpush1.msra.mxu0 0.0
    %4887 = vmatprep.subr.mxu0 0.0
    %4888 = vmatpush1.msra.mxu0 0.0
    %4889 = vmatprep.subr.mxu0 0.0
    %4890 = vmatpush1.msra.mxu0 0.0
    %4891 = vmatprep.subr.mxu0 0.0
    %4892 = vmatpush1.msra.mxu0 0.0
    %4893 = vmatprep.subr.mxu0 0.0
    %4894 = vmatpush1.msra.mxu0 0.0
    %4895 = vmatprep.mubr.f32.mxu0 0.0
    %4896 = vmatmul.mubr.f32.gmra.mrb[0].mxu0 %v4829
    %v4897 = vpop.f32.mrb[0].mxu0
    %v4898 = vadd.f32 0.0, %v4897
    %v4899 = vpop.f32.mrb[0].mxu0
    %4900 = vdwg.mxu0
    %v4902 = vsel %vm1050, %v4605, 0
    %4904 = vmatprep.subr.mxu0 0.0
    %4905 = vmatpush1.msra.mxu0 %v3909
    %4906 = vmatprep.subr.mxu0 0.0
    %4907 = vmatpush1.msra.mxu0 0.0
    %4908 = vmatprep.subr.mxu0 0.0
    %4909 = vmatpush1.msra.mxu0 0.0
    %4910 = vmatprep.subr.mxu0 0.0
    %4911 = vmatpush1.msra.mxu0 0.0
    %4912 = vmatprep.subr.mxu0 0.0
    %4913 = vmatpush1.msra.mxu0 0.0
    %4914 = vmatprep.subr.mxu0 0.0
    %4915 = vmatpush1.msra.mxu0 0.0
    %4916 = vmatprep.subr.mxu0 0.0
    %4917 = vmatpush1.msra.mxu0 0.0
    %4918 = vmatprep.subr.mxu0 0.0
    %4919 = vmatpush1.msra.mxu0 0.0
    %4920 = vmatprep.subr.mxu0 0.0
    %4921 = vmatpush1.msra.mxu0 0.0
    %4922 = vmatprep.subr.mxu0 0.0
    %4923 = vmatpush1.msra.mxu0 0.0
    %4924 = vmatprep.subr.mxu0 0.0
    %4925 = vmatpush1.msra.mxu0 0.0
    %4926 = vmatprep.subr.mxu0 0.0
    %4927 = vmatpush1.msra.mxu0 0.0
    %4928 = vmatprep.subr.mxu0 0.0
    %4929 = vmatpush1.msra.mxu0 0.0
    %4930 = vmatprep.subr.mxu0 0.0
    %4931 = vmatpush1.msra.mxu0 0.0
    %4932 = vmatprep.subr.mxu0 0.0
    %4933 = vmatpush1.msra.mxu0 0.0
    %4934 = vmatprep.subr.mxu0 0.0
    %4935 = vmatpush1.msra.mxu0 0.0
    %4936 = vmatprep.subr.mxu0 0.0
    %4937 = vmatpush1.msra.mxu0 0.0
    %4938 = vmatprep.subr.mxu0 0.0
    %4939 = vmatpush1.msra.mxu0 0.0
    %4940 = vmatprep.subr.mxu0 0.0
    %4941 = vmatpush1.msra.mxu0 0.0
    %4942 = vmatprep.subr.mxu0 0.0
    %4943 = vmatpush1.msra.mxu0 0.0
    %4944 = vmatprep.subr.mxu0 0.0
    %4945 = vmatpush1.msra.mxu0 0.0
    %4946 = vmatprep.subr.mxu0 0.0
    %4947 = vmatpush1.msra.mxu0 0.0
    %4948 = vmatprep.subr.mxu0 0.0
    %4949 = vmatpush1.msra.mxu0 0.0
    %4950 = vmatprep.subr.mxu0 0.0
    %4951 = vmatpush1.msra.mxu0 0.0
    %4952 = vmatprep.subr.mxu0 0.0
    %4953 = vmatpush1.msra.mxu0 0.0
    %4954 = vmatprep.subr.mxu0 0.0
    %4955 = vmatpush1.msra.mxu0 0.0
    %4956 = vmatprep.subr.mxu0 0.0
    %4957 = vmatpush1.msra.mxu0 0.0
    %4958 = vmatprep.subr.mxu0 0.0
    %4959 = vmatpush1.msra.mxu0 0.0
    %4960 = vmatprep.subr.mxu0 0.0
    %4961 = vmatpush1.msra.mxu0 0.0
    %4962 = vmatprep.subr.mxu0 0.0
    %4963 = vmatpush1.msra.mxu0 0.0
    %4964 = vmatprep.subr.mxu0 0.0
    %4965 = vmatpush1.msra.mxu0 0.0
    %4966 = vmatprep.subr.mxu0 0.0
    %4967 = vmatpush1.msra.mxu0 0.0
    %4968 = vmatprep.mubr.f32.mxu0 0.0
    %4969 = vmatmul.mubr.f32.gmra.mrb[0].mxu0 %v4902
    %v4970 = vpop.f32.mrb[0].mxu0
    %v4971 = vadd.f32 0.0, %v4970
    %v4972 = vpop.f32.mrb[0].mxu0
    %4973 = vdwg.mxu0
    %v4975 = vsel %vm1050, %v4606, 0
    %4977 = vmatprep.subr.mxu0 0.0
    %4978 = vmatpush1.msra.mxu0 %v3910
    %4979 = vmatprep.subr.mxu0 0.0
    %4980 = vmatpush1.msra.mxu0 0.0
    %4981 = vmatprep.subr.mxu0 0.0
    %4982 = vmatpush1.msra.mxu0 0.0
    %4983 = vmatprep.subr.mxu0 0.0
    %4984 = vmatpush1.msra.mxu0 0.0
    %4985 = vmatprep.subr.mxu0 0.0
    %4986 = vmatpush1.msra.mxu0 0.0
    %4987 = vmatprep.subr.mxu0 0.0
    %4988 = vmatpush1.msra.mxu0 0.0
    %4989 = vmatprep.subr.mxu0 0.0
    %4990 = vmatpush1.msra.mxu0 0.0
    %4991 = vmatprep.subr.mxu0 0.0
    %4992 = vmatpush1.msra.mxu0 0.0
    %4993 = vmatprep.subr.mxu0 0.0
    %4994 = vmatpush1.msra.mxu0 0.0
    %4995 = vmatprep.subr.mxu0 0.0
    %4996 = vmatpush1.msra.mxu0 0.0
    %4997 = vmatprep.subr.mxu0 0.0
    %4998 = vmatpush1.msra.mxu0 0.0
    %4999 = vmatprep.subr.mxu0 0.0
    %5000 = vmatpush1.msra.mxu0 0.0
    %5001 = vmatprep.subr.mxu0 0.0
    %5002 = vmatpush1.msra.mxu0 0.0
    %5003 = vmatprep.subr.mxu0 0.0
    %5004 = vmatpush1.msra.mxu0 0.0
    %5005 = vmatprep.subr.mxu0 0.0
    %5006 = vmatpush1.msra.mxu0 0.0
    %5007 = vmatprep.subr.mxu0 0.0
    %5008 = vmatpush1.msra.mxu0 0.0
    %5009 = vmatprep.subr.mxu0 0.0
    %5010 = vmatpush1.msra.mxu0 0.0
    %5011 = vmatprep.subr.mxu0 0.0
    %5012 = vmatpush1.msra.mxu0 0.0
    %5013 = vmatprep.subr.mxu0 0.0
    %5014 = vmatpush1.msra.mxu0 0.0
    %5015 = vmatprep.subr.mxu0 0.0
    %5016 = vmatpush1.msra.mxu0 0.0
    %5017 = vmatprep.subr.mxu0 0.0
    %5018 = vmatpush1.msra.mxu0 0.0
    %5019 = vmatprep.subr.mxu0 0.0
    %5020 = vmatpush1.msra.mxu0 0.0
    %5021 = vmatprep.subr.mxu0 0.0
    %5022 = vmatpush1.msra.mxu0 0.0
    %5023 = vmatprep.subr.mxu0 0.0
    %5024 = vmatpush1.msra.mxu0 0.0
    %5025 = vmatprep.subr.mxu0 0.0
    %5026 = vmatpush1.msra.mxu0 0.0
    %5027 = vmatprep.subr.mxu0 0.0
    %5028 = vmatpush1.msra.mxu0 0.0
    %5029 = vmatprep.subr.mxu0 0.0
    %5030 = vmatpush1.msra.mxu0 0.0
    %5031 = vmatprep.subr.mxu0 0.0
    %5032 = vmatpush1.msra.mxu0 0.0
    %5033 = vmatprep.subr.mxu0 0.0
    %5034 = vmatpush1.msra.mxu0 0.0
    %5035 = vmatprep.subr.mxu0 0.0
    %5036 = vmatpush1.msra.mxu0 0.0
    %5037 = vmatprep.subr.mxu0 0.0
    %5038 = vmatpush1.msra.mxu0 0.0
    %5039 = vmatprep.subr.mxu0 0.0
    %5040 = vmatpush1.msra.mxu0 0.0
    %5041 = vmatprep.mubr.f32.mxu0 0.0
    %5042 = vmatmul.mubr.f32.gmra.mrb[0].mxu0 %v4975
    %v5043 = vpop.f32.mrb[0].mxu0
    %v5044 = vadd.f32 0.0, %v5043
    %v5045 = vpop.f32.mrb[0].mxu0
    %5046 = vdwg.mxu0
    %v5048 = vsel %vm1050, %v4607, 0
    %5050 = vmatprep.subr.mxu0 0.0
    %5051 = vmatpush1.msra.mxu0 %v3911
    %5052 = vmatprep.subr.mxu0 0.0
    %5053 = vmatpush1.msra.mxu0 0.0
    %5054 = vmatprep.subr.mxu0 0.0
    %5055 = vmatpush1.msra.mxu0 0.0
    %5056 = vmatprep.subr.mxu0 0.0
    %5057 = vmatpush1.msra.mxu0 0.0
    %5058 = vmatprep.subr.mxu0 0.0
    %5059 = vmatpush1.msra.mxu0 0.0
    %5060 = vmatprep.subr.mxu0 0.0
    %5061 = vmatpush1.msra.mxu0 0.0
    %5062 = vmatprep.subr.mxu0 0.0
    %5063 = vmatpush1.msra.mxu0 0.0
    %5064 = vmatprep.subr.mxu0 0.0
    %5065 = vmatpush1.msra.mxu0 0.0
    %5066 = vmatprep.subr.mxu0 0.0
    %5067 = vmatpush1.msra.mxu0 0.0
    %5068 = vmatprep.subr.mxu0 0.0
    %5069 = vmatpush1.msra.mxu0 0.0
    %5070 = vmatprep.subr.mxu0 0.0
    %5071 = vmatpush1.msra.mxu0 0.0
    %5072 = vmatprep.subr.mxu0 0.0
    %5073 = vmatpush1.msra.mxu0 0.0
    %5074 = vmatprep.subr.mxu0 0.0
    %5075 = vmatpush1.msra.mxu0 0.0
    %5076 = vmatprep.subr.mxu0 0.0
    %5077 = vmatpush1.msra.mxu0 0.0
    %5078 = vmatprep.subr.mxu0 0.0
    %5079 = vmatpush1.msra.mxu0 0.0
    %5080 = vmatprep.subr.mxu0 0.0
    %5081 = vmatpush1.msra.mxu0 0.0
    %5082 = vmatprep.subr.mxu0 0.0
    %5083 = vmatpush1.msra.mxu0 0.0
    %5084 = vmatprep.subr.mxu0 0.0
    %5085 = vmatpush1.msra.mxu0 0.0
    %5086 = vmatprep.subr.mxu0 0.0
    %5087 = vmatpush1.msra.mxu0 0.0
    %5088 = vmatprep.subr.mxu0 0.0
    %5089 = vmatpush1.msra.mxu0 0.0
    %5090 = vmatprep.subr.mxu0 0.0
    %5091 = vmatpush1.msra.mxu0 0.0
    %5092 = vmatprep.subr.mxu0 0.0
    %5093 = vmatpush1.msra.mxu0 0.0
    %5094 = vmatprep.subr.mxu0 0.0
    %5095 = vmatpush1.msra.mxu0 0.0
    %5096 = vmatprep.subr.mxu0 0.0
    %5097 = vmatpush1.msra.mxu0 0.0
    %5098 = vmatprep.subr.mxu0 0.0
    %5099 = vmatpush1.msra.mxu0 0.0
    %5100 = vmatprep.subr.mxu0 0.0
    %5101 = vmatpush1.msra.mxu0 0.0
    %5102 = vmatprep.subr.mxu0 0.0
    %5103 = vmatpush1.msra.mxu0 0.0
    %5104 = vmatprep.subr.mxu0 0.0
    %5105 = vmatpush1.msra.mxu0 0.0
    %5106 = vmatprep.subr.mxu0 0.0
    %5107 = vmatpush1.msra.mxu0 0.0
    %5108 = vmatprep.subr.mxu0 0.0
    %5109 = vmatpush1.msra.mxu0 0.0
    %5110 = vmatprep.subr.mxu0 0.0
    %5111 = vmatpush1.msra.mxu0 0.0
    %5112 = vmatprep.subr.mxu0 0.0
    %5113 = vmatpush1.msra.mxu0 0.0
    %5114 = vmatprep.mubr.f32.mxu0 0.0
    %5115 = vmatmul.mubr.f32.gmra.mrb[0].mxu0 %v5048
    %v5116 = vpop.f32.mrb[0].mxu0
    %v5117 = vadd.f32 0.0, %v5116
    %v5118 = vpop.f32.mrb[0].mxu0
    %5119 = vdwg.mxu0
    %v5121 = vsel %vm1050, %v4608, 0
    %5123 = vmatprep.subr.mxu0 0.0
    %5124 = vmatpush1.msra.mxu0 %v3912
    %5125 = vmatprep.subr.mxu0 0.0
    %5126 = vmatpush1.msra.mxu0 0.0
    %5127 = vmatprep.subr.mxu0 0.0
    %5128 = vmatpush1.msra.mxu0 0.0
    %5129 = vmatprep.subr.mxu0 0.0
    %5130 = vmatpush1.msra.mxu0 0.0
    %5131 = vmatprep.subr.mxu0 0.0
    %5132 = vmatpush1.msra.mxu0 0.0
    %5133 = vmatprep.subr.mxu0 0.0
    %5134 = vmatpush1.msra.mxu0 0.0
    %5135 = vmatprep.subr.mxu0 0.0
    %5136 = vmatpush1.msra.mxu0 0.0
    %5137 = vmatprep.subr.mxu0 0.0
    %5138 = vmatpush1.msra.mxu0 0.0
    %5139 = vmatprep.subr.mxu0 0.0
    %5140 = vmatpush1.msra.mxu0 0.0
    %5141 = vmatprep.subr.mxu0 0.0
    %5142 = vmatpush1.msra.mxu0 0.0
    %5143 = vmatprep.subr.mxu0 0.0
    %5144 = vmatpush1.msra.mxu0 0.0
    %5145 = vmatprep.subr.mxu0 0.0
    %5146 = vmatpush1.msra.mxu0 0.0
    %5147 = vmatprep.subr.mxu0 0.0
    %5148 = vmatpush1.msra.mxu0 0.0
    %5149 = vmatprep.subr.mxu0 0.0
    %5150 = vmatpush1.msra.mxu0 0.0
    %5151 = vmatprep.subr.mxu0 0.0
    %5152 = vmatpush1.msra.mxu0 0.0
    %5153 = vmatprep.subr.mxu0 0.0
    %5154 = vmatpush1.msra.mxu0 0.0
    %5155 = vmatprep.subr.mxu0 0.0
    %5156 = vmatpush1.msra.mxu0 0.0
    %5157 = vmatprep.subr.mxu0 0.0
    %5158 = vmatpush1.msra.mxu0 0.0
    %5159 = vmatprep.subr.mxu0 0.0
    %5160 = vmatpush1.msra.mxu0 0.0
    %5161 = vmatprep.subr.mxu0 0.0
    %5162 = vmatpush1.msra.mxu0 0.0
    %5163 = vmatprep.subr.mxu0 0.0
    %5164 = vmatpush1.msra.mxu0 0.0
    %5165 = vmatprep.subr.mxu0 0.0
    %5166 = vmatpush1.msra.mxu0 0.0
    %5167 = vmatprep.subr.mxu0 0.0
    %5168 = vmatpush1.msra.mxu0 0.0
    %5169 = vmatprep.subr.mxu0 0.0
    %5170 = vmatpush1.msra.mxu0 0.0
    %5171 = vmatprep.subr.mxu0 0.0
    %5172 = vmatpush1.msra.mxu0 0.0
    %5173 = vmatprep.subr.mxu0 0.0
    %5174 = vmatpush1.msra.mxu0 0.0
    %5175 = vmatprep.subr.mxu0 0.0
    %5176 = vmatpush1.msra.mxu0 0.0
    %5177 = vmatprep.subr.mxu0 0.0
    %5178 = vmatpush1.msra.mxu0 0.0
    %5179 = vmatprep.subr.mxu0 0.0
    %5180 = vmatpush1.msra.mxu0 0.0
    %5181 = vmatprep.subr.mxu0 0.0
    %5182 = vmatpush1.msra.mxu0 0.0
    %5183 = vmatprep.subr.mxu0 0.0
    %5184 = vmatpush1.msra.mxu0 0.0
    %5185 = vmatprep.subr.mxu0 0.0
    %5186 = vmatpush1.msra.mxu0 0.0
    %5187 = vmatprep.mubr.f32.mxu0 0.0
    %5188 = vmatmul.mubr.f32.gmra.mrb[0].mxu0 %v5121
    %v5189 = vpop.f32.mrb[0].mxu0
    %v5190 = vadd.f32 0.0, %v5189
    %v5191 = vpop.f32.mrb[0].mxu0
    %5192 = vdwg.mxu0
    %v5193 = vcombine.low %v4679, %v4825
    %v5194 = vcombine.high %v4679, %v4825
    %v5196 = vunpack.c.l.s4 1983009808
    %v5197 = vunpack.c.0.s8 %v5196
    %v5198 = vlaneseq
    %v5199 = vshrl.u32 %v5198, 7
    %v5200 = vsub.s32 %v5197, %v5199
    %v5201 = vrot.slane %v5193, %v5200
    %v5203 = vunpack.c.l.s4 1983009808
    %v5204 = vunpack.c.0.s8 %v5203
    %v5205 = vlaneseq
    %v5206 = vshrl.u32 %v5205, 7
    %v5207 = vsub.s32 %v5204, %v5206
    %v5208 = vrot.slane %v5194, %v5207
    %v5209 = vcombine.low %v4752, %v4898
    %v5210 = vcombine.high %v4752, %v4898
    %v5212 = vunpack.c.l.s4 1983009808
    %v5213 = vunpack.c.0.s8 %v5212
    %v5214 = vlaneseq
    %v5215 = vshrl.u32 %v5214, 7
    %v5216 = vsub.s32 %v5213, %v5215
    %v5217 = vrot.slane %v5209, %v5216
    %v5219 = vunpack.c.l.s4 1983009808
    %v5220 = vunpack.c.0.s8 %v5219
    %v5221 = vlaneseq
    %v5222 = vshrl.u32 %v5221, 7
    %v5223 = vsub.s32 %v5220, %v5222
    %v5224 = vrot.slane %v5210, %v5223
    %v5225 = vcombine.low %v5201, %v5217
    %v5226 = vcombine.high %v5201, %v5217
    %v5228 = vunpack.c.l.s4 1934713408
    %v5229 = vunpack.c.0.s8 %v5228
    %v5230 = vlaneseq
    %v5231 = vshrl.u32 %v5230, 7
    %v5232 = vsub.s32 %v5229, %v5231
    %v5233 = vrot.slane %v5225, %v5232
    %v5235 = vunpack.c.l.s4 1934713408
    %v5236 = vunpack.c.0.s8 %v5235
    %v5237 = vlaneseq
    %v5238 = vshrl.u32 %v5237, 7
    %v5239 = vsub.s32 %v5236, %v5238
    %v5240 = vrot.slane %v5226, %v5239
    %v5241 = vcombine.low %v5208, %v5224
    %v5242 = vcombine.high %v5208, %v5224
    %v5244 = vunpack.c.l.s4 1934713408
    %v5245 = vunpack.c.0.s8 %v5244
    %v5246 = vlaneseq
    %v5247 = vshrl.u32 %v5246, 7
    %v5248 = vsub.s32 %v5245, %v5247
    %v5249 = vrot.slane %v5241, %v5248
    %v5251 = vunpack.c.l.s4 1934713408
    %v5252 = vunpack.c.0.s8 %v5251
    %v5253 = vlaneseq
    %v5254 = vshrl.u32 %v5253, 7
    %v5255 = vsub.s32 %v5252, %v5254
    %v5256 = vrot.slane %v5242, %v5255
    %v5257 = vcombine.high %v5233, 0.0
    %v5258 = vcombine.high %v5240, 0.0
    %v5259 = vcombine.high %v5249, 0.0
    %v5260 = vcombine.high %v5256, 0.0
    %v5261 = vcombine.low %v4971, %v5117
    %v5262 = vcombine.high %v4971, %v5117
    %v5264 = vunpack.c.l.s4 1983009808
    %v5265 = vunpack.c.0.s8 %v5264
    %v5266 = vlaneseq
    %v5267 = vshrl.u32 %v5266, 7
    %v5268 = vsub.s32 %v5265, %v5267
    %v5269 = vrot.slane %v5261, %v5268
    %v5271 = vunpack.c.l.s4 1983009808
    %v5272 = vunpack.c.0.s8 %v5271
    %v5273 = vlaneseq
    %v5274 = vshrl.u32 %v5273, 7
    %v5275 = vsub.s32 %v5272, %v5274
    %v5276 = vrot.slane %v5262, %v5275
    %v5277 = vcombine.low %v5044, %v5190
    %v5278 = vcombine.high %v5044, %v5190
    %v5280 = vunpack.c.l.s4 1983009808
    %v5281 = vunpack.c.0.s8 %v5280
    %v5282 = vlaneseq
    %v5283 = vshrl.u32 %v5282, 7
    %v5284 = vsub.s32 %v5281, %v5283
    %v5285 = vrot.slane %v5277, %v5284
    %v5287 = vunpack.c.l.s4 1983009808
    %v5288 = vunpack.c.0.s8 %v5287
    %v5289 = vlaneseq
    %v5290 = vshrl.u32 %v5289, 7
    %v5291 = vsub.s32 %v5288, %v5290
    %v5292 = vrot.slane %v5278, %v5291
    %v5293 = vcombine.low %v5269, %v5285
    %v5294 = vcombine.high %v5269, %v5285
    %v5296 = vunpack.c.l.s4 1934713408
    %v5297 = vunpack.c.0.s8 %v5296
    %v5298 = vlaneseq
    %v5299 = vshrl.u32 %v5298, 7
    %v5300 = vsub.s32 %v5297, %v5299
    %v5301 = vrot.slane %v5293, %v5300
    %v5303 = vunpack.c.l.s4 1934713408
    %v5304 = vunpack.c.0.s8 %v5303
    %v5305 = vlaneseq
    %v5306 = vshrl.u32 %v5305, 7
    %v5307 = vsub.s32 %v5304, %v5306
    %v5308 = vrot.slane %v5294, %v5307
    %v5309 = vcombine.low %v5276, %v5292
    %v5310 = vcombine.high %v5276, %v5292
    %v5312 = vunpack.c.l.s4 1934713408
    %v5313 = vunpack.c.0.s8 %v5312
    %v5314 = vlaneseq
    %v5315 = vshrl.u32 %v5314, 7
    %v5316 = vsub.s32 %v5313, %v5315
    %v5317 = vrot.slane %v5309, %v5316
    %v5319 = vunpack.c.l.s4 1934713408
    %v5320 = vunpack.c.0.s8 %v5319
    %v5321 = vlaneseq
    %v5322 = vshrl.u32 %v5321, 7
    %v5323 = vsub.s32 %v5320, %v5322
    %v5324 = vrot.slane %v5310, %v5323
    %v5325 = vcombine.high %v5301, 0.0
    %v5326 = vcombine.high %v5308, 0.0
    %v5327 = vcombine.high %v5317, 0.0
    %v5328 = vcombine.high %v5324, 0.0
    %v5329 = vcombine.low %v5233, %v5240
    %v5331 = vunpack.c.l.s4 1983009808
    %v5332 = vunpack.c.0.s8 %v5331
    %v5333 = vlaneseq
    %v5334 = vshrl.u32 %v5333, 7
    %v5335 = vsub.s32 %v5332, %v5334
    %v5336 = vrot.slane %v5329, %v5335
    %v5337 = vcombine.low %v5257, %v5258
    %v5339 = vunpack.c.l.s4 1983009808
    %v5340 = vunpack.c.0.s8 %v5339
    %v5341 = vlaneseq
    %v5342 = vshrl.u32 %v5341, 7
    %v5343 = vsub.s32 %v5340, %v5342
    %v5344 = vrot.slane %v5337, %v5343
    %v5345 = vcombine.low %v5249, %v5256
    %v5347 = vunpack.c.l.s4 1983009808
    %v5348 = vunpack.c.0.s8 %v5347
    %v5349 = vlaneseq
    %v5350 = vshrl.u32 %v5349, 7
    %v5351 = vsub.s32 %v5348, %v5350
    %v5352 = vrot.slane %v5345, %v5351
    %v5353 = vcombine.low %v5259, %v5260
    %v5355 = vunpack.c.l.s4 1983009808
    %v5356 = vunpack.c.0.s8 %v5355
    %v5357 = vlaneseq
    %v5358 = vshrl.u32 %v5357, 7
    %v5359 = vsub.s32 %v5356, %v5358
    %v5360 = vrot.slane %v5353, %v5359
    %v5361 = vcombine.low %v5336, %v5344
    %v5362 = vcombine.high %v5336, %v5344
    %v5364 = vunpack.c.l.s4 1934713408
    %v5365 = vunpack.c.0.s8 %v5364
    %v5366 = vlaneseq
    %v5367 = vshrl.u32 %v5366, 7
    %v5368 = vsub.s32 %v5365, %v5367
    %v5369 = vrot.slane %v5361, %v5368
    %v5371 = vunpack.c.l.s4 1934713408
    %v5372 = vunpack.c.0.s8 %v5371
    %v5373 = vlaneseq
    %v5374 = vshrl.u32 %v5373, 7
    %v5375 = vsub.s32 %v5372, %v5374
    %v5376 = vrot.slane %v5362, %v5375
    %v5377 = vcombine.low %v5352, %v5360
    %v5378 = vcombine.high %v5352, %v5360
    %v5380 = vunpack.c.l.s4 1934713408
    %v5381 = vunpack.c.0.s8 %v5380
    %v5382 = vlaneseq
    %v5383 = vshrl.u32 %v5382, 7
    %v5384 = vsub.s32 %v5381, %v5383
    %v5385 = vrot.slane %v5377, %v5384
    %v5387 = vunpack.c.l.s4 1934713408
    %v5388 = vunpack.c.0.s8 %v5387
    %v5389 = vlaneseq
    %v5390 = vshrl.u32 %v5389, 7
    %v5391 = vsub.s32 %v5388, %v5390
    %v5392 = vrot.slane %v5378, %v5391
    %v5393 = vcombine.low %v5369, %v5385
    %v5394 = vcombine.high %v5369, %v5385
    %v5395 = vcombine.low %v5376, %v5392
    %v5396 = vcombine.high %v5376, %v5392
    %v5397 = vcombine.low %v5301, %v5308
    %v5399 = vunpack.c.l.s4 1983009808
    %v5400 = vunpack.c.0.s8 %v5399
    %v5401 = vlaneseq
    %v5402 = vshrl.u32 %v5401, 7
    %v5403 = vsub.s32 %v5400, %v5402
    %v5404 = vrot.slane %v5397, %v5403
    %v5405 = vcombine.low %v5325, %v5326
    %v5407 = vunpack.c.l.s4 1983009808
    %v5408 = vunpack.c.0.s8 %v5407
    %v5409 = vlaneseq
    %v5410 = vshrl.u32 %v5409, 7
    %v5411 = vsub.s32 %v5408, %v5410
    %v5412 = vrot.slane %v5405, %v5411
    %v5413 = vcombine.low %v5317, %v5324
    %v5415 = vunpack.c.l.s4 1983009808
    %v5416 = vunpack.c.0.s8 %v5415
    %v5417 = vlaneseq
    %v5418 = vshrl.u32 %v5417, 7
    %v5419 = vsub.s32 %v5416, %v5418
    %v5420 = vrot.slane %v5413, %v5419
    %v5421 = vcombine.low %v5327, %v5328
    %v5423 = vunpack.c.l.s4 1983009808
    %v5424 = vunpack.c.0.s8 %v5423
    %v5425 = vlaneseq
    %v5426 = vshrl.u32 %v5425, 7
    %v5427 = vsub.s32 %v5424, %v5426
    %v5428 = vrot.slane %v5421, %v5427
    %v5429 = vcombine.low %v5404, %v5412
    %v5430 = vcombine.high %v5404, %v5412
    %v5432 = vunpack.c.l.s4 1934713408
    %v5433 = vunpack.c.0.s8 %v5432
    %v5434 = vlaneseq
    %v5435 = vshrl.u32 %v5434, 7
    %v5436 = vsub.s32 %v5433, %v5435
    %v5437 = vrot.slane %v5429, %v5436
    %v5439 = vunpack.c.l.s4 1934713408
    %v5440 = vunpack.c.0.s8 %v5439
    %v5441 = vlaneseq
    %v5442 = vshrl.u32 %v5441, 7
    %v5443 = vsub.s32 %v5440, %v5442
    %v5444 = vrot.slane %v5430, %v5443
    %v5445 = vcombine.low %v5420, %v5428
    %v5446 = vcombine.high %v5420, %v5428
    %v5448 = vunpack.c.l.s4 1934713408
    %v5449 = vunpack.c.0.s8 %v5448
    %v5450 = vlaneseq
    %v5451 = vshrl.u32 %v5450, 7
    %v5452 = vsub.s32 %v5449, %v5451
    %v5453 = vrot.slane %v5445, %v5452
    %v5455 = vunpack.c.l.s4 1934713408
    %v5456 = vunpack.c.0.s8 %v5455
    %v5457 = vlaneseq
    %v5458 = vshrl.u32 %v5457, 7
    %v5459 = vsub.s32 %v5456, %v5458
    %v5460 = vrot.slane %v5446, %v5459
    %v5461 = vcombine.low %v5437, %v5453
    %v5462 = vcombine.high %v5437, %v5453
    %v5463 = vcombine.low %v5444, %v5460
    %v5464 = vcombine.high %v5444, %v5460
    %5467 = vrot.lane.b32.xlu0 %v5394, 8
    %v5468 = vpop.permute.xlu0 %5467
    %5469 = vrot.lane.b32.xlu0 %v5462, 8
    %v5470 = vpop.permute.xlu0 %5469
    %5475 = vrot.lane.b32.xlu0 %v5395, 16
    %v5476 = vpop.permute.xlu0 %5475
    %5477 = vrot.lane.b32.xlu0 %v5463, 16
    %v5478 = vpop.permute.xlu0 %5477
    %5483 = vrot.lane.b32.xlu0 %v5396, 24
    %v5484 = vpop.permute.xlu0 %5483
    %5485 = vrot.lane.b32.xlu0 %v5464, 24
    %v5486 = vpop.permute.xlu0 %5485
    %v5489 = vsel %vm1050, %v5393, %v5468
    %v5490 = vsel %vm1050, %v5461, %v5470
    %v5491 = vsel %vm2629, %v5489, %v5476
    %v5492 = vsel %vm2629, %v5490, %v5478
    %v5493 = vsel %vm2632, %v5491, %v5484
    %v5494 = vsel %vm2632, %v5492, %v5486
    %v5495 = vpack.c.bf16 %v5494, %v5493
    %v5496 = vld [vmem:[%s2923 + $0x10] sm:$0xf]
    %v5497 = vld [vmem:[%s2923 + $0x14] sm:$0xf]
    %v5498 = vld [vmem:[%s2923 + $0x18] sm:$0xf]
    %v5499 = vld [vmem:[%s2923 + $0x1c] sm:$0xf]
    %v5504 = vunpack.c.l.b16 %v5496
    %v5505 = vunpack.c.l.b16 %v5497
    %v5506 = vunpack.c.l.b16 %v5498
    %v5507 = vunpack.c.l.b16 %v5499
    %v5508 = vpack.c.b16 %v5505, %v5504
    %v5509 = vpack.c.b16 %v5507, %v5506
    %v5513 = vsel %vm61, %v5495, 0
    %5515 = vmatprep.subr.bf16.mxu0 0
    %5516 = vmatpush1.bf16.msra.mxu0 %v5508
    %5517 = vmatprep.subr.bf16.mxu0 0
    %5518 = vmatpush1.bf16.msra.mxu0 %v5509
    %5519 = vmatprep.subr.bf16.mxu0 0
    %5520 = vmatpush1.bf16.msra.mxu0 0
    %5521 = vmatprep.subr.bf16.mxu0 0
    %5522 = vmatpush1.bf16.msra.mxu0 0
    %5523 = vmatprep.subr.bf16.mxu0 0
    %5524 = vmatpush1.bf16.msra.mxu0 0
    %5525 = vmatprep.subr.bf16.mxu0 0
    %5526 = vmatpush1.bf16.msra.mxu0 0
    %5527 = vmatprep.subr.bf16.mxu0 0
    %5528 = vmatpush1.bf16.msra.mxu0 0
    %5529 = vmatprep.subr.bf16.mxu0 0
    %5530 = vmatpush1.bf16.msra.mxu0 0
    %5531 = vmatprep.subr.bf16.mxu0 0
    %5532 = vmatpush1.bf16.msra.mxu0 0
    %5533 = vmatprep.subr.bf16.mxu0 0
    %5534 = vmatpush1.bf16.msra.mxu0 0
    %5535 = vmatprep.subr.bf16.mxu0 0
    %5536 = vmatpush1.bf16.msra.mxu0 0
    %5537 = vmatprep.subr.bf16.mxu0 0
    %5538 = vmatpush1.bf16.msra.mxu0 0
    %5539 = vmatprep.subr.bf16.mxu0 0
    %5540 = vmatpush1.bf16.msra.mxu0 0
    %5541 = vmatprep.subr.bf16.mxu0 0
    %5542 = vmatpush1.bf16.msra.mxu0 0
    %5543 = vmatprep.subr.bf16.mxu0 0
    %5544 = vmatpush1.bf16.msra.mxu0 0
    %5545 = vmatprep.subr.bf16.mxu0 0
    %5546 = vmatpush1.bf16.msra.mxu0 0
    %5547 = vmatprep.mubr.bf16.mxu0 0
    %5548 = vmatmul.mubr.bf16.gmra.mrb[0].mxu0 %v5513
    %v5549 = vpop.f32.mrb[0].mxu0
    %v5550 = vadd.f32 0.0, %v5549
    %v5551 = vpop.f32.mrb[0].mxu0
    %v5552 = vpop.f32.mrb[0].mxu0
    %v5553 = vadd.f32 0.0, %v5552
    %v5554 = vpop.f32.mrb[0].mxu0
    %5555 = vdwg.mxu0
    %v5556 = vadd.f32 %v2921, %v5550
    %v5557 = vadd.f32 %v2922, %v5553
    %v5558 = vlaneseq
    %v5559 = vshrl.u32 %v5558, 7
    %v5560 = vsub.s32 3, %v5559
    %v5561 = vrot.slane %v2925, %v5560
    %v5562 = vadd.f32 %v5556, %v5561
    %v5563 = vadd.f32 %v5557, %v5561
    %v5564 = vsel %vm61, %v5562, 0.0
    %5565 = vadd.xlane.f32.xlu0 %v5564
    %v5566 = vpop.xlane.xlu0 %5565
    %v5567 = vsel %vm61, %v5563, 0.0
    %5568 = vadd.xlane.f32.xlu0 %v5567
    %v5569 = vpop.xlane.xlu0 %5568
    %v5570 = vmul.f32 %v5566, %v68
    %v5571 = vmul.f32 %v5569, %v68
    %v5572 = vsub.f32 %v5562, %v5570
    %v5573 = vsub.f32 %v5563, %v5571
    %v5574 = vmul.f32 %v5572, %v5572
    %v5575 = vmul.f32 %v5573, %v5573
    %v5576 = vsel %vm61, %v5574, 0.0
    %5577 = vadd.xlane.f32.xlu0 %v5576
    %v5578 = vpop.xlane.xlu0 %5577
    %v5579 = vsel %vm61, %v5575, 0.0
    %5580 = vadd.xlane.f32.xlu0 %v5579
    %v5581 = vpop.xlane.xlu0 %5580
    %v5582 = vmul.f32 %v5578, %v68
    %v5583 = vmul.f32 %v5581, %v68
    %v5584 = vadd.f32 %v5582, 1e-05
    %v5585 = vadd.f32 %v5583, 1e-05
    %v5586 = vrsqrt.pop %v5584
    %v5587 = vrsqrt.pop %v5585
    %v5588 = vmul.f32 %v5572, %v5586
    %v5589 = vmul.f32 %v5573, %v5587
    %v5590 = vlaneseq
    %v5591 = vshrl.u32 %v5590, 7
    %v5592 = vsub.s32 4, %v5591
    %v5593 = vrot.slane %v2925, %v5592
    %v5594 = vmul.f32 %v5588, %v5593
    %v5595 = vmul.f32 %v5589, %v5593
    %v5596 = vlaneseq
    %v5597 = vshrl.u32 %v5596, 7
    %v5598 = vsub.s32 5, %v5597
    %v5599 = vrot.slane %v2925, %v5598
    %v5600 = vadd.f32 %v5594, %v5599
    %v5601 = vadd.f32 %v5595, %v5599
    %v5602 = vpack.c.bf16 %v5601, %v5600
    %v5603 = vld [vmem:[%s2923 + $0x20] sm:$0xf]
    %v5604 = vld [vmem:[%s2923 + $0x24] sm:$0xf]
    %v5605 = vld [vmem:[%s2923 + $0x28] sm:$0xf]
    %v5606 = vld [vmem:[%s2923 + $0x2c] sm:$0xf]
    %v5607 = vlaneseq
    %v5608 = vshrl.u32 %v5607, 7
    %v5609 = vsub.s32 6, %v5608
    %v5610 = vrot.slane %v2925, %v5609
    %v5615 = vunpack.c.l.b16 %v5603
    %v5616 = vunpack.c.l.b16 %v5604
    %v5617 = vunpack.c.l.b16 %v5605
    %v5618 = vunpack.c.l.b16 %v5606
    %v5619 = vpack.c.b16 %v5616, %v5615
    %v5620 = vpack.c.b16 %v5618, %v5617
    %v5624 = vsel %vm61, %v5602, 0
    %5626 = vmatprep.subr.bf16.mxu0 0
    %5627 = vmatpush1.bf16.msra.mxu0 %v5619
    %5628 = vmatprep.subr.bf16.mxu0 0
    %5629 = vmatpush1.bf16.msra.mxu0 %v5620
    %5630 = vmatprep.subr.bf16.mxu0 0
    %5631 = vmatpush1.bf16.msra.mxu0 0
    %5632 = vmatprep.subr.bf16.mxu0 0
    %5633 = vmatpush1.bf16.msra.mxu0 0
    %5634 = vmatprep.subr.bf16.mxu0 0
    %5635 = vmatpush1.bf16.msra.mxu0 0
    %5636 = vmatprep.subr.bf16.mxu0 0
    %5637 = vmatpush1.bf16.msra.mxu0 0
    %5638 = vmatprep.subr.bf16.mxu0 0
    %5639 = vmatpush1.bf16.msra.mxu0 0
    %5640 = vmatprep.subr.bf16.mxu0 0
    %5641 = vmatpush1.bf16.msra.mxu0 0
    %5642 = vmatprep.subr.bf16.mxu0 0
    %5643 = vmatpush1.bf16.msra.mxu0 0
    %5644 = vmatprep.subr.bf16.mxu0 0
    %5645 = vmatpush1.bf16.msra.mxu0 0
    %5646 = vmatprep.subr.bf16.mxu0 0
    %5647 = vmatpush1.bf16.msra.mxu0 0
    %5648 = vmatprep.subr.bf16.mxu0 0
    %5649 = vmatpush1.bf16.msra.mxu0 0
    %5650 = vmatprep.subr.bf16.mxu0 0
    %5651 = vmatpush1.bf16.msra.mxu0 0
    %5652 = vmatprep.subr.bf16.mxu0 0
    %5653 = vmatpush1.bf16.msra.mxu0 0
    %5654 = vmatprep.subr.bf16.mxu0 0
    %5655 = vmatpush1.bf16.msra.mxu0 0
    %5656 = vmatprep.subr.bf16.mxu0 0
    %5657 = vmatpush1.bf16.msra.mxu0 0
    %5658 = vmatprep.mubr.bf16.mxu0 0
    %5659 = vmatmul.mubr.bf16.gmra.mrb[0].mxu0 %v5624
    %v5660 = vpop.f32.mrb[0].mxu0
    %v5661 = vadd.f32 %v5610, %v5660
    %v5662 = vpop.f32.mrb[0].mxu0
    %v5663 = vpop.f32.mrb[0].mxu0
    %v5664 = vadd.f32 %v5610, %v5663
    %v5665 = vpop.f32.mrb[0].mxu0
    %5666 = vdwg.mxu0
    %v5667 = vmax.f32 %v5661, 0.0
    %v5668 = vmax.f32 %v5664, 0.0
    %v5669 = vpack.c.bf16 %v5668, %v5667
    %v5670 = vld [vmem:[%s2923 + $0x30] sm:$0xf]
    %v5671 = vld [vmem:[%s2923 + $0x34] sm:$0xf]
    %v5672 = vld [vmem:[%s2923 + $0x38] sm:$0xf]
    %v5673 = vld [vmem:[%s2923 + $0x3c] sm:$0xf]
    %v5674 = vld [vmem:[%s2923 + $0x40] sm:$0xf]
    %v5675 = vld [vmem:[%s2923 + $0x44] sm:$0xf]
    %v5676 = vld [vmem:[%s2923 + $0x48] sm:$0xf]
    %v5677 = vld [vmem:[%s2923 + $0x4c] sm:$0xf]
    %v5678 = vld [vmem:[%s2923 + $0x50] sm:$0xf]
    %v5679 = vld [vmem:[%s2923 + $0x54] sm:$0xf]
    %v5680 = vld [vmem:[%s2923 + $0x58] sm:$0xf]
    %v5681 = vld [vmem:[%s2923 + $0x5c] sm:$0xf]
    %v5682 = vld [vmem:[%s2923 + $0x60] sm:$0xf]
    %v5683 = vld [vmem:[%s2923 + $0x64] sm:$0xf]
    %v5684 = vld [vmem:[%s2923 + $0x68] sm:$0xf]
    %v5685 = vld [vmem:[%s2923 + $0x6c] sm:$0xf]
    %v5702 = vunpack.c.l.b16 %v5670
    %v5703 = vunpack.c.l.b16 %v5671
    %v5704 = vunpack.c.l.b16 %v5672
    %v5705 = vunpack.c.l.b16 %v5673
    %v5706 = vunpack.c.l.b16 %v5674
    %v5707 = vunpack.c.l.b16 %v5675
    %v5708 = vunpack.c.l.b16 %v5676
    %v5709 = vunpack.c.l.b16 %v5677
    %v5710 = vunpack.c.l.b16 %v5678
    %v5711 = vunpack.c.l.b16 %v5679
    %v5712 = vunpack.c.l.b16 %v5680
    %v5713 = vunpack.c.l.b16 %v5681
    %v5714 = vunpack.c.l.b16 %v5682
    %v5715 = vunpack.c.l.b16 %v5683
    %v5716 = vunpack.c.l.b16 %v5684
    %v5717 = vunpack.c.l.b16 %v5685
    %v5718 = vpack.c.b16 %v5703, %v5702
    %v5719 = vpack.c.b16 %v5705, %v5704
    %v5720 = vpack.c.b16 %v5707, %v5706
    %v5721 = vpack.c.b16 %v5709, %v5708
    %v5722 = vpack.c.b16 %v5711, %v5710
    %v5723 = vpack.c.b16 %v5713, %v5712
    %v5724 = vpack.c.b16 %v5715, %v5714
    %v5725 = vpack.c.b16 %v5717, %v5716
    %5734 = vmatprep.subr.bf16.mxu0 0
    %5735 = vmatpush1.bf16.msra.mxu0 %v5718
    %5736 = vmatprep.subr.bf16.mxu0 0
    %5737 = vmatpush1.bf16.msra.mxu0 %v5719
    %5738 = vmatprep.subr.bf16.mxu0 0
    %5739 = vmatpush1.bf16.msra.mxu0 %v5720
    %5740 = vmatprep.subr.bf16.mxu0 0
    %5741 = vmatpush1.bf16.msra.mxu0 %v5721
    %5742 = vmatprep.subr.bf16.mxu0 0
    %5743 = vmatpush1.bf16.msra.mxu0 %v5722
    %5744 = vmatprep.subr.bf16.mxu0 0
    %5745 = vmatpush1.bf16.msra.mxu0 %v5723
    %5746 = vmatprep.subr.bf16.mxu0 0
    %5747 = vmatpush1.bf16.msra.mxu0 %v5724
    %5748 = vmatprep.subr.bf16.mxu0 0
    %5749 = vmatpush1.bf16.msra.mxu0 %v5725
    %5750 = vmatprep.subr.bf16.mxu0 0
    %5751 = vmatpush1.bf16.msra.mxu0 0
    %5752 = vmatprep.subr.bf16.mxu0 0
    %5753 = vmatpush1.bf16.msra.mxu0 0
    %5754 = vmatprep.subr.bf16.mxu0 0
    %5755 = vmatpush1.bf16.msra.mxu0 0
    %5756 = vmatprep.subr.bf16.mxu0 0
    %5757 = vmatpush1.bf16.msra.mxu0 0
    %5758 = vmatprep.subr.bf16.mxu0 0
    %5759 = vmatpush1.bf16.msra.mxu0 0
    %5760 = vmatprep.subr.bf16.mxu0 0
    %5761 = vmatpush1.bf16.msra.mxu0 0
    %5762 = vmatprep.subr.bf16.mxu0 0
    %5763 = vmatpush1.bf16.msra.mxu0 0
    %5764 = vmatprep.subr.bf16.mxu0 0
    %5765 = vmatpush1.bf16.msra.mxu0 0
    %5766 = vmatprep.mubr.bf16.mxu0 0
    %5767 = vmatmul.mubr.bf16.gmra.mrb[0].mxu0 %v5669
    %v5768 = vpop.f32.mrb[0].mxu0
    %v5769 = vadd.f32 0.0, %v5768
    %v5770 = vpop.f32.mrb[0].mxu0
    %v5771 = vpop.f32.mrb[0].mxu0
    %v5772 = vadd.f32 0.0, %v5771
    %v5773 = vpop.f32.mrb[0].mxu0
    %5774 = vdwg.mxu0
    %v5775 = vadd.f32 %v5562, %v5769
    %v5776 = vadd.f32 %v5563, %v5772
    %v5777 = vlaneseq
    %v5778 = vshrl.u32 %v5777, 7
    %v5779 = vsub.s32 7, %v5778
    %v5780 = vrot.slane %v2925, %v5779
    %v5781 = vadd.f32 %v5775, %v5780
    %v5782 = vadd.f32 %v5776, %v5780
    %v5783 = vld [vmem:[#allocation7 + $0x30] sm:$0xf]
    %v5784 = vunpack.c.l.bf16 %v5783
    %v5785 = vsel %vm61, %v5781, 0.0
    %5786 = vadd.xlane.f32.xlu0 %v5785
    %v5787 = vpop.xlane.xlu0 %5786
    %v5788 = vsel %vm61, %v5782, 0.0
    %5789 = vadd.xlane.f32.xlu0 %v5788
    %v5790 = vpop.xlane.xlu0 %5789
    %v5791 = vmul.f32 %v5787, %v68
    %v5792 = vmul.f32 %v5790, %v68
    %v5793 = vsub.f32 %v5781, %v5791
    %v5794 = vsub.f32 %v5782, %v5792
    %v5795 = vmul.f32 %v5793, %v5793
    %v5796 = vmul.f32 %v5794, %v5794
    %v5797 = vsel %vm61, %v5795, 0.0
    %5798 = vadd.xlane.f32.xlu0 %v5797
    %v5799 = vpop.xlane.xlu0 %5798
    %v5800 = vsel %vm61, %v5796, 0.0
    %5801 = vadd.xlane.f32.xlu0 %v5800
    %v5802 = vpop.xlane.xlu0 %5801
    %v5803 = vmul.f32 %v5799, %v68
    %v5804 = vmul.f32 %v5802, %v68
    %v5805 = vadd.f32 %v5803, 1e-05
    %v5806 = vadd.f32 %v5804, 1e-05
    %v5807 = vrsqrt.pop %v5805
    %v5808 = vrsqrt.pop %v5806
    %v5809 = vmul.f32 %v5793, %v5807
    %v5810 = vmul.f32 %v5794, %v5808
    %v5811 = vlaneseq
    %v5812 = vshrl.u32 %v5811, 7
    %v5813 = vsub.s32 0, %v5812
    %v5814 = vrot.slane %v5784, %v5813
    %v5815 = vmul.f32 %v5809, %v5814
    %v5816 = vmul.f32 %v5810, %v5814
    %v5817 = vlaneseq
    %v5818 = vshrl.u32 %v5817, 7
    %v5819 = vsub.s32 1, %v5818
    %v5820 = vrot.slane %v5784, %v5819
    %v5821 = vadd.f32 %v5815, %v5820
    %v5822 = vadd.f32 %v5816, %v5820
    %v5823 = vsel %vm61, %v5821, 0.0
    %v5824 = vrot.slane %v5823, 4
    %v5825 = vadd.f32 %v5823, %v5824
    %v5826 = vrot.slane %v5825, 2
    %v5827 = vadd.f32 %v5825, %v5826
    %v5828 = vrot.slane %v5827, 1
    %v5829 = vadd.f32 %v5827, %v5828
    %v5830 = vsel %vm61, %v5822, 0.0
    %v5831 = vrot.slane %v5830, 4
    %v5832 = vadd.f32 %v5830, %v5831
    %v5833 = vrot.slane %v5832, 2
    %v5834 = vadd.f32 %v5832, %v5833
    %v5835 = vrot.slane %v5834, 1
    %v5836 = vadd.f32 %v5834, %v5835
    %v5837 = vrcp.pop 8.0
    %v5838 = vmul.f32 %v5829, %v5837
    %v5839 = vmul.f32 %v5836, %v5837
    %v5840 = vpack.c.bf16 %v5838, %v5838
    %v5841 = vpack.c.bf16 %v5839, %v5839
    %v5842 = vld [vmem:[#allocation7] sm:$0xf]
    %v5843 = vld [vmem:[#allocation7 + $0x4] sm:$0xf]
    %v5844 = vld [vmem:[#allocation7 + $0x8] sm:$0xf]
    %v5845 = vld [vmem:[#allocation7 + $0xc] sm:$0xf]
    %v5846 = vlaneseq
    %v5847 = vshrl.u32 %v5846, 7
    %v5848 = vsub.s32 2, %v5847
    %v5849 = vrot.slane %v5784, %v5848
    %v5852 = vunpack.c.l.b16 %v5840
    %v5853 = vunpack.c.l.b16 %v5841
    %vm5854 = vcmask 1041409
    %v5855 = vsel %vm5854, %v5853, %v5852
    %v5856 = vpack.c.b16 %v5855, %v5855
    %v5861 = vunpack.c.l.b16 %v5842
    %v5862 = vunpack.c.l.b16 %v5843
    %v5863 = vunpack.c.l.b16 %v5844
    %v5864 = vunpack.c.l.b16 %v5845
    %v5865 = vpack.c.b16 %v5862, %v5861
    %v5866 = vpack.c.b16 %v5864, %v5863
    %v5870 = vsel %vm61, %v5856, 0
    %5872 = vmatprep.subr.bf16.mxu0 0
    %5873 = vmatpush1.bf16.msra.mxu0 %v5865
    %5874 = vmatprep.subr.bf16.mxu0 0
    %5875 = vmatpush1.bf16.msra.mxu0 %v5866
    %5876 = vmatprep.subr.bf16.mxu0 0
    %5877 = vmatpush1.bf16.msra.mxu0 0
    %5878 = vmatprep.subr.bf16.mxu0 0
    %5879 = vmatpush1.bf16.msra.mxu0 0
    %5880 = vmatprep.subr.bf16.mxu0 0
    %5881 = vmatpush1.bf16.msra.mxu0 0
    %5882 = vmatprep.subr.bf16.mxu0 0
    %5883 = vmatpush1.bf16.msra.mxu0 0
    %5884 = vmatprep.subr.bf16.mxu0 0
    %5885 = vmatpush1.bf16.msra.mxu0 0
    %5886 = vmatprep.subr.bf16.mxu0 0
    %5887 = vmatpush1.bf16.msra.mxu0 0
    %5888 = vmatprep.subr.bf16.mxu0 0
    %5889 = vmatpush1.bf16.msra.mxu0 0
    %5890 = vmatprep.subr.bf16.mxu0 0
    %5891 = vmatpush1.bf16.msra.mxu0 0
    %5892 = vmatprep.subr.bf16.mxu0 0
    %5893 = vmatpush1.bf16.msra.mxu0 0
    %5894 = vmatprep.subr.bf16.mxu0 0
    %5895 = vmatpush1.bf16.msra.mxu0 0
    %5896 = vmatprep.subr.bf16.mxu0 0
    %5897 = vmatpush1.bf16.msra.mxu0 0
    %5898 = vmatprep.subr.bf16.mxu0 0
    %5899 = vmatpush1.bf16.msra.mxu0 0
    %5900 = vmatprep.subr.bf16.mxu0 0
    %5901 = vmatpush1.bf16.msra.mxu0 0
    %5902 = vmatprep.subr.bf16.mxu0 0
    %5903 = vmatpush1.bf16.msra.mxu0 0
    %5904 = vmatprep.mubr.bf16.mxu0 0
    %5905 = vmatmul.mubr.bf16.gmra.mrb[0].mxu0 %v5870
    %v5906 = vpop.f32.mrb[0].mxu0
    %v5907 = vadd.f32 %v5849, %v5906
    %v5908 = vpop.f32.mrb[0].mxu0
    %v5909 = vpop.f32.mrb[0].mxu0
    %v5910 = vpop.f32.mrb[0].mxu0
    %5911 = vdwg.mxu0
    %v5912 = vmax.f32 %v5907, 0.0
    %v5913 = vpack.c.bf16 %v5912, %v5912
    %v5914 = vld [vmem:[#allocation7 + $0x10] sm:$0xf]
    %v5915 = vld [vmem:[#allocation7 + $0x14] sm:$0xf]
    %v5916 = vld [vmem:[#allocation7 + $0x18] sm:$0xf]
    %v5917 = vld [vmem:[#allocation7 + $0x1c] sm:$0xf]
    %v5918 = vld [vmem:[#allocation7 + $0x20] sm:$0xf]
    %v5919 = vld [vmem:[#allocation7 + $0x24] sm:$0xf]
    %v5920 = vld [vmem:[#allocation7 + $0x28] sm:$0xf]
    %v5921 = vld [vmem:[#allocation7 + $0x2c] sm:$0xf]
    %v5922 = vlaneseq
    %v5923 = vshrl.u32 %v5922, 7
    %v5924 = vsub.s32 3, %v5923
    %v5925 = vrot.slane %v5784, %v5924
    %v5934 = vunpack.c.l.b16 %v5914
    %v5935 = vunpack.c.l.b16 %v5915
    %v5936 = vunpack.c.l.b16 %v5916
    %v5937 = vunpack.c.l.b16 %v5917
    %v5938 = vunpack.c.l.b16 %v5918
    %v5939 = vunpack.c.l.b16 %v5919
    %v5940 = vunpack.c.l.b16 %v5920
    %v5941 = vunpack.c.l.b16 %v5921
    %v5942 = vpack.c.b16 %v5935, %v5934
    %v5943 = vpack.c.b16 %v5937, %v5936
    %v5944 = vpack.c.b16 %v5939, %v5938
    %v5945 = vpack.c.b16 %v5941, %v5940
    %vm5950 = vcmask 523264
    %v5952 = vsel %vm5950, %v5913, 0
    %5954 = vmatprep.subr.bf16.mxu0 0
    %5955 = vmatpush1.bf16.msra.mxu0 %v5942
    %5956 = vmatprep.subr.bf16.mxu0 0
    %5957 = vmatpush1.bf16.msra.mxu0 %v5943
    %5958 = vmatprep.subr.bf16.mxu0 0
    %5959 = vmatpush1.bf16.msra.mxu0 %v5944
    %5960 = vmatprep.subr.bf16.mxu0 0
    %5961 = vmatpush1.bf16.msra.mxu0 %v5945
    %5962 = vmatprep.subr.bf16.mxu0 0
    %5963 = vmatpush1.bf16.msra.mxu0 0
    %5964 = vmatprep.subr.bf16.mxu0 0
    %5965 = vmatpush1.bf16.msra.mxu0 0
    %5966 = vmatprep.subr.bf16.mxu0 0
    %5967 = vmatpush1.bf16.msra.mxu0 0
    %5968 = vmatprep.subr.bf16.mxu0 0
    %5969 = vmatpush1.bf16.msra.mxu0 0
    %5970 = vmatprep.subr.bf16.mxu0 0
    %5971 = vmatpush1.bf16.msra.mxu0 0
    %5972 = vmatprep.subr.bf16.mxu0 0
    %5973 = vmatpush1.bf16.msra.mxu0 0
    %5974 = vmatprep.subr.bf16.mxu0 0
    %5975 = vmatpush1.bf16.msra.mxu0 0
    %5976 = vmatprep.subr.bf16.mxu0 0
    %5977 = vmatpush1.bf16.msra.mxu0 0
    %5978 = vmatprep.subr.bf16.mxu0 0
    %5979 = vmatpush1.bf16.msra.mxu0 0
    %5980 = vmatprep.subr.bf16.mxu0 0
    %5981 = vmatpush1.bf16.msra.mxu0 0
    %5982 = vmatprep.subr.bf16.mxu0 0
    %5983 = vmatpush1.bf16.msra.mxu0 0
    %5984 = vmatprep.subr.bf16.mxu0 0
    %5985 = vmatpush1.bf16.msra.mxu0 0
    %5986 = vmatprep.mubr.bf16.mxu0 0
    %5987 = vmatmul.mubr.bf16.gmra.mrb[0].mxu0 %v5952
    %v5988 = vpop.f32.mrb[0].mxu0
    %v5989 = vadd.f32 %v5925, %v5988
    %v5990 = vpop.f32.mrb[0].mxu0
    %v5991 = vpop.f32.mrb[0].mxu0
    %v5992 = vpop.f32.mrb[0].mxu0
    %5993 = vdwg.mxu0
    %vm5994 = vcmask 58368
    %v5995 = vsel %vm5994, %v5989, -inf
    %5996 = vmax.xlane.f32.xlu0 %v5995
    %v5997 = vpop.xlane.xlu0 %5996
    %v5998 = vsub.f32 %v5989, %v5997
    %v5999 = vmul.f32 %v5998, 1.442695
    %v6000 = vpow.pop %v5999
    %v6001 = vsel %vm5994, %v6000, 0.0
    %6002 = vadd.xlane.f32.xlu0 %v6001
    %v6003 = vpop.xlane.xlu0 %6002
    %v6004 = vrcp.pop %v6003
    %v6005 = vmul.f32 %v6000, %v6004
    %6006 = vst.msk [vmem:[#allocation8] sm:$0x3] %vm5994, %v6005
    // Predicated region
    $region26: #{tpu_custom_call.1} parent=1 // pred_check
      _
    $region27: #{tpu_custom_call.1} parent=1 // pred_check_branch
      %6008 = sbr.rel (0) target = $region29
    $region28: #{tpu_custom_call.1} parent=1 // pred_region
      %s6010 = ssub.s32 32, 32
      %6011 = vsyncadd [#allocation4], %s6010
      %s6013 = sshll.u32 [#allocation8], 4
      %s6014 = int_to_ptr.vmem [resolvable:$true] %s6013
      %6016 = dma.vmem_to_hbm [thread:$0]  %s6014, 32, %s3, [#allocation4]
    $region29: #{tpu_custom_call.1} parent=1 // pred_fallthru
      _
    // Predicated region
    $region30: #{tpu_custom_call.1} parent=1 // pred_check
      _
    $region31: #{tpu_custom_call.1} parent=1 // pred_check_branch
      %6018 = sbr.rel (0) target = $region33
    $region32: #{tpu_custom_call.1} parent=1 // pred_region
      %6019 = dma.done [#allocation4], 32
    $region33: #{tpu_custom_call.1} parent=1 // pred_fallthru
      _
    %6020 = vsyncpa [#allocation3], 1
    %6021 = vsyncpa [#allocation6], 1
    %6022 = vsyncpa [#allocation4], 1

</llo_original>
